<compile_context>
chip_gen: v7x
topology: tpu7x:2x2x1
jax: 0.10.0
libtpu: 0.0.40
codegen_flags: <defaults>
</compile_context>

<pallas_src>
import numpy as np
import jax
import jax.numpy as jnp
from jax import lax
from jax.experimental import pallas as pl
from jax.experimental.pallas import tpu as pltpu

GROUPS = 16


def _dwconv_kernel(x_ref, top_ref, bot_ref, w_ref, b_ref, o_ref, acc_ref):
    # x_ref:   (1, tH, W, C)      this tile's rows of the unpadded NHWC input
    # top_ref: (1, 1, W, C)       row just above the tile (clamped at image top)
    # bot_ref: (1, 1, W, C)       row just below the tile (clamped at image bottom)
    # w_ref:   (2*Cg-1, 9, 1, C)  w[s+Cg-1, kh*3+kw, 0, co] = weight[co, co%Cg+s, kh, kw]
    #                             (zero where co%Cg+s is outside the group)
    # b_ref:   (1, C)             bias
    # o_ref:   (1, tH, W, C)      output tile
    # acc_ref: (tH, W, C) f32     accumulator scratch
    tH, W, C = acc_ref.shape
    n_shift = w_ref.shape[0]           # 2*Cg - 1
    half = (n_shift - 1) // 2          # Cg - 1
    f32 = jnp.float32

    h = pl.program_id(1)
    n_h = pl.num_programs(1)

    xm = x_ref[0].astype(f32)          # (tH, W, C)
    top = top_ref[0].astype(f32)       # (1, W, C)
    bot = bot_ref[0].astype(f32)       # (1, W, C)
    # Zero the halo rows at the true image border (this replaces jnp.pad).
    top = jnp.where(h == 0, jnp.zeros_like(top), top)
    bot = jnp.where(h == n_h - 1, jnp.zeros_like(bot), bot)

    # Bias folded into the accumulator init (saves a full-tile post add).
    acc_ref[...] = jnp.broadcast_to(b_ref[...].astype(f32), (tH, W, C))

    for si in range(n_shift):
        s = si - half                               # channel (lane) shift
        l0 = max(0, -s)
        l1 = C - max(0, s)                          # output-channel lane range
        m0 = l0 + s
        m1 = l1 + s                                 # input-channel lane range
        for kh in range(3):
            dh = kh - 1
            for kw in range(3):
                dw = kw - 1
                wv = w_ref[si, kh * 3 + kw, :, l0:l1].astype(f32)   # (1, l1-l0)
                c0 = max(0, -dw)
                c1 = W - max(0, dw)                 # output cols
                s0 = c0 + dw
                s1 = c1 + dw                        # source cols
                # Bulk rows sourced from this tile's own rows.
                r0 = max(0, -dh)
                r1 = tH - max(0, dh)                # output rows
                if r1 > r0:
                    acc_ref[r0:r1, c0:c1, l0:l1] += (
                        xm[r0 + dh:r1 + dh, s0:s1, m0:m1] * wv)
                # Halo rows (one row above / below the tile).
                if dh == -1:
                    acc_ref[0:1, c0:c1, l0:l1] += top[:, s0:s1, m0:m1] * wv
                elif dh == 1:
                    acc_ref[tH - 1:tH, c0:c1, l0:l1] += bot[:, s0:s1, m0:m1] * wv

    o_ref[0] = acc_ref[...].astype(o_ref.dtype)


def _build_shift_weights(weight, C, Cg):
    """Compact lane-shift weights: w_vec[s+Cg-1, kh*3+kw, 0, co] =
    weight[co, co%Cg + s, kh, kw], zeroed when co%Cg + s falls outside the group."""
    w_np = np.asarray(weight, dtype=np.float32).reshape(C, Cg, 9)   # [co, j, tap]
    n_shift = 2 * Cg - 1
    w_vec = np.zeros((n_shift, 9, 1, C), dtype=np.float32)
    co = np.arange(C)
    for s in range(-(Cg - 1), Cg):
        j = co % Cg + s
        valid = (j >= 0) & (j < Cg)
        jc = np.clip(j, 0, Cg - 1)
        w_vec[s + Cg - 1, :, 0, :] = np.where(valid[:, None], w_np[co, jc, :], 0.0).T
    return jnp.asarray(w_vec)


def dwconv_pallas(x, H, W, weight, bias, *, row_tile=None):
    """x: (B, N, C) tokens with N == H*W (row-major over (H, W)).
    weight: (C, C // GROUPS, 3, 3) in PyTorch Conv2d layout.  bias: (C,).
    Returns (B, N, C)."""
    B, N, C = x.shape
    assert N == H * W and C % GROUPS == 0
    Cg = C // GROUPS

    x_img = x.reshape(B, H, W, C)          # NHWC: channels on the lane axis

    w_vec = _build_shift_weights(weight, C, Cg)          # (2*Cg-1, 9, 1, C)
    b_vec = jnp.asarray(bias, dtype=jnp.float32).reshape(1, C)

    # Row tile: largest divisor of H whose f32 tile stays under ~1 MiB.
    if row_tile is None:
        budget = 1 << 20
        row_tile = 1
        for t in range(1, H + 1):
            if H % t == 0 and t * W * C * 4 <= budget:
                row_tile = t
    assert H % row_tile == 0
    tH = row_tile
    n_row_tiles = H // tH

    out_img = pl.pallas_call(
        _dwconv_kernel,
        out_shape=jax.ShapeDtypeStruct((B, H, W, C), x.dtype),
        grid_spec=pltpu.PrefetchScalarGridSpec(
            num_scalar_prefetch=0,
            grid=(B, n_row_tiles),
            in_specs=[
                # this tile's rows (no pre-padded copy of the activation)
                pl.BlockSpec((1, tH, W, C), lambda b, h: (b, h, 0, 0)),
                # 1-row halo above (clamped; masked in-kernel at the image top)
                pl.BlockSpec((1, 1, W, C),
                             lambda b, h: (b, jnp.maximum(h * tH - 1, 0), 0, 0)),
                # 1-row halo below (clamped; masked in-kernel at the image bottom)
                pl.BlockSpec((1, 1, W, C),
                             lambda b, h: (b, jnp.minimum(h * tH + tH, H - 1), 0, 0)),
                # compact weights / bias: constant block index -> fetched once
                pl.BlockSpec((2 * Cg - 1, 9, 1, C), lambda b, h: (0, 0, 0, 0)),
                pl.BlockSpec((1, C), lambda b, h: (0, 0)),
            ],
            out_specs=pl.BlockSpec((1, tH, W, C), lambda b, h: (b, h, 0, 0)),
            scratch_shapes=[pltpu.VMEM((tH, W, C), jnp.float32)],
        ),
        compiler_params=pltpu.CompilerParams(
            dimension_semantics=("parallel", "parallel"),
            vmem_limit_bytes=32 * 1024 * 1024,
        ),
    )(x_img, x_img, x_img, w_vec, b_vec)

    return out_img.reshape(B, N, C)


def dwconv_reference(x, H, W, weight, bias):
    """Pure-JAX reference using lax grouped conv (matches nn.Conv2d groups=16)."""
    B, N, C = x.shape
    x_nchw = jnp.transpose(x, (0, 2, 1)).reshape(B, C, H, W)
    out = lax.conv_general_dilated(
        x_nchw.astype(jnp.float32),
        jnp.asarray(weight, jnp.float32),
        window_strides=(1, 1),
        padding=((1, 1), (1, 1)),
        feature_group_count=GROUPS,
        dimension_numbers=("NCHW", "OIHW", "NCHW"),
        precision=lax.Precision.HIGHEST,
    ) + jnp.asarray(bias, jnp.float32)[None, :, None, None]
    return jnp.transpose(out.reshape(B, C, N), (0, 2, 1))


if __name__ == "__main__":
    def _check(B, C, H, W, row_tile, key):
        Cg = C // GROUPS
        kx, kw, kb = jax.random.split(key, 3)
        x = jax.random.normal(kx, (B, H * W, C), dtype=jnp.float32)
        weight = jax.random.normal(kw, (C, Cg, 3, 3), dtype=jnp.float32) * 0.1
        bias = jax.random.normal(kb, (C,), dtype=jnp.float32) * 0.1

        out = dwconv_pallas(x, H, W, weight, bias, row_tile=row_tile)
        out = jax.block_until_ready(out)

        ref = dwconv_reference(x, H, W, weight, bias)
        assert out.shape == (B, H * W, C)
        np.testing.assert_allclose(np.asarray(out), np.asarray(ref),
                                   atol=1e-4, rtol=1e-4)

    key = jax.random.PRNGKey(0)
    k1, k2, k3 = jax.random.split(key, 3)
    # dim=32 (Cg=2): whole image per step, then 4-row tiles (exercises the halo path).
    _check(B=2, C=32, H=8, W=8, row_tile=None, key=k1)
    _check(B=2, C=32, H=8, W=8, row_tile=4, key=k2)
    # dim=48 (Cg=3): odd channels-per-group, 2-row tiles.
    _check(B=1, C=48, H=4, W=8, row_tile=2, key=k3)

    print("KERNEL_OK")
</pallas_src>

<mosaic_0001>
module attributes {stable_mosaic.version = 11 : i64} {
  func.func @_dwconv_kernel(%arg0: i32, %arg1: i32, %arg2: memref<1x8x8x32xf32, #tpu.memory_space<vmem>>, %arg3: memref<1x1x8x32xf32, #tpu.memory_space<vmem>>, %arg4: memref<1x1x8x32xf32, #tpu.memory_space<vmem>>, %arg5: memref<3x9x1x32xf32, #tpu.memory_space<vmem>>, %arg6: memref<1x32xf32, #tpu.memory_space<vmem>>, %arg7: memref<1x8x8x32xf32, #tpu.memory_space<vmem>>, %arg8: memref<8x8x32xf32, #tpu.memory_space<vmem>>) attributes {dimension_semantics = [#tpu.dimension_semantics<parallel>, #tpu.dimension_semantics<parallel>], iteration_bounds = array<i64: 2, 1>, scalar_prefetch = 0 : i64, scratch_operands = 1 : i64, tpu.core_type = #tpu.core_type<tc>, window_params = [{transform_indices = @transform_0, window_bounds = array<i64: 1, 8, 8, 32>}, {transform_indices = @transform_1, window_bounds = array<i64: 1, 1, 8, 32>}, {transform_indices = @transform_2, window_bounds = array<i64: 1, 1, 8, 32>}, {pipeline_mode = #tpu.pipeline_mode<synchronous>, transform_indices = @transform_3, window_bounds = array<i64: 3, 9, 1, 32>}, {pipeline_mode = #tpu.pipeline_mode<synchronous>, transform_indices = @transform_4, window_bounds = array<i64: 1, 32>}, {transform_indices = @transform_5, window_bounds = array<i64: 1, 8, 8, 32>}]} {
    %c0 = arith.constant 0 : index
    %c0_0 = arith.constant 0 : index
    %c0_1 = arith.constant 0 : index
    %c0_2 = arith.constant 0 : index
    %0 = vector.load %arg2[%c0, %c0_0, %c0_1, %c0_2] : memref<1x8x8x32xf32, #tpu.memory_space<vmem>>, vector<1x8x8x32xf32>
    %1 = vector.shape_cast %0 : vector<1x8x8x32xf32> to vector<8x8x32xf32>
    %c0_3 = arith.constant 0 : index
    %c0_4 = arith.constant 0 : index
    %c0_5 = arith.constant 0 : index
    %c0_6 = arith.constant 0 : index
    %2 = vector.load %arg3[%c0_3, %c0_4, %c0_5, %c0_6] : memref<1x1x8x32xf32, #tpu.memory_space<vmem>>, vector<1x1x8x32xf32>
    %3 = vector.shape_cast %2 : vector<1x1x8x32xf32> to vector<1x8x32xf32>
    %c0_7 = arith.constant 0 : index
    %c0_8 = arith.constant 0 : index
    %c0_9 = arith.constant 0 : index
    %c0_10 = arith.constant 0 : index
    %4 = vector.load %arg4[%c0_7, %c0_8, %c0_9, %c0_10] : memref<1x1x8x32xf32, #tpu.memory_space<vmem>>, vector<1x1x8x32xf32>
    %5 = vector.shape_cast %4 : vector<1x1x8x32xf32> to vector<1x8x32xf32>
    %c0_i32 = arith.constant 0 : i32
    %6 = arith.cmpi eq, %arg1, %c0_i32 : i32
    %cst = arith.constant 0.000000e+00 : f32
    %7 = vector.broadcast %cst : f32 to vector<1x8x32xf32>
    %8 = arith.select %6, %7, %3 : vector<1x8x32xf32>
    %c0_i32_11 = arith.constant 0 : i32
    %9 = arith.cmpi eq, %arg1, %c0_i32_11 : i32
    %cst_12 = arith.constant 0.000000e+00 : f32
    %10 = vector.broadcast %cst_12 : f32 to vector<1x8x32xf32>
    %11 = arith.select %9, %10, %5 : vector<1x8x32xf32>
    %c0_13 = arith.constant 0 : index
    %c0_14 = arith.constant 0 : index
    %12 = vector.load %arg6[%c0_13, %c0_14] : memref<1x32xf32, #tpu.memory_space<vmem>>, vector<1x32xf32>
    %13 = vector.shape_cast %12 : vector<1x32xf32> to vector<1x1x32xf32>
    %14 = vector.broadcast %13 : vector<1x1x32xf32> to vector<8x8x32xf32>
    %c0_15 = arith.constant 0 : index
    %c0_16 = arith.constant 0 : index
    %c0_17 = arith.constant 0 : index
    %15 = vector.load %arg8[%c0_15, %c0_16, %c0_17] : memref<8x8x32xf32, #tpu.memory_space<vmem>>, vector<8x8x32xf32>
    tpu.vector_store %arg8[%c0_15, %c0_16, %c0_17], %14 {strides = array<i32>} : memref<8x8x32xf32, #tpu.memory_space<vmem>>, vector<8x8x32xf32>,
    %c0_18 = arith.constant 0 : index
    %c0_19 = arith.constant 0 : index
    %c0_20 = arith.constant 0 : index
    %c1 = arith.constant 1 : index
    %16 = vector.load %arg5[%c0_18, %c0_19, %c0_20, %c1] : memref<3x9x1x32xf32, #tpu.memory_space<vmem>>, vector<1x1x1x31xf32>
    %17 = vector.shape_cast %16 : vector<1x1x1x31xf32> to vector<1x31xf32>
    %c1_21 = arith.constant 1 : index
    %c1_22 = arith.constant 1 : index
    %c1_23 = arith.constant 1 : index
    %18 = vector.load %arg8[%c1_21, %c1_22, %c1_23] : memref<8x8x32xf32, #tpu.memory_space<vmem>>, vector<7x7x31xf32>
    %19 = vector.extract_strided_slice %1 {offsets = [0, 0, 0], sizes = [7, 7, 31], strides = [1, 1, 1]} : vector<8x8x32xf32> to vector<7x7x31xf32>
    %20 = vector.shape_cast %17 : vector<1x31xf32> to vector<1x1x31xf32>
    %21 = vector.broadcast %20 : vector<1x1x31xf32> to vector<7x7x31xf32>
    %22 = arith.mulf %19, %21 : vector<7x7x31xf32>
    %23 = arith.addf %18, %22 : vector<7x7x31xf32>
    %c1_24 = arith.constant 1 : index
    %c1_25 = arith.constant 1 : index
    %c1_26 = arith.constant 1 : index
    %24 = vector.load %arg8[%c1_24, %c1_25, %c1_26] : memref<8x8x32xf32, #tpu.memory_space<vmem>>, vector<7x7x31xf32>
    tpu.vector_store %arg8[%c1_24, %c1_25, %c1_26], %23 {strides = array<i32>} : memref<8x8x32xf32, #tpu.memory_space<vmem>>, vector<7x7x31xf32>,
    %c0_27 = arith.constant 0 : index
    %c1_28 = arith.constant 1 : index
    %c1_29 = arith.constant 1 : index
    %25 = vector.load %arg8[%c0_27, %c1_28, %c1_29] : memref<8x8x32xf32, #tpu.memory_space<vmem>>, vector<1x7x31xf32>
    %26 = vector.extract_strided_slice %8 {offsets = [0, 0, 0], sizes = [1, 7, 31], strides = [1, 1, 1]} : vector<1x8x32xf32> to vector<1x7x31xf32>
    %27 = vector.shape_cast %17 : vector<1x31xf32> to vector<1x1x31xf32>
    %28 = vector.broadcast %27 : vector<1x1x31xf32> to vector<1x7x31xf32>
    %29 = arith.mulf %26, %28 : vector<1x7x31xf32>
    %30 = arith.addf %25, %29 : vector<1x7x31xf32>
    %c0_30 = arith.constant 0 : index
    %c1_31 = arith.constant 1 : index
    %c1_32 = arith.constant 1 : index
    %31 = vector.load %arg8[%c0_30, %c1_31, %c1_32] : memref<8x8x32xf32, #tpu.memory_space<vmem>>, vector<1x7x31xf32>
    tpu.vector_store %arg8[%c0_30, %c1_31, %c1_32], %30 {strides = array<i32>} : memref<8x8x32xf32, #tpu.memory_space<vmem>>, vector<1x7x31xf32>,
    %c0_33 = arith.constant 0 : index
    %c1_34 = arith.constant 1 : index
    %c0_35 = arith.constant 0 : index
    %c1_36 = arith.constant 1 : index
    %32 = vector.load %arg5[%c0_33, %c1_34, %c0_35, %c1_36] : memref<3x9x1x32xf32, #tpu.memory_space<vmem>>, vector<1x1x1x31xf32>
    %33 = vector.shape_cast %32 : vector<1x1x1x31xf32> to vector<1x31xf32>
    %c1_37 = arith.constant 1 : index
    %c0_38 = arith.constant 0 : index
    %c1_39 = arith.constant 1 : index
    %34 = vector.load %arg8[%c1_37, %c0_38, %c1_39] : memref<8x8x32xf32, #tpu.memory_space<vmem>>, vector<7x8x31xf32>
    %35 = vector.extract_strided_slice %1 {offsets = [0, 0, 0], sizes = [7, 8, 31], strides = [1, 1, 1]} : vector<8x8x32xf32> to vector<7x8x31xf32>
    %36 = vector.shape_cast %33 : vector<1x31xf32> to vector<1x1x31xf32>
    %37 = vector.broadcast %36 : vector<1x1x31xf32> to vector<7x8x31xf32>
    %38 = arith.mulf %35, %37 : vector<7x8x31xf32>
    %39 = arith.addf %34, %38 : vector<7x8x31xf32>
    %c1_40 = arith.constant 1 : index
    %c0_41 = arith.constant 0 : index
    %c1_42 = arith.constant 1 : index
    %40 = vector.load %arg8[%c1_40, %c0_41, %c1_42] : memref<8x8x32xf32, #tpu.memory_space<vmem>>, vector<7x8x31xf32>
    tpu.vector_store %arg8[%c1_40, %c0_41, %c1_42], %39 {strides = array<i32>} : memref<8x8x32xf32, #tpu.memory_space<vmem>>, vector<7x8x31xf32>,
    %c0_43 = arith.constant 0 : index
    %c0_44 = arith.constant 0 : index
    %c1_45 = arith.constant 1 : index
    %41 = vector.load %arg8[%c0_43, %c0_44, %c1_45] : memref<8x8x32xf32, #tpu.memory_space<vmem>>, vector<1x8x31xf32>
    %42 = vector.extract_strided_slice %8 {offsets = [0, 0, 0], sizes = [1, 8, 31], strides = [1, 1, 1]} : vector<1x8x32xf32> to vector<1x8x31xf32>
    %43 = vector.shape_cast %33 : vector<1x31xf32> to vector<1x1x31xf32>
    %44 = vector.broadcast %43 : vector<1x1x31xf32> to vector<1x8x31xf32>
    %45 = arith.mulf %42, %44 : vector<1x8x31xf32>
    %46 = arith.addf %41, %45 : vector<1x8x31xf32>
    %c0_46 = arith.constant 0 : index
    %c0_47 = arith.constant 0 : index
    %c1_48 = arith.constant 1 : index
    %47 = vector.load %arg8[%c0_46, %c0_47, %c1_48] : memref<8x8x32xf32, #tpu.memory_space<vmem>>, vector<1x8x31xf32>
    tpu.vector_store %arg8[%c0_46, %c0_47, %c1_48], %46 {strides = array<i32>} : memref<8x8x32xf32, #tpu.memory_space<vmem>>, vector<1x8x31xf32>,
    %c0_49 = arith.constant 0 : index
    %c2 = arith.constant 2 : index
    %c0_50 = arith.constant 0 : index
    %c1_51 = arith.constant 1 : index
    %48 = vector.load %arg5[%c0_49, %c2, %c0_50, %c1_51] : memref<3x9x1x32xf32, #tpu.memory_space<vmem>>, vector<1x1x1x31xf32>
    %49 = vector.shape_cast %48 : vector<1x1x1x31xf32> to vector<1x31xf32>
    %c1_52 = arith.constant 1 : index
    %c0_53 = arith.constant 0 : index
    %c1_54 = arith.constant 1 : index
    %50 = vector.load %arg8[%c1_52, %c0_53, %c1_54] : memref<8x8x32xf32, #tpu.memory_space<vmem>>, vector<7x7x31xf32>
    %51 = vector.extract_strided_slice %1 {offsets = [0, 1, 0], sizes = [7, 7, 31], strides = [1, 1, 1]} : vector<8x8x32xf32> to vector<7x7x31xf32>
    %52 = vector.shape_cast %49 : vector<1x31xf32> to vector<1x1x31xf32>
    %53 = vector.broadcast %52 : vector<1x1x31xf32> to vector<7x7x31xf32>
    %54 = arith.mulf %51, %53 : vector<7x7x31xf32>
    %55 = arith.addf %50, %54 : vector<7x7x31xf32>
    %c1_55 = arith.constant 1 : index
    %c0_56 = arith.constant 0 : index
    %c1_57 = arith.constant 1 : index
    %56 = vector.load %arg8[%c1_55, %c0_56, %c1_57] : memref<8x8x32xf32, #tpu.memory_space<vmem>>, vector<7x7x31xf32>
    tpu.vector_store %arg8[%c1_55, %c0_56, %c1_57], %55 {strides = array<i32>} : memref<8x8x32xf32, #tpu.memory_space<vmem>>, vector<7x7x31xf32>,
    %c0_58 = arith.constant 0 : index
    %c0_59 = arith.constant 0 : index
    %c1_60 = arith.constant 1 : index
    %57 = vector.load %arg8[%c0_58, %c0_59, %c1_60] : memref<8x8x32xf32, #tpu.memory_space<vmem>>, vector<1x7x31xf32>
    %58 = vector.extract_strided_slice %8 {offsets = [0, 1, 0], sizes = [1, 7, 31], strides = [1, 1, 1]} : vector<1x8x32xf32> to vector<1x7x31xf32>
    %59 = vector.shape_cast %49 : vector<1x31xf32> to vector<1x1x31xf32>
    %60 = vector.broadcast %59 : vector<1x1x31xf32> to vector<1x7x31xf32>
    %61 = arith.mulf %58, %60 : vector<1x7x31xf32>
    %62 = arith.addf %57, %61 : vector<1x7x31xf32>
    %c0_61 = arith.constant 0 : index
    %c0_62 = arith.constant 0 : index
    %c1_63 = arith.constant 1 : index
    %63 = vector.load %arg8[%c0_61, %c0_62, %c1_63] : memref<8x8x32xf32, #tpu.memory_space<vmem>>, vector<1x7x31xf32>
    tpu.vector_store %arg8[%c0_61, %c0_62, %c1_63], %62 {strides = array<i32>} : memref<8x8x32xf32, #tpu.memory_space<vmem>>, vector<1x7x31xf32>,
    %c0_64 = arith.constant 0 : index
    %c3 = arith.constant 3 : index
    %c0_65 = arith.constant 0 : index
    %c1_66 = arith.constant 1 : index
    %64 = vector.load %arg5[%c0_64, %c3, %c0_65, %c1_66] : memref<3x9x1x32xf32, #tpu.memory_space<vmem>>, vector<1x1x1x31xf32>
    %65 = vector.shape_cast %64 : vector<1x1x1x31xf32> to vector<1x31xf32>
    %c0_67 = arith.constant 0 : index
    %c1_68 = arith.constant 1 : index
    %c1_69 = arith.constant 1 : index
    %66 = vector.load %arg8[%c0_67, %c1_68, %c1_69] : memref<8x8x32xf32, #tpu.memory_space<vmem>>, vector<8x7x31xf32>
    %67 = vector.extract_strided_slice %1 {offsets = [0, 0, 0], sizes = [8, 7, 31], strides = [1, 1, 1]} : vector<8x8x32xf32> to vector<8x7x31xf32>
    %68 = vector.shape_cast %65 : vector<1x31xf32> to vector<1x1x31xf32>
    %69 = vector.broadcast %68 : vector<1x1x31xf32> to vector<8x7x31xf32>
    %70 = arith.mulf %67, %69 : vector<8x7x31xf32>
    %71 = arith.addf %66, %70 : vector<8x7x31xf32>
    %c0_70 = arith.constant 0 : index
    %c1_71 = arith.constant 1 : index
    %c1_72 = arith.constant 1 : index
    %72 = vector.load %arg8[%c0_70, %c1_71, %c1_72] : memref<8x8x32xf32, #tpu.memory_space<vmem>>, vector<8x7x31xf32>
    tpu.vector_store %arg8[%c0_70, %c1_71, %c1_72], %71 {strides = array<i32>} : memref<8x8x32xf32, #tpu.memory_space<vmem>>, vector<8x7x31xf32>,
    %c0_73 = arith.constant 0 : index
    %c4 = arith.constant 4 : index
    %c0_74 = arith.constant 0 : index
    %c1_75 = arith.constant 1 : index
    %73 = vector.load %arg5[%c0_73, %c4, %c0_74, %c1_75] : memref<3x9x1x32xf32, #tpu.memory_space<vmem>>, vector<1x1x1x31xf32>
    %74 = vector.shape_cast %73 : vector<1x1x1x31xf32> to vector<1x31xf32>
    %c0_76 = arith.constant 0 : index
    %c0_77 = arith.constant 0 : index
    %c1_78 = arith.constant 1 : index
    %75 = vector.load %arg8[%c0_76, %c0_77, %c1_78] : memref<8x8x32xf32, #tpu.memory_space<vmem>>, vector<8x8x31xf32>
    %76 = vector.extract_strided_slice %1 {offsets = [0, 0, 0], sizes = [8, 8, 31], strides = [1, 1, 1]} : vector<8x8x32xf32> to vector<8x8x31xf32>
    %77 = vector.shape_cast %74 : vector<1x31xf32> to vector<1x1x31xf32>
    %78 = vector.broadcast %77 : vector<1x1x31xf32> to vector<8x8x31xf32>
    %79 = arith.mulf %76, %78 : vector<8x8x31xf32>
    %80 = arith.addf %75, %79 : vector<8x8x31xf32>
    %c0_79 = arith.constant 0 : index
    %c0_80 = arith.constant 0 : index
    %c1_81 = arith.constant 1 : index
    %81 = vector.load %arg8[%c0_79, %c0_80, %c1_81] : memref<8x8x32xf32, #tpu.memory_space<vmem>>, vector<8x8x31xf32>
    tpu.vector_store %arg8[%c0_79, %c0_80, %c1_81], %80 {strides = array<i32>} : memref<8x8x32xf32, #tpu.memory_space<vmem>>, vector<8x8x31xf32>,
    %c0_82 = arith.constant 0 : index
    %c5 = arith.constant 5 : index
    %c0_83 = arith.constant 0 : index
    %c1_84 = arith.constant 1 : index
    %82 = vector.load %arg5[%c0_82, %c5, %c0_83, %c1_84] : memref<3x9x1x32xf32, #tpu.memory_space<vmem>>, vector<1x1x1x31xf32>
    %83 = vector.shape_cast %82 : vector<1x1x1x31xf32> to vector<1x31xf32>
    %c0_85 = arith.constant 0 : index
    %c0_86 = arith.constant 0 : index
    %c1_87 = arith.constant 1 : index
    %84 = vector.load %arg8[%c0_85, %c0_86, %c1_87] : memref<8x8x32xf32, #tpu.memory_space<vmem>>, vector<8x7x31xf32>
    %85 = vector.extract_strided_slice %1 {offsets = [0, 1, 0], sizes = [8, 7, 31], strides = [1, 1, 1]} : vector<8x8x32xf32> to vector<8x7x31xf32>
    %86 = vector.shape_cast %83 : vector<1x31xf32> to vector<1x1x31xf32>
    %87 = vector.broadcast %86 : vector<1x1x31xf32> to vector<8x7x31xf32>
    %88 = arith.mulf %85, %87 : vector<8x7x31xf32>
    %89 = arith.addf %84, %88 : vector<8x7x31xf32>
    %c0_88 = arith.constant 0 : index
    %c0_89 = arith.constant 0 : index
    %c1_90 = arith.constant 1 : index
    %90 = vector.load %arg8[%c0_88, %c0_89, %c1_90] : memref<8x8x32xf32, #tpu.memory_space<vmem>>, vector<8x7x31xf32>
    tpu.vector_store %arg8[%c0_88, %c0_89, %c1_90], %89 {strides = array<i32>} : memref<8x8x32xf32, #tpu.memory_space<vmem>>, vector<8x7x31xf32>,
    %c0_91 = arith.constant 0 : index
    %c6 = arith.constant 6 : index
    %c0_92 = arith.constant 0 : index
    %c1_93 = arith.constant 1 : index
    %91 = vector.load %arg5[%c0_91, %c6, %c0_92, %c1_93] : memref<3x9x1x32xf32, #tpu.memory_space<vmem>>, vector<1x1x1x31xf32>
    %92 = vector.shape_cast %91 : vector<1x1x1x31xf32> to vector<1x31xf32>
    %c0_94 = arith.constant 0 : index
    %c1_95 = arith.constant 1 : index
    %c1_96 = arith.constant 1 : index
    %93 = vector.load %arg8[%c0_94, %c1_95, %c1_96] : memref<8x8x32xf32, #tpu.memory_space<vmem>>, vector<7x7x31xf32>
    %94 = vector.extract_strided_slice %1 {offsets = [1, 0, 0], sizes = [7, 7, 31], strides = [1, 1, 1]} : vector<8x8x32xf32> to vector<7x7x31xf32>
    %95 = vector.shape_cast %92 : vector<1x31xf32> to vector<1x1x31xf32>
    %96 = vector.broadcast %95 : vector<1x1x31xf32> to vector<7x7x31xf32>
    %97 = arith.mulf %94, %96 : vector<7x7x31xf32>
    %98 = arith.addf %93, %97 : vector<7x7x31xf32>
    %c0_97 = arith.constant 0 : index
    %c1_98 = arith.constant 1 : index
    %c1_99 = arith.constant 1 : index
    %99 = vector.load %arg8[%c0_97, %c1_98, %c1_99] : memref<8x8x32xf32, #tpu.memory_space<vmem>>, vector<7x7x31xf32>
    tpu.vector_store %arg8[%c0_97, %c1_98, %c1_99], %98 {strides = array<i32>} : memref<8x8x32xf32, #tpu.memory_space<vmem>>, vector<7x7x31xf32>,
    %c7 = arith.constant 7 : index
    %c1_100 = arith.constant 1 : index
    %c1_101 = arith.constant 1 : index
    %100 = vector.load %arg8[%c7, %c1_100, %c1_101] : memref<8x8x32xf32, #tpu.memory_space<vmem>>, vector<1x7x31xf32>
    %101 = vector.extract_strided_slice %11 {offsets = [0, 0, 0], sizes = [1, 7, 31], strides = [1, 1, 1]} : vector<1x8x32xf32> to vector<1x7x31xf32>
    %102 = vector.shape_cast %92 : vector<1x31xf32> to vector<1x1x31xf32>
    %103 = vector.broadcast %102 : vector<1x1x31xf32> to vector<1x7x31xf32>
    %104 = arith.mulf %101, %103 : vector<1x7x31xf32>
    %105 = arith.addf %100, %104 : vector<1x7x31xf32>
    %c7_102 = arith.constant 7 : index
    %c1_103 = arith.constant 1 : index
    %c1_104 = arith.constant 1 : index
    %106 = vector.load %arg8[%c7_102, %c1_103, %c1_104] : memref<8x8x32xf32, #tpu.memory_space<vmem>>, vector<1x7x31xf32>
    tpu.vector_store %arg8[%c7_102, %c1_103, %c1_104], %105 {strides = array<i32>} : memref<8x8x32xf32, #tpu.memory_space<vmem>>, vector<1x7x31xf32>,
    %c0_105 = arith.constant 0 : index
    %c7_106 = arith.constant 7 : index
    %c0_107 = arith.constant 0 : index
    %c1_108 = arith.constant 1 : index
    %107 = vector.load %arg5[%c0_105, %c7_106, %c0_107, %c1_108] : memref<3x9x1x32xf32, #tpu.memory_space<vmem>>, vector<1x1x1x31xf32>
    %108 = vector.shape_cast %107 : vector<1x1x1x31xf32> to vector<1x31xf32>
    %c0_109 = arith.constant 0 : index
    %c0_110 = arith.constant 0 : index
    %c1_111 = arith.constant 1 : index
    %109 = vector.load %arg8[%c0_109, %c0_110, %c1_111] : memref<8x8x32xf32, #tpu.memory_space<vmem>>, vector<7x8x31xf32>
    %110 = vector.extract_strided_slice %1 {offsets = [1, 0, 0], sizes = [7, 8, 31], strides = [1, 1, 1]} : vector<8x8x32xf32> to vector<7x8x31xf32>
    %111 = vector.shape_cast %108 : vector<1x31xf32> to vector<1x1x31xf32>
    %112 = vector.broadcast %111 : vector<1x1x31xf32> to vector<7x8x31xf32>
    %113 = arith.mulf %110, %112 : vector<7x8x31xf32>
    %114 = arith.addf %109, %113 : vector<7x8x31xf32>
    %c0_112 = arith.constant 0 : index
    %c0_113 = arith.constant 0 : index
    %c1_114 = arith.constant 1 : index
    %115 = vector.load %arg8[%c0_112, %c0_113, %c1_114] : memref<8x8x32xf32, #tpu.memory_space<vmem>>, vector<7x8x31xf32>
    tpu.vector_store %arg8[%c0_112, %c0_113, %c1_114], %114 {strides = array<i32>} : memref<8x8x32xf32, #tpu.memory_space<vmem>>, vector<7x8x31xf32>,
    %c7_115 = arith.constant 7 : index
    %c0_116 = arith.constant 0 : index
    %c1_117 = arith.constant 1 : index
    %116 = vector.load %arg8[%c7_115, %c0_116, %c1_117] : memref<8x8x32xf32, #tpu.memory_space<vmem>>, vector<1x8x31xf32>
    %117 = vector.extract_strided_slice %11 {offsets = [0, 0, 0], sizes = [1, 8, 31], strides = [1, 1, 1]} : vector<1x8x32xf32> to vector<1x8x31xf32>
    %118 = vector.shape_cast %108 : vector<1x31xf32> to vector<1x1x31xf32>
    %119 = vector.broadcast %118 : vector<1x1x31xf32> to vector<1x8x31xf32>
    %120 = arith.mulf %117, %119 : vector<1x8x31xf32>
    %121 = arith.addf %116, %120 : vector<1x8x31xf32>
    %c7_118 = arith.constant 7 : index
    %c0_119 = arith.constant 0 : index
    %c1_120 = arith.constant 1 : index
    %122 = vector.load %arg8[%c7_118, %c0_119, %c1_120] : memref<8x8x32xf32, #tpu.memory_space<vmem>>, vector<1x8x31xf32>
    tpu.vector_store %arg8[%c7_118, %c0_119, %c1_120], %121 {strides = array<i32>} : memref<8x8x32xf32, #tpu.memory_space<vmem>>, vector<1x8x31xf32>,
    %c0_121 = arith.constant 0 : index
    %c8 = arith.constant 8 : index
    %c0_122 = arith.constant 0 : index
    %c1_123 = arith.constant 1 : index
    %123 = vector.load %arg5[%c0_121, %c8, %c0_122, %c1_123] : memref<3x9x1x32xf32, #tpu.memory_space<vmem>>, vector<1x1x1x31xf32>
    %124 = vector.shape_cast %123 : vector<1x1x1x31xf32> to vector<1x31xf32>
    %c0_124 = arith.constant 0 : index
    %c0_125 = arith.constant 0 : index
    %c1_126 = arith.constant 1 : index
    %125 = vector.load %arg8[%c0_124, %c0_125, %c1_126] : memref<8x8x32xf32, #tpu.memory_space<vmem>>, vector<7x7x31xf32>
    %126 = vector.extract_strided_slice %1 {offsets = [1, 1, 0], sizes = [7, 7, 31], strides = [1, 1, 1]} : vector<8x8x32xf32> to vector<7x7x31xf32>
    %127 = vector.shape_cast %124 : vector<1x31xf32> to vector<1x1x31xf32>
    %128 = vector.broadcast %127 : vector<1x1x31xf32> to vector<7x7x31xf32>
    %129 = arith.mulf %126, %128 : vector<7x7x31xf32>
    %130 = arith.addf %125, %129 : vector<7x7x31xf32>
    %c0_127 = arith.constant 0 : index
    %c0_128 = arith.constant 0 : index
    %c1_129 = arith.constant 1 : index
    %131 = vector.load %arg8[%c0_127, %c0_128, %c1_129] : memref<8x8x32xf32, #tpu.memory_space<vmem>>, vector<7x7x31xf32>
    tpu.vector_store %arg8[%c0_127, %c0_128, %c1_129], %130 {strides = array<i32>} : memref<8x8x32xf32, #tpu.memory_space<vmem>>, vector<7x7x31xf32>,
    %c7_130 = arith.constant 7 : index
    %c0_131 = arith.constant 0 : index
    %c1_132 = arith.constant 1 : index
    %132 = vector.load %arg8[%c7_130, %c0_131, %c1_132] : memref<8x8x32xf32, #tpu.memory_space<vmem>>, vector<1x7x31xf32>
    %133 = vector.extract_strided_slice %11 {offsets = [0, 1, 0], sizes = [1, 7, 31], strides = [1, 1, 1]} : vector<1x8x32xf32> to vector<1x7x31xf32>
    %134 = vector.shape_cast %124 : vector<1x31xf32> to vector<1x1x31xf32>
    %135 = vector.broadcast %134 : vector<1x1x31xf32> to vector<1x7x31xf32>
    %136 = arith.mulf %133, %135 : vector<1x7x31xf32>
    %137 = arith.addf %132, %136 : vector<1x7x31xf32>
    %c7_133 = arith.constant 7 : index
    %c0_134 = arith.constant 0 : index
    %c1_135 = arith.constant 1 : index
    %138 = vector.load %arg8[%c7_133, %c0_134, %c1_135] : memref<8x8x32xf32, #tpu.memory_space<vmem>>, vector<1x7x31xf32>
    tpu.vector_store %arg8[%c7_133, %c0_134, %c1_135], %137 {strides = array<i32>} : memref<8x8x32xf32, #tpu.memory_space<vmem>>, vector<1x7x31xf32>,
    %c1_136 = arith.constant 1 : index
    %c0_137 = arith.constant 0 : index
    %c0_138 = arith.constant 0 : index
    %c0_139 = arith.constant 0 : index
    %139 = vector.load %arg5[%c1_136, %c0_137, %c0_138, %c0_139] : memref<3x9x1x32xf32, #tpu.memory_space<vmem>>, vector<1x1x1x32xf32>
    %140 = vector.shape_cast %139 : vector<1x1x1x32xf32> to vector<1x32xf32>
    %c1_140 = arith.constant 1 : index
    %c1_141 = arith.constant 1 : index
    %c0_142 = arith.constant 0 : index
    %141 = vector.load %arg8[%c1_140, %c1_141, %c0_142] : memref<8x8x32xf32, #tpu.memory_space<vmem>>, vector<7x7x32xf32>
    %142 = vector.extract_strided_slice %1 {offsets = [0, 0, 0], sizes = [7, 7, 32], strides = [1, 1, 1]} : vector<8x8x32xf32> to vector<7x7x32xf32>
    %143 = vector.shape_cast %140 : vector<1x32xf32> to vector<1x1x32xf32>
    %144 = vector.broadcast %143 : vector<1x1x32xf32> to vector<7x7x32xf32>
    %145 = arith.mulf %142, %144 : vector<7x7x32xf32>
    %146 = arith.addf %141, %145 : vector<7x7x32xf32>
    %c1_143 = arith.constant 1 : index
    %c1_144 = arith.constant 1 : index
    %c0_145 = arith.constant 0 : index
    %147 = vector.load %arg8[%c1_143, %c1_144, %c0_145] : memref<8x8x32xf32, #tpu.memory_space<vmem>>, vector<7x7x32xf32>
    tpu.vector_store %arg8[%c1_143, %c1_144, %c0_145], %146 {strides = array<i32>} : memref<8x8x32xf32, #tpu.memory_space<vmem>>, vector<7x7x32xf32>,
    %c0_146 = arith.constant 0 : index
    %c1_147 = arith.constant 1 : index
    %c0_148 = arith.constant 0 : index
    %148 = vector.load %arg8[%c0_146, %c1_147, %c0_148] : memref<8x8x32xf32, #tpu.memory_space<vmem>>, vector<1x7x32xf32>
    %149 = vector.extract_strided_slice %8 {offsets = [0, 0, 0], sizes = [1, 7, 32], strides = [1, 1, 1]} : vector<1x8x32xf32> to vector<1x7x32xf32>
    %150 = vector.shape_cast %140 : vector<1x32xf32> to vector<1x1x32xf32>
    %151 = vector.broadcast %150 : vector<1x1x32xf32> to vector<1x7x32xf32>
    %152 = arith.mulf %149, %151 : vector<1x7x32xf32>
    %153 = arith.addf %148, %152 : vector<1x7x32xf32>
    %c0_149 = arith.constant 0 : index
    %c1_150 = arith.constant 1 : index
    %c0_151 = arith.constant 0 : index
    %154 = vector.load %arg8[%c0_149, %c1_150, %c0_151] : memref<8x8x32xf32, #tpu.memory_space<vmem>>, vector<1x7x32xf32>
    tpu.vector_store %arg8[%c0_149, %c1_150, %c0_151], %153 {strides = array<i32>} : memref<8x8x32xf32, #tpu.memory_space<vmem>>, vector<1x7x32xf32>,
    %c1_152 = arith.constant 1 : index
    %c1_153 = arith.constant 1 : index
    %c0_154 = arith.constant 0 : index
    %c0_155 = arith.constant 0 : index
    %155 = vector.load %arg5[%c1_152, %c1_153, %c0_154, %c0_155] : memref<3x9x1x32xf32, #tpu.memory_space<vmem>>, vector<1x1x1x32xf32>
    %156 = vector.shape_cast %155 : vector<1x1x1x32xf32> to vector<1x32xf32>
    %c1_156 = arith.constant 1 : index
    %c0_157 = arith.constant 0 : index
    %c0_158 = arith.constant 0 : index
    %157 = vector.load %arg8[%c1_156, %c0_157, %c0_158] : memref<8x8x32xf32, #tpu.memory_space<vmem>>, vector<7x8x32xf32>
    %158 = vector.extract_strided_slice %1 {offsets = [0, 0, 0], sizes = [7, 8, 32], strides = [1, 1, 1]} : vector<8x8x32xf32> to vector<7x8x32xf32>
    %159 = vector.shape_cast %156 : vector<1x32xf32> to vector<1x1x32xf32>
    %160 = vector.broadcast %159 : vector<1x1x32xf32> to vector<7x8x32xf32>
    %161 = arith.mulf %158, %160 : vector<7x8x32xf32>
    %162 = arith.addf %157, %161 : vector<7x8x32xf32>
    %c1_159 = arith.constant 1 : index
    %c0_160 = arith.constant 0 : index
    %c0_161 = arith.constant 0 : index
    %163 = vector.load %arg8[%c1_159, %c0_160, %c0_161] : memref<8x8x32xf32, #tpu.memory_space<vmem>>, vector<7x8x32xf32>
    tpu.vector_store %arg8[%c1_159, %c0_160, %c0_161], %162 {strides = array<i32>} : memref<8x8x32xf32, #tpu.memory_space<vmem>>, vector<7x8x32xf32>,
    %c0_162 = arith.constant 0 : index
    %c0_163 = arith.constant 0 : index
    %c0_164 = arith.constant 0 : index
    %164 = vector.load %arg8[%c0_162, %c0_163, %c0_164] : memref<8x8x32xf32, #tpu.memory_space<vmem>>, vector<1x8x32xf32>
    %165 = vector.shape_cast %156 : vector<1x32xf32> to vector<1x1x32xf32>
    %166 = vector.broadcast %165 : vector<1x1x32xf32> to vector<1x8x32xf32>
    %167 = arith.mulf %8, %166 : vector<1x8x32xf32>
    %168 = arith.addf %164, %167 : vector<1x8x32xf32>
    %c0_165 = arith.constant 0 : index
    %c0_166 = arith.constant 0 : index
    %c0_167 = arith.constant 0 : index
    %169 = vector.load %arg8[%c0_165, %c0_166, %c0_167] : memref<8x8x32xf32, #tpu.memory_space<vmem>>, vector<1x8x32xf32>
    tpu.vector_store %arg8[%c0_165, %c0_166, %c0_167], %168 {strides = array<i32>} : memref<8x8x32xf32, #tpu.memory_space<vmem>>, vector<1x8x32xf32>,
    %c1_168 = arith.constant 1 : index
    %c2_169 = arith.constant 2 : index
    %c0_170 = arith.constant 0 : index
    %c0_171 = arith.constant 0 : index
    %170 = vector.load %arg5[%c1_168, %c2_169, %c0_170, %c0_171] : memref<3x9x1x32xf32, #tpu.memory_space<vmem>>, vector<1x1x1x32xf32>
    %171 = vector.shape_cast %170 : vector<1x1x1x32xf32> to vector<1x32xf32>
    %c1_172 = arith.constant 1 : index
    %c0_173 = arith.constant 0 : index
    %c0_174 = arith.constant 0 : index
    %172 = vector.load %arg8[%c1_172, %c0_173, %c0_174] : memref<8x8x32xf32, #tpu.memory_space<vmem>>, vector<7x7x32xf32>
    %173 = vector.extract_strided_slice %1 {offsets = [0, 1, 0], sizes = [7, 7, 32], strides = [1, 1, 1]} : vector<8x8x32xf32> to vector<7x7x32xf32>
    %174 = vector.shape_cast %171 : vector<1x32xf32> to vector<1x1x32xf32>
    %175 = vector.broadcast %174 : vector<1x1x32xf32> to vector<7x7x32xf32>
    %176 = arith.mulf %173, %175 : vector<7x7x32xf32>
    %177 = arith.addf %172, %176 : vector<7x7x32xf32>
    %c1_175 = arith.constant 1 : index
    %c0_176 = arith.constant 0 : index
    %c0_177 = arith.constant 0 : index
    %178 = vector.load %arg8[%c1_175, %c0_176, %c0_177] : memref<8x8x32xf32, #tpu.memory_space<vmem>>, vector<7x7x32xf32>
    tpu.vector_store %arg8[%c1_175, %c0_176, %c0_177], %177 {strides = array<i32>} : memref<8x8x32xf32, #tpu.memory_space<vmem>>, vector<7x7x32xf32>,
    %c0_178 = arith.constant 0 : index
    %c0_179 = arith.constant 0 : index
    %c0_180 = arith.constant 0 : index
    %179 = vector.load %arg8[%c0_178, %c0_179, %c0_180] : memref<8x8x32xf32, #tpu.memory_space<vmem>>, vector<1x7x32xf32>
    %180 = vector.extract_strided_slice %8 {offsets = [0, 1, 0], sizes = [1, 7, 32], strides = [1, 1, 1]} : vector<1x8x32xf32> to vector<1x7x32xf32>
    %181 = vector.shape_cast %171 : vector<1x32xf32> to vector<1x1x32xf32>
    %182 = vector.broadcast %181 : vector<1x1x32xf32> to vector<1x7x32xf32>
    %183 = arith.mulf %180, %182 : vector<1x7x32xf32>
    %184 = arith.addf %179, %183 : vector<1x7x32xf32>
    %c0_181 = arith.constant 0 : index
    %c0_182 = arith.constant 0 : index
    %c0_183 = arith.constant 0 : index
    %185 = vector.load %arg8[%c0_181, %c0_182, %c0_183] : memref<8x8x32xf32, #tpu.memory_space<vmem>>, vector<1x7x32xf32>
    tpu.vector_store %arg8[%c0_181, %c0_182, %c0_183], %184 {strides = array<i32>} : memref<8x8x32xf32, #tpu.memory_space<vmem>>, vector<1x7x32xf32>,
    %c1_184 = arith.constant 1 : index
    %c3_185 = arith.constant 3 : index
    %c0_186 = arith.constant 0 : index
    %c0_187 = arith.constant 0 : index
    %186 = vector.load %arg5[%c1_184, %c3_185, %c0_186, %c0_187] : memref<3x9x1x32xf32, #tpu.memory_space<vmem>>, vector<1x1x1x32xf32>
    %187 = vector.shape_cast %186 : vector<1x1x1x32xf32> to vector<1x32xf32>
    %c0_188 = arith.constant 0 : index
    %c1_189 = arith.constant 1 : index
    %c0_190 = arith.constant 0 : index
    %188 = vector.load %arg8[%c0_188, %c1_189, %c0_190] : memref<8x8x32xf32, #tpu.memory_space<vmem>>, vector<8x7x32xf32>
    %189 = vector.extract_strided_slice %1 {offsets = [0, 0, 0], sizes = [8, 7, 32], strides = [1, 1, 1]} : vector<8x8x32xf32> to vector<8x7x32xf32>
    %190 = vector.shape_cast %187 : vector<1x32xf32> to vector<1x1x32xf32>
    %191 = vector.broadcast %190 : vector<1x1x32xf32> to vector<8x7x32xf32>
    %192 = arith.mulf %189, %191 : vector<8x7x32xf32>
    %193 = arith.addf %188, %192 : vector<8x7x32xf32>
    %c0_191 = arith.constant 0 : index
    %c1_192 = arith.constant 1 : index
    %c0_193 = arith.constant 0 : index
    %194 = vector.load %arg8[%c0_191, %c1_192, %c0_193] : memref<8x8x32xf32, #tpu.memory_space<vmem>>, vector<8x7x32xf32>
    tpu.vector_store %arg8[%c0_191, %c1_192, %c0_193], %193 {strides = array<i32>} : memref<8x8x32xf32, #tpu.memory_space<vmem>>, vector<8x7x32xf32>,
    %c1_194 = arith.constant 1 : index
    %c4_195 = arith.constant 4 : index
    %c0_196 = arith.constant 0 : index
    %c0_197 = arith.constant 0 : index
    %195 = vector.load %arg5[%c1_194, %c4_195, %c0_196, %c0_197] : memref<3x9x1x32xf32, #tpu.memory_space<vmem>>, vector<1x1x1x32xf32>
    %196 = vector.shape_cast %195 : vector<1x1x1x32xf32> to vector<1x32xf32>
    %c0_198 = arith.constant 0 : index
    %c0_199 = arith.constant 0 : index
    %c0_200 = arith.constant 0 : index
    %197 = vector.load %arg8[%c0_198, %c0_199, %c0_200] : memref<8x8x32xf32, #tpu.memory_space<vmem>>, vector<8x8x32xf32>
    %198 = vector.shape_cast %196 : vector<1x32xf32> to vector<1x1x32xf32>
    %199 = vector.broadcast %198 : vector<1x1x32xf32> to vector<8x8x32xf32>
    %200 = arith.mulf %1, %199 : vector<8x8x32xf32>
    %201 = arith.addf %197, %200 : vector<8x8x32xf32>
    %c0_201 = arith.constant 0 : index
    %c0_202 = arith.constant 0 : index
    %c0_203 = arith.constant 0 : index
    %202 = vector.load %arg8[%c0_201, %c0_202, %c0_203] : memref<8x8x32xf32, #tpu.memory_space<vmem>>, vector<8x8x32xf32>
    tpu.vector_store %arg8[%c0_201, %c0_202, %c0_203], %201 {strides = array<i32>} : memref<8x8x32xf32, #tpu.memory_space<vmem>>, vector<8x8x32xf32>,
    %c1_204 = arith.constant 1 : index
    %c5_205 = arith.constant 5 : index
    %c0_206 = arith.constant 0 : index
    %c0_207 = arith.constant 0 : index
    %203 = vector.load %arg5[%c1_204, %c5_205, %c0_206, %c0_207] : memref<3x9x1x32xf32, #tpu.memory_space<vmem>>, vector<1x1x1x32xf32>
    %204 = vector.shape_cast %203 : vector<1x1x1x32xf32> to vector<1x32xf32>
    %c0_208 = arith.constant 0 : index
    %c0_209 = arith.constant 0 : index
    %c0_210 = arith.constant 0 : index
    %205 = vector.load %arg8[%c0_208, %c0_209, %c0_210] : memref<8x8x32xf32, #tpu.memory_space<vmem>>, vector<8x7x32xf32>
    %206 = vector.extract_strided_slice %1 {offsets = [0, 1, 0], sizes = [8, 7, 32], strides = [1, 1, 1]} : vector<8x8x32xf32> to vector<8x7x32xf32>
    %207 = vector.shape_cast %204 : vector<1x32xf32> to vector<1x1x32xf32>
    %208 = vector.broadcast %207 : vector<1x1x32xf32> to vector<8x7x32xf32>
    %209 = arith.mulf %206, %208 : vector<8x7x32xf32>
    %210 = arith.addf %205, %209 : vector<8x7x32xf32>
    %c0_211 = arith.constant 0 : index
    %c0_212 = arith.constant 0 : index
    %c0_213 = arith.constant 0 : index
    %211 = vector.load %arg8[%c0_211, %c0_212, %c0_213] : memref<8x8x32xf32, #tpu.memory_space<vmem>>, vector<8x7x32xf32>
    tpu.vector_store %arg8[%c0_211, %c0_212, %c0_213], %210 {strides = array<i32>} : memref<8x8x32xf32, #tpu.memory_space<vmem>>, vector<8x7x32xf32>,
    %c1_214 = arith.constant 1 : index
    %c6_215 = arith.constant 6 : index
    %c0_216 = arith.constant 0 : index
    %c0_217 = arith.constant 0 : index
    %212 = vector.load %arg5[%c1_214, %c6_215, %c0_216, %c0_217] : memref<3x9x1x32xf32, #tpu.memory_space<vmem>>, vector<1x1x1x32xf32>
    %213 = vector.shape_cast %212 : vector<1x1x1x32xf32> to vector<1x32xf32>
    %c0_218 = arith.constant 0 : index
    %c1_219 = arith.constant 1 : index
    %c0_220 = arith.constant 0 : index
    %214 = vector.load %arg8[%c0_218, %c1_219, %c0_220] : memref<8x8x32xf32, #tpu.memory_space<vmem>>, vector<7x7x32xf32>
    %215 = vector.extract_strided_slice %1 {offsets = [1, 0, 0], sizes = [7, 7, 32], strides = [1, 1, 1]} : vector<8x8x32xf32> to vector<7x7x32xf32>
    %216 = vector.shape_cast %213 : vector<1x32xf32> to vector<1x1x32xf32>
    %217 = vector.broadcast %216 : vector<1x1x32xf32> to vector<7x7x32xf32>
    %218 = arith.mulf %215, %217 : vector<7x7x32xf32>
    %219 = arith.addf %214, %218 : vector<7x7x32xf32>
    %c0_221 = arith.constant 0 : index
    %c1_222 = arith.constant 1 : index
    %c0_223 = arith.constant 0 : index
    %220 = vector.load %arg8[%c0_221, %c1_222, %c0_223] : memref<8x8x32xf32, #tpu.memory_space<vmem>>, vector<7x7x32xf32>
    tpu.vector_store %arg8[%c0_221, %c1_222, %c0_223], %219 {strides = array<i32>} : memref<8x8x32xf32, #tpu.memory_space<vmem>>, vector<7x7x32xf32>,
    %c7_224 = arith.constant 7 : index
    %c1_225 = arith.constant 1 : index
    %c0_226 = arith.constant 0 : index
    %221 = vector.load %arg8[%c7_224, %c1_225, %c0_226] : memref<8x8x32xf32, #tpu.memory_space<vmem>>, vector<1x7x32xf32>
    %222 = vector.extract_strided_slice %11 {offsets = [0, 0, 0], sizes = [1, 7, 32], strides = [1, 1, 1]} : vector<1x8x32xf32> to vector<1x7x32xf32>
    %223 = vector.shape_cast %213 : vector<1x32xf32> to vector<1x1x32xf32>
    %224 = vector.broadcast %223 : vector<1x1x32xf32> to vector<1x7x32xf32>
    %225 = arith.mulf %222, %224 : vector<1x7x32xf32>
    %226 = arith.addf %221, %225 : vector<1x7x32xf32>
    %c7_227 = arith.constant 7 : index
    %c1_228 = arith.constant 1 : index
    %c0_229 = arith.constant 0 : index
    %227 = vector.load %arg8[%c7_227, %c1_228, %c0_229] : memref<8x8x32xf32, #tpu.memory_space<vmem>>, vector<1x7x32xf32>
    tpu.vector_store %arg8[%c7_227, %c1_228, %c0_229], %226 {strides = array<i32>} : memref<8x8x32xf32, #tpu.memory_space<vmem>>, vector<1x7x32xf32>,
    %c1_230 = arith.constant 1 : index
    %c7_231 = arith.constant 7 : index
    %c0_232 = arith.constant 0 : index
    %c0_233 = arith.constant 0 : index
    %228 = vector.load %arg5[%c1_230, %c7_231, %c0_232, %c0_233] : memref<3x9x1x32xf32, #tpu.memory_space<vmem>>, vector<1x1x1x32xf32>
    %229 = vector.shape_cast %228 : vector<1x1x1x32xf32> to vector<1x32xf32>
    %c0_234 = arith.constant 0 : index
    %c0_235 = arith.constant 0 : index
    %c0_236 = arith.constant 0 : index
    %230 = vector.load %arg8[%c0_234, %c0_235, %c0_236] : memref<8x8x32xf32, #tpu.memory_space<vmem>>, vector<7x8x32xf32>
    %231 = vector.extract_strided_slice %1 {offsets = [1, 0, 0], sizes = [7, 8, 32], strides = [1, 1, 1]} : vector<8x8x32xf32> to vector<7x8x32xf32>
    %232 = vector.shape_cast %229 : vector<1x32xf32> to vector<1x1x32xf32>
    %233 = vector.broadcast %232 : vector<1x1x32xf32> to vector<7x8x32xf32>
    %234 = arith.mulf %231, %233 : vector<7x8x32xf32>
    %235 = arith.addf %230, %234 : vector<7x8x32xf32>
    %c0_237 = arith.constant 0 : index
    %c0_238 = arith.constant 0 : index
    %c0_239 = arith.constant 0 : index
    %236 = vector.load %arg8[%c0_237, %c0_238, %c0_239] : memref<8x8x32xf32, #tpu.memory_space<vmem>>, vector<7x8x32xf32>
    tpu.vector_store %arg8[%c0_237, %c0_238, %c0_239], %235 {strides = array<i32>} : memref<8x8x32xf32, #tpu.memory_space<vmem>>, vector<7x8x32xf32>,
    %c7_240 = arith.constant 7 : index
    %c0_241 = arith.constant 0 : index
    %c0_242 = arith.constant 0 : index
    %237 = vector.load %arg8[%c7_240, %c0_241, %c0_242] : memref<8x8x32xf32, #tpu.memory_space<vmem>>, vector<1x8x32xf32>
    %238 = vector.shape_cast %229 : vector<1x32xf32> to vector<1x1x32xf32>
    %239 = vector.broadcast %238 : vector<1x1x32xf32> to vector<1x8x32xf32>
    %240 = arith.mulf %11, %239 : vector<1x8x32xf32>
    %241 = arith.addf %237, %240 : vector<1x8x32xf32>
    %c7_243 = arith.constant 7 : index
    %c0_244 = arith.constant 0 : index
    %c0_245 = arith.constant 0 : index
    %242 = vector.load %arg8[%c7_243, %c0_244, %c0_245] : memref<8x8x32xf32, #tpu.memory_space<vmem>>, vector<1x8x32xf32>
    tpu.vector_store %arg8[%c7_243, %c0_244, %c0_245], %241 {strides = array<i32>} : memref<8x8x32xf32, #tpu.memory_space<vmem>>, vector<1x8x32xf32>,
    %c1_246 = arith.constant 1 : index
    %c8_247 = arith.constant 8 : index
    %c0_248 = arith.constant 0 : index
    %c0_249 = arith.constant 0 : index
    %243 = vector.load %arg5[%c1_246, %c8_247, %c0_248, %c0_249] : memref<3x9x1x32xf32, #tpu.memory_space<vmem>>, vector<1x1x1x32xf32>
    %244 = vector.shape_cast %243 : vector<1x1x1x32xf32> to vector<1x32xf32>
    %c0_250 = arith.constant 0 : index
    %c0_251 = arith.constant 0 : index
    %c0_252 = arith.constant 0 : index
    %245 = vector.load %arg8[%c0_250, %c0_251, %c0_252] : memref<8x8x32xf32, #tpu.memory_space<vmem>>, vector<7x7x32xf32>
    %246 = vector.extract_strided_slice %1 {offsets = [1, 1, 0], sizes = [7, 7, 32], strides = [1, 1, 1]} : vector<8x8x32xf32> to vector<7x7x32xf32>
    %247 = vector.shape_cast %244 : vector<1x32xf32> to vector<1x1x32xf32>
    %248 = vector.broadcast %247 : vector<1x1x32xf32> to vector<7x7x32xf32>
    %249 = arith.mulf %246, %248 : vector<7x7x32xf32>
    %250 = arith.addf %245, %249 : vector<7x7x32xf32>
    %c0_253 = arith.constant 0 : index
    %c0_254 = arith.constant 0 : index
    %c0_255 = arith.constant 0 : index
    %251 = vector.load %arg8[%c0_253, %c0_254, %c0_255] : memref<8x8x32xf32, #tpu.memory_space<vmem>>, vector<7x7x32xf32>
    tpu.vector_store %arg8[%c0_253, %c0_254, %c0_255], %250 {strides = array<i32>} : memref<8x8x32xf32, #tpu.memory_space<vmem>>, vector<7x7x32xf32>,
    %c7_256 = arith.constant 7 : index
    %c0_257 = arith.constant 0 : index
    %c0_258 = arith.constant 0 : index
    %252 = vector.load %arg8[%c7_256, %c0_257, %c0_258] : memref<8x8x32xf32, #tpu.memory_space<vmem>>, vector<1x7x32xf32>
    %253 = vector.extract_strided_slice %11 {offsets = [0, 1, 0], sizes = [1, 7, 32], strides = [1, 1, 1]} : vector<1x8x32xf32> to vector<1x7x32xf32>
    %254 = vector.shape_cast %244 : vector<1x32xf32> to vector<1x1x32xf32>
    %255 = vector.broadcast %254 : vector<1x1x32xf32> to vector<1x7x32xf32>
    %256 = arith.mulf %253, %255 : vector<1x7x32xf32>
    %257 = arith.addf %252, %256 : vector<1x7x32xf32>
    %c7_259 = arith.constant 7 : index
    %c0_260 = arith.constant 0 : index
    %c0_261 = arith.constant 0 : index
    %258 = vector.load %arg8[%c7_259, %c0_260, %c0_261] : memref<8x8x32xf32, #tpu.memory_space<vmem>>, vector<1x7x32xf32>
    tpu.vector_store %arg8[%c7_259, %c0_260, %c0_261], %257 {strides = array<i32>} : memref<8x8x32xf32, #tpu.memory_space<vmem>>, vector<1x7x32xf32>,
    %c2_262 = arith.constant 2 : index
    %c0_263 = arith.constant 0 : index
    %c0_264 = arith.constant 0 : index
    %c0_265 = arith.constant 0 : index
    %259 = vector.load %arg5[%c2_262, %c0_263, %c0_264, %c0_265] : memref<3x9x1x32xf32, #tpu.memory_space<vmem>>, vector<1x1x1x31xf32>
    %260 = vector.shape_cast %259 : vector<1x1x1x31xf32> to vector<1x31xf32>
    %c1_266 = arith.constant 1 : index
    %c1_267 = arith.constant 1 : index
    %c0_268 = arith.constant 0 : index
    %261 = vector.load %arg8[%c1_266, %c1_267, %c0_268] : memref<8x8x32xf32, #tpu.memory_space<vmem>>, vector<7x7x31xf32>
    %262 = vector.extract_strided_slice %1 {offsets = [0, 0, 1], sizes = [7, 7, 31], strides = [1, 1, 1]} : vector<8x8x32xf32> to vector<7x7x31xf32>
    %263 = vector.shape_cast %260 : vector<1x31xf32> to vector<1x1x31xf32>
    %264 = vector.broadcast %263 : vector<1x1x31xf32> to vector<7x7x31xf32>
    %265 = arith.mulf %262, %264 : vector<7x7x31xf32>
    %266 = arith.addf %261, %265 : vector<7x7x31xf32>
    %c1_269 = arith.constant 1 : index
    %c1_270 = arith.constant 1 : index
    %c0_271 = arith.constant 0 : index
    %267 = vector.load %arg8[%c1_269, %c1_270, %c0_271] : memref<8x8x32xf32, #tpu.memory_space<vmem>>, vector<7x7x31xf32>
    tpu.vector_store %arg8[%c1_269, %c1_270, %c0_271], %266 {strides = array<i32>} : memref<8x8x32xf32, #tpu.memory_space<vmem>>, vector<7x7x31xf32>,
    %c0_272 = arith.constant 0 : index
    %c1_273 = arith.constant 1 : index
    %c0_274 = arith.constant 0 : index
    %268 = vector.load %arg8[%c0_272, %c1_273, %c0_274] : memref<8x8x32xf32, #tpu.memory_space<vmem>>, vector<1x7x31xf32>
    %269 = vector.extract_strided_slice %8 {offsets = [0, 0, 1], sizes = [1, 7, 31], strides = [1, 1, 1]} : vector<1x8x32xf32> to vector<1x7x31xf32>
    %270 = vector.shape_cast %260 : vector<1x31xf32> to vector<1x1x31xf32>
    %271 = vector.broadcast %270 : vector<1x1x31xf32> to vector<1x7x31xf32>
    %272 = arith.mulf %269, %271 : vector<1x7x31xf32>
    %273 = arith.addf %268, %272 : vector<1x7x31xf32>
    %c0_275 = arith.constant 0 : index
    %c1_276 = arith.constant 1 : index
    %c0_277 = arith.constant 0 : index
    %274 = vector.load %arg8[%c0_275, %c1_276, %c0_277] : memref<8x8x32xf32, #tpu.memory_space<vmem>>, vector<1x7x31xf32>
    tpu.vector_store %arg8[%c0_275, %c1_276, %c0_277], %273 {strides = array<i32>} : memref<8x8x32xf32, #tpu.memory_space<vmem>>, vector<1x7x31xf32>,
    %c2_278 = arith.constant 2 : index
    %c1_279 = arith.constant 1 : index
    %c0_280 = arith.constant 0 : index
    %c0_281 = arith.constant 0 : index
    %275 = vector.load %arg5[%c2_278, %c1_279, %c0_280, %c0_281] : memref<3x9x1x32xf32, #tpu.memory_space<vmem>>, vector<1x1x1x31xf32>
    %276 = vector.shape_cast %275 : vector<1x1x1x31xf32> to vector<1x31xf32>
    %c1_282 = arith.constant 1 : index
    %c0_283 = arith.constant 0 : index
    %c0_284 = arith.constant 0 : index
    %277 = vector.load %arg8[%c1_282, %c0_283, %c0_284] : memref<8x8x32xf32, #tpu.memory_space<vmem>>, vector<7x8x31xf32>
    %278 = vector.extract_strided_slice %1 {offsets = [0, 0, 1], sizes = [7, 8, 31], strides = [1, 1, 1]} : vector<8x8x32xf32> to vector<7x8x31xf32>
    %279 = vector.shape_cast %276 : vector<1x31xf32> to vector<1x1x31xf32>
    %280 = vector.broadcast %279 : vector<1x1x31xf32> to vector<7x8x31xf32>
    %281 = arith.mulf %278, %280 : vector<7x8x31xf32>
    %282 = arith.addf %277, %281 : vector<7x8x31xf32>
    %c1_285 = arith.constant 1 : index
    %c0_286 = arith.constant 0 : index
    %c0_287 = arith.constant 0 : index
    %283 = vector.load %arg8[%c1_285, %c0_286, %c0_287] : memref<8x8x32xf32, #tpu.memory_space<vmem>>, vector<7x8x31xf32>
    tpu.vector_store %arg8[%c1_285, %c0_286, %c0_287], %282 {strides = array<i32>} : memref<8x8x32xf32, #tpu.memory_space<vmem>>, vector<7x8x31xf32>,
    %c0_288 = arith.constant 0 : index
    %c0_289 = arith.constant 0 : index
    %c0_290 = arith.constant 0 : index
    %284 = vector.load %arg8[%c0_288, %c0_289, %c0_290] : memref<8x8x32xf32, #tpu.memory_space<vmem>>, vector<1x8x31xf32>
    %285 = vector.extract_strided_slice %8 {offsets = [0, 0, 1], sizes = [1, 8, 31], strides = [1, 1, 1]} : vector<1x8x32xf32> to vector<1x8x31xf32>
    %286 = vector.shape_cast %276 : vector<1x31xf32> to vector<1x1x31xf32>
    %287 = vector.broadcast %286 : vector<1x1x31xf32> to vector<1x8x31xf32>
    %288 = arith.mulf %285, %287 : vector<1x8x31xf32>
    %289 = arith.addf %284, %288 : vector<1x8x31xf32>
    %c0_291 = arith.constant 0 : index
    %c0_292 = arith.constant 0 : index
    %c0_293 = arith.constant 0 : index
    %290 = vector.load %arg8[%c0_291, %c0_292, %c0_293] : memref<8x8x32xf32, #tpu.memory_space<vmem>>, vector<1x8x31xf32>
    tpu.vector_store %arg8[%c0_291, %c0_292, %c0_293], %289 {strides = array<i32>} : memref<8x8x32xf32, #tpu.memory_space<vmem>>, vector<1x8x31xf32>,
    %c2_294 = arith.constant 2 : index
    %c2_295 = arith.constant 2 : index
    %c0_296 = arith.constant 0 : index
    %c0_297 = arith.constant 0 : index
    %291 = vector.load %arg5[%c2_294, %c2_295, %c0_296, %c0_297] : memref<3x9x1x32xf32, #tpu.memory_space<vmem>>, vector<1x1x1x31xf32>
    %292 = vector.shape_cast %291 : vector<1x1x1x31xf32> to vector<1x31xf32>
    %c1_298 = arith.constant 1 : index
    %c0_299 = arith.constant 0 : index
    %c0_300 = arith.constant 0 : index
    %293 = vector.load %arg8[%c1_298, %c0_299, %c0_300] : memref<8x8x32xf32, #tpu.memory_space<vmem>>, vector<7x7x31xf32>
    %294 = vector.extract_strided_slice %1 {offsets = [0, 1, 1], sizes = [7, 7, 31], strides = [1, 1, 1]} : vector<8x8x32xf32> to vector<7x7x31xf32>
    %295 = vector.shape_cast %292 : vector<1x31xf32> to vector<1x1x31xf32>
    %296 = vector.broadcast %295 : vector<1x1x31xf32> to vector<7x7x31xf32>
    %297 = arith.mulf %294, %296 : vector<7x7x31xf32>
    %298 = arith.addf %293, %297 : vector<7x7x31xf32>
    %c1_301 = arith.constant 1 : index
    %c0_302 = arith.constant 0 : index
    %c0_303 = arith.constant 0 : index
    %299 = vector.load %arg8[%c1_301, %c0_302, %c0_303] : memref<8x8x32xf32, #tpu.memory_space<vmem>>, vector<7x7x31xf32>
    tpu.vector_store %arg8[%c1_301, %c0_302, %c0_303], %298 {strides = array<i32>} : memref<8x8x32xf32, #tpu.memory_space<vmem>>, vector<7x7x31xf32>,
    %c0_304 = arith.constant 0 : index
    %c0_305 = arith.constant 0 : index
    %c0_306 = arith.constant 0 : index
    %300 = vector.load %arg8[%c0_304, %c0_305, %c0_306] : memref<8x8x32xf32, #tpu.memory_space<vmem>>, vector<1x7x31xf32>
    %301 = vector.extract_strided_slice %8 {offsets = [0, 1, 1], sizes = [1, 7, 31], strides = [1, 1, 1]} : vector<1x8x32xf32> to vector<1x7x31xf32>
    %302 = vector.shape_cast %292 : vector<1x31xf32> to vector<1x1x31xf32>
    %303 = vector.broadcast %302 : vector<1x1x31xf32> to vector<1x7x31xf32>
    %304 = arith.mulf %301, %303 : vector<1x7x31xf32>
    %305 = arith.addf %300, %304 : vector<1x7x31xf32>
    %c0_307 = arith.constant 0 : index
    %c0_308 = arith.constant 0 : index
    %c0_309 = arith.constant 0 : index
    %306 = vector.load %arg8[%c0_307, %c0_308, %c0_309] : memref<8x8x32xf32, #tpu.memory_space<vmem>>, vector<1x7x31xf32>
    tpu.vector_store %arg8[%c0_307, %c0_308, %c0_309], %305 {strides = array<i32>} : memref<8x8x32xf32, #tpu.memory_space<vmem>>, vector<1x7x31xf32>,
    %c2_310 = arith.constant 2 : index
    %c3_311 = arith.constant 3 : index
    %c0_312 = arith.constant 0 : index
    %c0_313 = arith.constant 0 : index
    %307 = vector.load %arg5[%c2_310, %c3_311, %c0_312, %c0_313] : memref<3x9x1x32xf32, #tpu.memory_space<vmem>>, vector<1x1x1x31xf32>
    %308 = vector.shape_cast %307 : vector<1x1x1x31xf32> to vector<1x31xf32>
    %c0_314 = arith.constant 0 : index
    %c1_315 = arith.constant 1 : index
    %c0_316 = arith.constant 0 : index
    %309 = vector.load %arg8[%c0_314, %c1_315, %c0_316] : memref<8x8x32xf32, #tpu.memory_space<vmem>>, vector<8x7x31xf32>
    %310 = vector.extract_strided_slice %1 {offsets = [0, 0, 1], sizes = [8, 7, 31], strides = [1, 1, 1]} : vector<8x8x32xf32> to vector<8x7x31xf32>
    %311 = vector.shape_cast %308 : vector<1x31xf32> to vector<1x1x31xf32>
    %312 = vector.broadcast %311 : vector<1x1x31xf32> to vector<8x7x31xf32>
    %313 = arith.mulf %310, %312 : vector<8x7x31xf32>
    %314 = arith.addf %309, %313 : vector<8x7x31xf32>
    %c0_317 = arith.constant 0 : index
    %c1_318 = arith.constant 1 : index
    %c0_319 = arith.constant 0 : index
    %315 = vector.load %arg8[%c0_317, %c1_318, %c0_319] : memref<8x8x32xf32, #tpu.memory_space<vmem>>, vector<8x7x31xf32>
    tpu.vector_store %arg8[%c0_317, %c1_318, %c0_319], %314 {strides = array<i32>} : memref<8x8x32xf32, #tpu.memory_space<vmem>>, vector<8x7x31xf32>,
    %c2_320 = arith.constant 2 : index
    %c4_321 = arith.constant 4 : index
    %c0_322 = arith.constant 0 : index
    %c0_323 = arith.constant 0 : index
    %316 = vector.load %arg5[%c2_320, %c4_321, %c0_322, %c0_323] : memref<3x9x1x32xf32, #tpu.memory_space<vmem>>, vector<1x1x1x31xf32>
    %317 = vector.shape_cast %316 : vector<1x1x1x31xf32> to vector<1x31xf32>
    %c0_324 = arith.constant 0 : index
    %c0_325 = arith.constant 0 : index
    %c0_326 = arith.constant 0 : index
    %318 = vector.load %arg8[%c0_324, %c0_325, %c0_326] : memref<8x8x32xf32, #tpu.memory_space<vmem>>, vector<8x8x31xf32>
    %319 = vector.extract_strided_slice %1 {offsets = [0, 0, 1], sizes = [8, 8, 31], strides = [1, 1, 1]} : vector<8x8x32xf32> to vector<8x8x31xf32>
    %320 = vector.shape_cast %317 : vector<1x31xf32> to vector<1x1x31xf32>
    %321 = vector.broadcast %320 : vector<1x1x31xf32> to vector<8x8x31xf32>
    %322 = arith.mulf %319, %321 : vector<8x8x31xf32>
    %323 = arith.addf %318, %322 : vector<8x8x31xf32>
    %c0_327 = arith.constant 0 : index
    %c0_328 = arith.constant 0 : index
    %c0_329 = arith.constant 0 : index
    %324 = vector.load %arg8[%c0_327, %c0_328, %c0_329] : memref<8x8x32xf32, #tpu.memory_space<vmem>>, vector<8x8x31xf32>
    tpu.vector_store %arg8[%c0_327, %c0_328, %c0_329], %323 {strides = array<i32>} : memref<8x8x32xf32, #tpu.memory_space<vmem>>, vector<8x8x31xf32>,
    %c2_330 = arith.constant 2 : index
    %c5_331 = arith.constant 5 : index
    %c0_332 = arith.constant 0 : index
    %c0_333 = arith.constant 0 : index
    %325 = vector.load %arg5[%c2_330, %c5_331, %c0_332, %c0_333] : memref<3x9x1x32xf32, #tpu.memory_space<vmem>>, vector<1x1x1x31xf32>
    %326 = vector.shape_cast %325 : vector<1x1x1x31xf32> to vector<1x31xf32>
    %c0_334 = arith.constant 0 : index
    %c0_335 = arith.constant 0 : index
    %c0_336 = arith.constant 0 : index
    %327 = vector.load %arg8[%c0_334, %c0_335, %c0_336] : memref<8x8x32xf32, #tpu.memory_space<vmem>>, vector<8x7x31xf32>
    %328 = vector.extract_strided_slice %1 {offsets = [0, 1, 1], sizes = [8, 7, 31], strides = [1, 1, 1]} : vector<8x8x32xf32> to vector<8x7x31xf32>
    %329 = vector.shape_cast %326 : vector<1x31xf32> to vector<1x1x31xf32>
    %330 = vector.broadcast %329 : vector<1x1x31xf32> to vector<8x7x31xf32>
    %331 = arith.mulf %328, %330 : vector<8x7x31xf32>
    %332 = arith.addf %327, %331 : vector<8x7x31xf32>
    %c0_337 = arith.constant 0 : index
    %c0_338 = arith.constant 0 : index
    %c0_339 = arith.constant 0 : index
    %333 = vector.load %arg8[%c0_337, %c0_338, %c0_339] : memref<8x8x32xf32, #tpu.memory_space<vmem>>, vector<8x7x31xf32>
    tpu.vector_store %arg8[%c0_337, %c0_338, %c0_339], %332 {strides = array<i32>} : memref<8x8x32xf32, #tpu.memory_space<vmem>>, vector<8x7x31xf32>,
    %c2_340 = arith.constant 2 : index
    %c6_341 = arith.constant 6 : index
    %c0_342 = arith.constant 0 : index
    %c0_343 = arith.constant 0 : index
    %334 = vector.load %arg5[%c2_340, %c6_341, %c0_342, %c0_343] : memref<3x9x1x32xf32, #tpu.memory_space<vmem>>, vector<1x1x1x31xf32>
    %335 = vector.shape_cast %334 : vector<1x1x1x31xf32> to vector<1x31xf32>
    %c0_344 = arith.constant 0 : index
    %c1_345 = arith.constant 1 : index
    %c0_346 = arith.constant 0 : index
    %336 = vector.load %arg8[%c0_344, %c1_345, %c0_346] : memref<8x8x32xf32, #tpu.memory_space<vmem>>, vector<7x7x31xf32>
    %337 = vector.extract_strided_slice %1 {offsets = [1, 0, 1], sizes = [7, 7, 31], strides = [1, 1, 1]} : vector<8x8x32xf32> to vector<7x7x31xf32>
    %338 = vector.shape_cast %335 : vector<1x31xf32> to vector<1x1x31xf32>
    %339 = vector.broadcast %338 : vector<1x1x31xf32> to vector<7x7x31xf32>
    %340 = arith.mulf %337, %339 : vector<7x7x31xf32>
    %341 = arith.addf %336, %340 : vector<7x7x31xf32>
    %c0_347 = arith.constant 0 : index
    %c1_348 = arith.constant 1 : index
    %c0_349 = arith.constant 0 : index
    %342 = vector.load %arg8[%c0_347, %c1_348, %c0_349] : memref<8x8x32xf32, #tpu.memory_space<vmem>>, vector<7x7x31xf32>
    tpu.vector_store %arg8[%c0_347, %c1_348, %c0_349], %341 {strides = array<i32>} : memref<8x8x32xf32, #tpu.memory_space<vmem>>, vector<7x7x31xf32>,
    %c7_350 = arith.constant 7 : index
    %c1_351 = arith.constant 1 : index
    %c0_352 = arith.constant 0 : index
    %343 = vector.load %arg8[%c7_350, %c1_351, %c0_352] : memref<8x8x32xf32, #tpu.memory_space<vmem>>, vector<1x7x31xf32>
    %344 = vector.extract_strided_slice %11 {offsets = [0, 0, 1], sizes = [1, 7, 31], strides = [1, 1, 1]} : vector<1x8x32xf32> to vector<1x7x31xf32>
    %345 = vector.shape_cast %335 : vector<1x31xf32> to vector<1x1x31xf32>
    %346 = vector.broadcast %345 : vector<1x1x31xf32> to vector<1x7x31xf32>
    %347 = arith.mulf %344, %346 : vector<1x7x31xf32>
    %348 = arith.addf %343, %347 : vector<1x7x31xf32>
    %c7_353 = arith.constant 7 : index
    %c1_354 = arith.constant 1 : index
    %c0_355 = arith.constant 0 : index
    %349 = vector.load %arg8[%c7_353, %c1_354, %c0_355] : memref<8x8x32xf32, #tpu.memory_space<vmem>>, vector<1x7x31xf32>
    tpu.vector_store %arg8[%c7_353, %c1_354, %c0_355], %348 {strides = array<i32>} : memref<8x8x32xf32, #tpu.memory_space<vmem>>, vector<1x7x31xf32>,
    %c2_356 = arith.constant 2 : index
    %c7_357 = arith.constant 7 : index
    %c0_358 = arith.constant 0 : index
    %c0_359 = arith.constant 0 : index
    %350 = vector.load %arg5[%c2_356, %c7_357, %c0_358, %c0_359] : memref<3x9x1x32xf32, #tpu.memory_space<vmem>>, vector<1x1x1x31xf32>
    %351 = vector.shape_cast %350 : vector<1x1x1x31xf32> to vector<1x31xf32>
    %c0_360 = arith.constant 0 : index
    %c0_361 = arith.constant 0 : index
    %c0_362 = arith.constant 0 : index
    %352 = vector.load %arg8[%c0_360, %c0_361, %c0_362] : memref<8x8x32xf32, #tpu.memory_space<vmem>>, vector<7x8x31xf32>
    %353 = vector.extract_strided_slice %1 {offsets = [1, 0, 1], sizes = [7, 8, 31], strides = [1, 1, 1]} : vector<8x8x32xf32> to vector<7x8x31xf32>
    %354 = vector.shape_cast %351 : vector<1x31xf32> to vector<1x1x31xf32>
    %355 = vector.broadcast %354 : vector<1x1x31xf32> to vector<7x8x31xf32>
    %356 = arith.mulf %353, %355 : vector<7x8x31xf32>
    %357 = arith.addf %352, %356 : vector<7x8x31xf32>
    %c0_363 = arith.constant 0 : index
    %c0_364 = arith.constant 0 : index
    %c0_365 = arith.constant 0 : index
    %358 = vector.load %arg8[%c0_363, %c0_364, %c0_365] : memref<8x8x32xf32, #tpu.memory_space<vmem>>, vector<7x8x31xf32>
    tpu.vector_store %arg8[%c0_363, %c0_364, %c0_365], %357 {strides = array<i32>} : memref<8x8x32xf32, #tpu.memory_space<vmem>>, vector<7x8x31xf32>,
    %c7_366 = arith.constant 7 : index
    %c0_367 = arith.constant 0 : index
    %c0_368 = arith.constant 0 : index
    %359 = vector.load %arg8[%c7_366, %c0_367, %c0_368] : memref<8x8x32xf32, #tpu.memory_space<vmem>>, vector<1x8x31xf32>
    %360 = vector.extract_strided_slice %11 {offsets = [0, 0, 1], sizes = [1, 8, 31], strides = [1, 1, 1]} : vector<1x8x32xf32> to vector<1x8x31xf32>
    %361 = vector.shape_cast %351 : vector<1x31xf32> to vector<1x1x31xf32>
    %362 = vector.broadcast %361 : vector<1x1x31xf32> to vector<1x8x31xf32>
    %363 = arith.mulf %360, %362 : vector<1x8x31xf32>
    %364 = arith.addf %359, %363 : vector<1x8x31xf32>
    %c7_369 = arith.constant 7 : index
    %c0_370 = arith.constant 0 : index
    %c0_371 = arith.constant 0 : index
    %365 = vector.load %arg8[%c7_369, %c0_370, %c0_371] : memref<8x8x32xf32, #tpu.memory_space<vmem>>, vector<1x8x31xf32>
    tpu.vector_store %arg8[%c7_369, %c0_370, %c0_371], %364 {strides = array<i32>} : memref<8x8x32xf32, #tpu.memory_space<vmem>>, vector<1x8x31xf32>,
    %c2_372 = arith.constant 2 : index
    %c8_373 = arith.constant 8 : index
    %c0_374 = arith.constant 0 : index
    %c0_375 = arith.constant 0 : index
    %366 = vector.load %arg5[%c2_372, %c8_373, %c0_374, %c0_375] : memref<3x9x1x32xf32, #tpu.memory_space<vmem>>, vector<1x1x1x31xf32>
    %367 = vector.shape_cast %366 : vector<1x1x1x31xf32> to vector<1x31xf32>
    %c0_376 = arith.constant 0 : index
    %c0_377 = arith.constant 0 : index
    %c0_378 = arith.constant 0 : index
    %368 = vector.load %arg8[%c0_376, %c0_377, %c0_378] : memref<8x8x32xf32, #tpu.memory_space<vmem>>, vector<7x7x31xf32>
    %369 = vector.extract_strided_slice %1 {offsets = [1, 1, 1], sizes = [7, 7, 31], strides = [1, 1, 1]} : vector<8x8x32xf32> to vector<7x7x31xf32>
    %370 = vector.shape_cast %367 : vector<1x31xf32> to vector<1x1x31xf32>
    %371 = vector.broadcast %370 : vector<1x1x31xf32> to vector<7x7x31xf32>
    %372 = arith.mulf %369, %371 : vector<7x7x31xf32>
    %373 = arith.addf %368, %372 : vector<7x7x31xf32>
    %c0_379 = arith.constant 0 : index
    %c0_380 = arith.constant 0 : index
    %c0_381 = arith.constant 0 : index
    %374 = vector.load %arg8[%c0_379, %c0_380, %c0_381] : memref<8x8x32xf32, #tpu.memory_space<vmem>>, vector<7x7x31xf32>
    tpu.vector_store %arg8[%c0_379, %c0_380, %c0_381], %373 {strides = array<i32>} : memref<8x8x32xf32, #tpu.memory_space<vmem>>, vector<7x7x31xf32>,
    %c7_382 = arith.constant 7 : index
    %c0_383 = arith.constant 0 : index
    %c0_384 = arith.constant 0 : index
    %375 = vector.load %arg8[%c7_382, %c0_383, %c0_384] : memref<8x8x32xf32, #tpu.memory_space<vmem>>, vector<1x7x31xf32>
    %376 = vector.extract_strided_slice %11 {offsets = [0, 1, 1], sizes = [1, 7, 31], strides = [1, 1, 1]} : vector<1x8x32xf32> to vector<1x7x31xf32>
    %377 = vector.shape_cast %367 : vector<1x31xf32> to vector<1x1x31xf32>
    %378 = vector.broadcast %377 : vector<1x1x31xf32> to vector<1x7x31xf32>
    %379 = arith.mulf %376, %378 : vector<1x7x31xf32>
    %380 = arith.addf %375, %379 : vector<1x7x31xf32>
    %c7_385 = arith.constant 7 : index
    %c0_386 = arith.constant 0 : index
    %c0_387 = arith.constant 0 : index
    %381 = vector.load %arg8[%c7_385, %c0_386, %c0_387] : memref<8x8x32xf32, #tpu.memory_space<vmem>>, vector<1x7x31xf32>
    tpu.vector_store %arg8[%c7_385, %c0_386, %c0_387], %380 {strides = array<i32>} : memref<8x8x32xf32, #tpu.memory_space<vmem>>, vector<1x7x31xf32>,
    %c0_388 = arith.constant 0 : index
    %c0_389 = arith.constant 0 : index
    %c0_390 = arith.constant 0 : index
    %382 = vector.load %arg8[%c0_388, %c0_389, %c0_390] : memref<8x8x32xf32, #tpu.memory_space<vmem>>, vector<8x8x32xf32>
    %c0_391 = arith.constant 0 : index
    %c0_392 = arith.constant 0 : index
    %c0_393 = arith.constant 0 : index
    %c0_394 = arith.constant 0 : index
    %383 = vector.load %arg7[%c0_391, %c0_392, %c0_393, %c0_394] : memref<1x8x8x32xf32, #tpu.memory_space<vmem>>, vector<1x8x8x32xf32>
    %384 = vector.shape_cast %383 : vector<1x8x8x32xf32> to vector<8x8x32xf32>
    %385 = vector.shape_cast %382 : vector<8x8x32xf32> to vector<1x8x8x32xf32>
    tpu.vector_store %arg7[%c0_391, %c0_392, %c0_393, %c0_394], %385 {strides = array<i32>} : memref<1x8x8x32xf32, #tpu.memory_space<vmem>>, vector<1x8x8x32xf32>,
    return
  }
  func.func @transform_0(%arg0: i32, %arg1: i32) -> (i32, i32, i32, i32) {
    %c0_i32 = arith.constant 0 : i32
    %c0_i32_0 = arith.constant 0 : i32
    %c0_i32_1 = arith.constant 0 : i32
    return %arg0, %arg1, %c0_i32, %c0_i32_0 : i32, i32, i32, i32
  }
  func.func @transform_1(%arg0: i32, %arg1: i32) -> (i32, i32, i32, i32) {
    %c8_i32 = arith.constant 8 : i32
    %0 = arith.muli %arg1, %c8_i32 : i32
    %c1_i32 = arith.constant 1 : i32
    %1 = arith.subi %0, %c1_i32 : i32
    %c0_i32 = arith.constant 0 : i32
    %2 = arith.maxsi %1, %c0_i32 : i32
    %c0_i32_0 = arith.constant 0 : i32
    %c0_i32_1 = arith.constant 0 : i32
    %c0_i32_2 = arith.constant 0 : i32
    return %arg0, %2, %c0_i32_0, %c0_i32_1 : i32, i32, i32, i32
  }
  func.func @transform_2(%arg0: i32, %arg1: i32) -> (i32, i32, i32, i32) {
    %c8_i32 = arith.constant 8 : i32
    %0 = arith.muli %arg1, %c8_i32 : i32
    %c8_i32_0 = arith.constant 8 : i32
    %1 = arith.addi %0, %c8_i32_0 : i32
    %c7_i32 = arith.constant 7 : i32
    %2 = arith.minsi %1, %c7_i32 : i32
    %c0_i32 = arith.constant 0 : i32
    %c0_i32_1 = arith.constant 0 : i32
    %c0_i32_2 = arith.constant 0 : i32
    return %arg0, %2, %c0_i32, %c0_i32_1 : i32, i32, i32, i32
  }
  func.func @transform_3(%arg0: i32, %arg1: i32) -> (i32, i32, i32, i32) {
    %c0_i32 = arith.constant 0 : i32
    %c0_i32_0 = arith.constant 0 : i32
    %c0_i32_1 = arith.constant 0 : i32
    %c0_i32_2 = arith.constant 0 : i32
    %c0_i32_3 = arith.constant 0 : i32
    return %c0_i32, %c0_i32_0, %c0_i32_1, %c0_i32_2 : i32, i32, i32, i32
  }
  func.func @transform_4(%arg0: i32, %arg1: i32) -> (i32, i32) {
    %c0_i32 = arith.constant 0 : i32
    %c0_i32_0 = arith.constant 0 : i32
    %c0_i32_1 = arith.constant 0 : i32
    return %c0_i32, %c0_i32_0 : i32, i32
  }
  func.func @transform_5(%arg0: i32, %arg1: i32) -> (i32, i32, i32, i32) {
    %c0_i32 = arith.constant 0 : i32
    %c0_i32_0 = arith.constant 0 : i32
    %c0_i32_1 = arith.constant 0 : i32
    return %arg0, %arg1, %c0_i32, %c0_i32_0 : i32, i32, i32, i32
  }
}

</mosaic_0001>

<llo_original>
// kernel: tpu_custom_call.1
$region0: #{tpu_custom_call.1}
  #allocation0 [shape = 'u32[]', space=smem, size = 0x4, offset = 0x4, fixed_abs, tag = 'smem constant byte address 0x4 - core index']
  #allocation1 [shape = 'u32[144,128]{1,0:T(1,128)}', space=vmem, size = 0x12000, scoped, tag = 'internal scratch']
  #allocation2 [shape = 'f32[8,8,32]{2,1,0:T(8,128)}', space=vmem, size = 0x8000, scoped, tag = 'scratch operand']
  %s0 = inlined_call_operand.hbm [shape: f32[2,8,8,32], index: 0, kind: input, shape index: {}]
  %s1 = inlined_call_operand.hbm [shape: f32[2,8,8,32], index: 1, kind: input, shape index: {}]
  %s2 = inlined_call_operand.hbm [shape: f32[2,8,8,32], index: 2, kind: input, shape index: {}]
  %s3 = inlined_call_operand.hbm [shape: f32[3,9,1,32], index: 3, kind: input, shape index: {}]
  %s4 = inlined_call_operand.vmem [shape: f32[1,32], index: 4, kind: input, shape index: {}]
  %s5 = inlined_call_operand.hbm [shape: f32[2,8,8,32], index: 5, kind: output, shape index: {}]
  %s6 = sld [smem:[#allocation0]]
  $region69: #{tpu_custom_call.1} parent=0
    _
  %s8 = ssub.s32 1, %s6
  %s9 = scalar_select 0, %s8, %s6
  $region1: #{tpu_custom_call.1} parent=0
    #allocation3 [shape = 'u8[65536]{0}', space=vmem, size = 0x10000, scoped, tag = 'input window, operand 0']
    #allocation4 [shape = 's32[2]{0}', space=sflag, size = 0x8, scoped, tag = 'scoped memory for tpu_custom_call.1']
    #allocation5 [shape = 's32[2]{0}', space=sflag, size = 0x8, scoped, tag = 'scoped memory for tpu_custom_call.1']
    #allocation6 [shape = 'u8[8192]{0}', space=vmem, size = 0x2000, scoped, tag = 'input window, operand 1']
    #allocation7 [shape = 's32[2]{0}', space=sflag, size = 0x8, scoped, tag = 'scoped memory for tpu_custom_call.1']
    #allocation8 [shape = 'u8[8192]{0}', space=vmem, size = 0x2000, scoped, tag = 'input window, operand 2']
    #allocation9 [shape = 'u8[13824]{0}', space=vmem, size = 0x3800, scoped, tag = 'input window, operand 3, single buffered']
    #allocation10 [shape = 's32[1]{0}', space=sflag, size = 0x4, scoped, tag = 'scoped memory for tpu_custom_call.1']
    #allocation11 [shape = 'u8[65536]{0}', space=vmem, size = 0x10000, scoped, tag = 'output window, operand 0']
    %10 = vsyncpa [#allocation4], 0
    %s11 = scalar_lea.sflag [#allocation4], 1
    %12 = vsyncpa %s11, 0
    %13 = vsyncpa [#allocation7], 0
    %s14 = scalar_lea.sflag [#allocation7], 1
    %15 = vsyncpa %s14, 0
    %16 = vsyncpa [#allocation10], 0
    %17 = vsyncpa [#allocation5], 0
    %s18 = scalar_lea.sflag [#allocation5], 1
    %19 = vsyncpa %s18, 0
    loop: start=0, step=1, limit=4
    $region2: #{tpu_custom_call.1} parent=1 // loop_pre_header
      _
    $region3: #{tpu_custom_call.1} parent=1 // loop_header
      %s21 = sphi 0, %s25
      %p22 = scmp.ge.s32.totalorder %s21, 4
      %s28 = sphi 0, %s40
      %s29 = sphi 0, %s36
      %s30 = sphi 0, %s28
      %s31 = sphi 0, %s29
      %s32 = sphi 0, %s30
      %s33 = sphi 0, %s31
      %s45 = sphi 0, %s47
      %s48 = sphi 0, %s45
      %s49 = sphi 0, %s48
      %s65 = sphi 0, %s49
      %s81 = sphi 0, %s83
      %s84 = sphi 0, %s81
      %s85 = sphi 0, %s84
      %s101 = sphi 0, %s85
      %s117 = sphi 0, %s119
      %s120 = sphi 0, %s117
      %s121 = sphi 0, %s120
      %s137 = sphi 0, %s121
      %s141 = sphi 0, %s141
      %s143 = sphi 0, %s141
      %s144 = sphi 0, %s143
      %s158 = sphi 0, %s144
      %s162 = sphi 0, %s162
      %s164 = sphi 0, %s162
      %s165 = sphi 0, %s164
      %s179 = sphi 0, %s165
      %s187 = sphi 0, %s189
      %s190 = sphi 0, %s187
      %s191 = sphi 0, %s190
      %s207 = sphi 0, %s191
    $region4: #{tpu_custom_call.1} parent=1 // loop_header_branch
      %24 = sbr.rel (%p22) target = $region8
    $region5: #{tpu_custom_call.1} parent=1 // loop_body
      %s26 = ssub.s32 %s21, 1
      %s27 = ssub.s32 %s21, 2
      %s34 = sadd.s32 1, %s29
      %p35 = scmp.ge.s32.totalorder %s34, 1
      %s36 = scalar_select %p35, 0, %s34
      %s37 = sadd.s32 1, %s28
      %s38 = scalar_select %p35, %s37, %s28
      %p39 = scmp.ge.s32.totalorder %s38, 2
      %s40 = scalar_select %p39, 0, %s38
      %s41 = ssub.s32 %s28, %s40
      %s42 = ssub.s32 %s29, %s36
      %s43 = sor.u32 %s41, %s42
      %p44 = scmp.eq.s32.totalorder %s43, 0
      %s46 = sadd.s32 %s45, 1
      %s47 = scalar_select %p44, %s45, %s46
      %p50 = pneg %p44
      %p51 = scmp.eq.s32.totalorder %s21, 1
      %p52 = por %p50, %p51
      %p53 = scmp.ne.s32.totalorder %s45, %s48
      %p54 = scmp.eq.s32.totalorder %s21, 0
      %p55 = por %p53, %p54
      %p56 = scmp.ne.s32.totalorder %s45, %s48
      %p57 = scmp.eq.s32.totalorder %s26, 1
      %p58 = por %p56, %p57
      %p59 = scmp.ne.s32.totalorder %s48, %s49
      %p60 = scmp.eq.s32.totalorder %s26, 0
      %p61 = por %p59, %p60
      %p62 = scmp.ne.s32.totalorder %s48, %s49
      %p63 = scmp.eq.s32.totalorder %s27, 1
      %p64 = por %p62, %p63
      %p66 = scmp.ne.s32.totalorder %s49, %s65
      %p67 = scmp.eq.s32.totalorder %s27, 0
      %p68 = por %p66, %p67
      %s69 = smul.u32 %s29, 8
      %s70 = ssub.s32 %s69, 1
      %p71 = scmp.gt.s32.totalorder %s70, 0
      %s72 = scalar_select %p71, %s70, 0
      %s73 = smul.u32 %s36, 8
      %s74 = ssub.s32 %s73, 1
      %p75 = scmp.gt.s32.totalorder %s74, 0
      %s76 = scalar_select %p75, %s74, 0
      %s77 = ssub.s32 %s28, %s40
      %s78 = ssub.s32 %s72, %s76
      %s79 = sor.u32 %s77, %s78
      %p80 = scmp.eq.s32.totalorder %s79, 0
      %s82 = sadd.s32 %s81, 1
      %s83 = scalar_select %p80, %s81, %s82
      %p86 = pneg %p80
      %p87 = scmp.eq.s32.totalorder %s21, 1
      %p88 = por %p86, %p87
      %p89 = scmp.ne.s32.totalorder %s81, %s84
      %p90 = scmp.eq.s32.totalorder %s21, 0
      %p91 = por %p89, %p90
      %p92 = scmp.ne.s32.totalorder %s81, %s84
      %p93 = scmp.eq.s32.totalorder %s26, 1
      %p94 = por %p92, %p93
      %p95 = scmp.ne.s32.totalorder %s84, %s85
      %p96 = scmp.eq.s32.totalorder %s26, 0
      %p97 = por %p95, %p96
      %p98 = scmp.ne.s32.totalorder %s84, %s85
      %p99 = scmp.eq.s32.totalorder %s27, 1
      %p100 = por %p98, %p99
      %p102 = scmp.ne.s32.totalorder %s85, %s101
      %p103 = scmp.eq.s32.totalorder %s27, 0
      %p104 = por %p102, %p103
      %s105 = smul.u32 %s29, 8
      %s106 = sadd.s32 %s105, 8
      %p107 = scmp.lt.s32.totalorder %s106, 7
      %s108 = scalar_select %p107, %s106, 7
      %s109 = smul.u32 %s36, 8
      %s110 = sadd.s32 %s109, 8
      %p111 = scmp.lt.s32.totalorder %s110, 7
      %s112 = scalar_select %p111, %s110, 7
      %s113 = ssub.s32 %s28, %s40
      %s114 = ssub.s32 %s108, %s112
      %s115 = sor.u32 %s113, %s114
      %p116 = scmp.eq.s32.totalorder %s115, 0
      %s118 = sadd.s32 %s117, 1
      %s119 = scalar_select %p116, %s117, %s118
      %p122 = pneg %p116
      %p123 = scmp.eq.s32.totalorder %s21, 1
      %p124 = por %p122, %p123
      %p125 = scmp.ne.s32.totalorder %s117, %s120
      %p126 = scmp.eq.s32.totalorder %s21, 0
      %p127 = por %p125, %p126
      %p128 = scmp.ne.s32.totalorder %s117, %s120
      %p129 = scmp.eq.s32.totalorder %s26, 1
      %p130 = por %p128, %p129
      %p131 = scmp.ne.s32.totalorder %s120, %s121
      %p132 = scmp.eq.s32.totalorder %s26, 0
      %p133 = por %p131, %p132
      %p134 = scmp.ne.s32.totalorder %s120, %s121
      %p135 = scmp.eq.s32.totalorder %s27, 1
      %p136 = por %p134, %p135
      %p138 = scmp.ne.s32.totalorder %s121, %s137
      %p139 = scmp.eq.s32.totalorder %s27, 0
      %p140 = por %p138, %p139
      %s142 = sadd.s32 %s141, 1
      %p145 = scmp.eq.s32.totalorder %s21, 1
      %p146 = scmp.ne.s32.totalorder %s141, %s143
      %p147 = scmp.eq.s32.totalorder %s21, 0
      %p148 = por %p146, %p147
      %p149 = scmp.ne.s32.totalorder %s141, %s143
      %p150 = scmp.eq.s32.totalorder %s26, 1
      %p151 = por %p149, %p150
      %p152 = scmp.ne.s32.totalorder %s143, %s144
      %p153 = scmp.eq.s32.totalorder %s26, 0
      %p154 = por %p152, %p153
      %p155 = scmp.ne.s32.totalorder %s143, %s144
      %p156 = scmp.eq.s32.totalorder %s27, 1
      %p157 = por %p155, %p156
      %p159 = scmp.ne.s32.totalorder %s144, %s158
      %p160 = scmp.eq.s32.totalorder %s27, 0
      %p161 = por %p159, %p160
      %s163 = sadd.s32 %s162, 1
      %p166 = scmp.eq.s32.totalorder %s21, 1
      %p167 = scmp.ne.s32.totalorder %s162, %s164
      %p168 = scmp.eq.s32.totalorder %s21, 0
      %p169 = por %p167, %p168
      %p170 = scmp.ne.s32.totalorder %s162, %s164
      %p171 = scmp.eq.s32.totalorder %s26, 1
      %p172 = por %p170, %p171
      %p173 = scmp.ne.s32.totalorder %s164, %s165
      %p174 = scmp.eq.s32.totalorder %s26, 0
      %p175 = por %p173, %p174
      %p176 = scmp.ne.s32.totalorder %s164, %s165
      %p177 = scmp.eq.s32.totalorder %s27, 1
      %p178 = por %p176, %p177
      %p180 = scmp.ne.s32.totalorder %s165, %s179
      %p181 = scmp.eq.s32.totalorder %s27, 0
      %p182 = por %p180, %p181
      %s183 = ssub.s32 %s28, %s40
      %s184 = ssub.s32 %s29, %s36
      %s185 = sor.u32 %s183, %s184
      %p186 = scmp.eq.s32.totalorder %s185, 0
      %s188 = sadd.s32 %s187, 1
      %s189 = scalar_select %p186, %s187, %s188
      %p192 = pneg %p186
      %p193 = scmp.eq.s32.totalorder %s21, 1
      %p194 = por %p192, %p193
      %p195 = scmp.ne.s32.totalorder %s187, %s190
      %p196 = scmp.eq.s32.totalorder %s21, 0
      %p197 = por %p195, %p196
      %p198 = scmp.ne.s32.totalorder %s187, %s190
      %p199 = scmp.eq.s32.totalorder %s26, 1
      %p200 = por %p198, %p199
      %p201 = scmp.ne.s32.totalorder %s190, %s191
      %p202 = scmp.eq.s32.totalorder %s26, 0
      %p203 = por %p201, %p202
      %p204 = scmp.ne.s32.totalorder %s190, %s191
      %p205 = scmp.eq.s32.totalorder %s27, 1
      %p206 = por %p204, %p205
      %p208 = scmp.ne.s32.totalorder %s191, %s207
      %p209 = scmp.eq.s32.totalorder %s27, 0
      %p210 = por %p208, %p209
      %p211 = scmp.le.s32.totalorder 1, %s21
      %p212 = scmp.lt.s32.totalorder %s21, 3
      %p213 = pnand %p211, %p212
      %p214 = pneg %p213
      // Predicated region
      $region9: #{tpu_custom_call.1} parent=5 // pred_check
        _
      $region10: #{tpu_custom_call.1} parent=5 // pred_check_branch
        %216 = sbr.rel (%p213) target = $region12
      $region11: #{tpu_custom_call.1} parent=5 // pred_region
        %s217 = ssub.s32 %s21, 1
        // Predicated region
        $region13: #{tpu_custom_call.1} parent=11 // pred_check
          %p218 = pneg %p154
        $region14: #{tpu_custom_call.1} parent=11 // pred_check_branch
          %220 = sbr.rel (%p218) target = $region16
        $region15: #{tpu_custom_call.1} parent=11 // pred_region
          %s222 = ssub.s32 432, 432
          %223 = vsyncadd [#allocation10], %s222
          %s224 = sshll.u32 [#allocation9], 4
          %s225 = int_to_ptr.vmem [resolvable:$true] %s224
          %230 = dma.hbm_to_vmem [thread:$0]  %s3, 432, %s225, [#allocation10], 16, 16, 1
        $region16: #{tpu_custom_call.1} parent=11 // pred_fallthru
          _
        // Predicated region
        $region17: #{tpu_custom_call.1} parent=11 // pred_check
          %p231 = pneg %p175
        $region18: #{tpu_custom_call.1} parent=11 // pred_check_branch
          %233 = sbr.rel (%p231) target = $region20
        $region19: #{tpu_custom_call.1} parent=11 // pred_region
          _
        $region20: #{tpu_custom_call.1} parent=11 // pred_fallthru
          _
      $region12: #{tpu_custom_call.1} parent=5 // pred_fallthru
        _
      %p234 = scmp.lt.s32.totalorder %s21, 2
      // Predicated region
      $region21: #{tpu_custom_call.1} parent=5 // pred_check
        %p235 = pneg %p234
      $region22: #{tpu_custom_call.1} parent=5 // pred_check_branch
        %237 = sbr.rel (%p235) target = $region24
      $region23: #{tpu_custom_call.1} parent=5 // pred_region
        // Predicated region
        $region25: #{tpu_custom_call.1} parent=23 // pred_check
          %p238 = pneg %p55
        $region26: #{tpu_custom_call.1} parent=23 // pred_check_branch
          %240 = sbr.rel (%p238) target = $region28
        $region27: #{tpu_custom_call.1} parent=23 // pred_region
          %s241 = sand.u32 %s45, 1
          %s242 = scalar_lea.sflag [#allocation4], %s241
          %s243 = sand.u32 %s45, 1
          %s244 = smul.addr %s243, 64
          %s245 = scalar_lea.vmem [#allocation3], %s244
          %s246 = smul.u32 8, %s29
          %s248 = ssub.s32 1024, 1024
          %249 = vsyncadd %s242, %s248
          %s250 = smul.addr %s28, 8
          %s251 = sadd.s32 %s246, %s250
          %s252 = smul.addr %s251, 128
          %s253 = scalar_lea.hbm %s0, %s252
          %s254 = sshll.u32 %s245, 4
          %s255 = int_to_ptr.vmem [resolvable:$true] %s254
          %260 = dma.hbm_to_vmem [thread:$0]  %s253, 1024, %s255, %s242, 128, 128, 8
        $region28: #{tpu_custom_call.1} parent=23 // pred_fallthru
          _
        // Predicated region
        $region29: #{tpu_custom_call.1} parent=23 // pred_check
          %p261 = pneg %p91
        $region30: #{tpu_custom_call.1} parent=23 // pred_check_branch
          %263 = sbr.rel (%p261) target = $region32
        $region31: #{tpu_custom_call.1} parent=23 // pred_region
          %s264 = sand.u32 %s21, 1
          %s265 = scalar_lea.sflag [#allocation7], %s264
          %s266 = sand.u32 %s81, 1
          %s267 = smul.addr %s266, 8
          %s268 = scalar_lea.vmem [#allocation6], %s267
          %s269 = smul.u32 %s29, 8
          %s270 = ssub.s32 %s269, 1
          %p271 = scmp.gt.s32.totalorder %s270, 0
          %s272 = scalar_select %p271, %s270, 0
          %s274 = ssub.s32 128, 128
          %275 = vsyncadd %s265, %s274
          %s276 = smul.addr %s28, 8
          %s277 = sadd.s32 %s272, %s276
          %s278 = smul.addr %s277, 128
          %s279 = scalar_lea.hbm %s1, %s278
          %s281 = sshll.u32 %s268, 4
          %s282 = int_to_ptr.vmem [resolvable:$true] %s281
          %284 = dma.hbm_to_vmem [thread:$0]  %s279, 128, %s282, %s265
        $region32: #{tpu_custom_call.1} parent=23 // pred_fallthru
          _
        // Predicated region
        $region33: #{tpu_custom_call.1} parent=23 // pred_check
          %p285 = pneg %p127
        $region34: #{tpu_custom_call.1} parent=23 // pred_check_branch
          %287 = sbr.rel (%p285) target = $region36
        $region35: #{tpu_custom_call.1} parent=23 // pred_region
          %s288 = sand.u32 %s21, 1
          %s289 = scalar_lea.sflag [#allocation7], %s288
          %s290 = sand.u32 %s117, 1
          %s291 = smul.addr %s290, 8
          %s292 = scalar_lea.vmem [#allocation8], %s291
          %s293 = smul.u32 %s29, 8
          %s294 = sadd.s32 %s293, 8
          %p295 = scmp.lt.s32.totalorder %s294, 7
          %s296 = scalar_select %p295, %s294, 7
          %s298 = ssub.s32 128, 128
          %299 = vsyncadd %s289, %s298
          %s300 = smul.addr %s28, 8
          %s301 = sadd.s32 %s296, %s300
          %s302 = smul.addr %s301, 128
          %s303 = scalar_lea.hbm %s2, %s302
          %s305 = sshll.u32 %s292, 4
          %s306 = int_to_ptr.vmem [resolvable:$true] %s305
          %308 = dma.hbm_to_vmem [thread:$0]  %s303, 128, %s306, %s289
        $region36: #{tpu_custom_call.1} parent=23 // pred_fallthru
          _
      $region24: #{tpu_custom_call.1} parent=5 // pred_fallthru
        _
      %p309 = scmp.le.s32.totalorder 1, %s21
      %p310 = scmp.lt.s32.totalorder %s21, 3
      %p311 = pnand %p309, %p310
      %p312 = pneg %p311
      // Predicated region
      $region37: #{tpu_custom_call.1} parent=5 // pred_check
        _
      $region38: #{tpu_custom_call.1} parent=5 // pred_check_branch
        %314 = sbr.rel (%p311) target = $region40
      $region39: #{tpu_custom_call.1} parent=5 // pred_region
        %s315 = ssub.s32 %s21, 1
        %s316 = sand.u32 %s48, 1
        %s317 = scalar_lea.sflag [#allocation4], %s316
        %s318 = sand.u32 %s48, 1
        %s319 = smul.addr %s318, 64
        %s320 = scalar_lea.vmem [#allocation3], %s319
        // Predicated region
        $region41: #{tpu_custom_call.1} parent=39 // pred_check
          %p321 = pneg %p61
        $region42: #{tpu_custom_call.1} parent=39 // pred_check_branch
          %323 = sbr.rel (%p321) target = $region44
        $region43: #{tpu_custom_call.1} parent=39 // pred_region
          %324 = dma.done %s317, 1024
        $region44: #{tpu_custom_call.1} parent=39 // pred_fallthru
          _
        %s325 = sand.u32 %s26, 1
        %s326 = scalar_lea.sflag [#allocation7], %s325
        %s327 = sand.u32 %s84, 1
        %s328 = smul.addr %s327, 8
        %s329 = scalar_lea.vmem [#allocation6], %s328
        // Predicated region
        $region45: #{tpu_custom_call.1} parent=39 // pred_check
          %p330 = pneg %p97
        $region46: #{tpu_custom_call.1} parent=39 // pred_check_branch
          %332 = sbr.rel (%p330) target = $region48
        $region47: #{tpu_custom_call.1} parent=39 // pred_region
          %333 = dma.done %s326, 128
        $region48: #{tpu_custom_call.1} parent=39 // pred_fallthru
          _
        %s334 = sand.u32 %s26, 1
        %s335 = scalar_lea.sflag [#allocation7], %s334
        %s336 = sand.u32 %s120, 1
        %s337 = smul.addr %s336, 8
        %s338 = scalar_lea.vmem [#allocation8], %s337
        // Predicated region
        $region49: #{tpu_custom_call.1} parent=39 // pred_check
          %p339 = pneg %p133
        $region50: #{tpu_custom_call.1} parent=39 // pred_check_branch
          %341 = sbr.rel (%p339) target = $region52
        $region51: #{tpu_custom_call.1} parent=39 // pred_region
          %342 = dma.done %s335, 128
        $region52: #{tpu_custom_call.1} parent=39 // pred_fallthru
          _
        // Predicated region
        $region53: #{tpu_custom_call.1} parent=39 // pred_check
          %p343 = pneg %p154
        $region54: #{tpu_custom_call.1} parent=39 // pred_check_branch
          %345 = sbr.rel (%p343) target = $region56
        $region55: #{tpu_custom_call.1} parent=39 // pred_region
          %346 = dma.done [#allocation10], 432
        $region56: #{tpu_custom_call.1} parent=39 // pred_fallthru
          _
        %s347 = sand.u32 %s48, 1
        %s348 = scalar_lea.sflag [#allocation4], %s347
        %s349 = sand.u32 %s48, 1
        %s350 = smul.addr %s349, 64
        %s351 = scalar_lea.vmem [#allocation3], %s350
        %p352 = pneg %p61
        %p353 = pneg %p58
        %s354 = sand.u32 %s26, 1
        %s355 = scalar_lea.sflag [#allocation7], %s354
        %s356 = sand.u32 %s84, 1
        %s357 = smul.addr %s356, 8
        %s358 = scalar_lea.vmem [#allocation6], %s357
        %p359 = pneg %p97
        %p360 = pneg %p94
        %s361 = sand.u32 %s26, 1
        %s362 = scalar_lea.sflag [#allocation7], %s361
        %s363 = sand.u32 %s120, 1
        %s364 = smul.addr %s363, 8
        %s365 = scalar_lea.vmem [#allocation8], %s364
        %p366 = pneg %p133
        %p367 = pneg %p130
        %p368 = pneg %p154
        %p369 = pneg %p151
        %p370 = pneg %p175
        %p371 = pneg %p172
        %p372 = pneg %p203
        %p373 = pneg %p200
        %s374 = sand.u32 %s190, 1
        %s375 = scalar_lea.sflag [#allocation5], %s374
        %s376 = sand.u32 %s190, 1
        %s377 = smul.addr %s376, 64
        %s378 = scalar_lea.vmem [#allocation11], %s377
        %s379 = smul.u32 8, %s31
        %s380 = smul.u32 %s31, 8
        %s381 = ssub.s32 %s380, 1
        %p382 = scmp.gt.s32.totalorder %s381, 0
        %s383 = scalar_select %p382, %s381, 0
        %s384 = smul.u32 %s31, 8
        %s385 = sadd.s32 %s384, 8
        %p386 = scmp.lt.s32.totalorder %s385, 7
        %s387 = scalar_select %p386, %s385, 7
        %s388 = smul.u32 8, %s31
        %v389 = vld [vmem:[%s320] sm:$0xff]
        %v390 = vld [vmem:[%s320 + $0x8] sm:$0xff]
        %v391 = vld [vmem:[%s320 + $0x10] sm:$0xff]
        %v392 = vld [vmem:[%s320 + $0x18] sm:$0xff]
        %v393 = vld [vmem:[%s320 + $0x20] sm:$0xff]
        %v394 = vld [vmem:[%s320 + $0x28] sm:$0xff]
        %v395 = vld [vmem:[%s320 + $0x30] sm:$0xff]
        %v396 = vld [vmem:[%s320 + $0x38] sm:$0xff]
        %v397 = vld [vmem:[%s329] sm:$0xff]
        %v398 = vld [vmem:[%s338] sm:$0xff]
        %p399 = scmp.eq.s32.totalorder %s31, 0
        %s400 = scalar_select %p399, 1, 0
        %v401 = vstv %s400
        %vm402 = vcmp.eq.s32.totalorder %v401, 1
        %v403 = vsel %vm402, 0.0, %v397
        %v404 = vsel %vm402, 0.0, %v398
        %v405 = vld [vmem:[%s4] sm:$0x1]
        %v407 = vlaneseq
        %v408 = vshrl.u32 %v407, 7
        %v409 = vsub.s32 0, %v408
        %v410 = vrot.slane %v405, %v409
        %vm412 = vcmask 261120
        %413 = vst.msk [vmem:[#allocation2] sm:$0xff] %vm412, %v410
        %414 = vst.msk [vmem:[#allocation2 + $0x8] sm:$0xff] %vm412, %v410
        %415 = vst.msk [vmem:[#allocation2 + $0x10] sm:$0xff] %vm412, %v410
        %416 = vst.msk [vmem:[#allocation2 + $0x18] sm:$0xff] %vm412, %v410
        %417 = vst.msk [vmem:[#allocation2 + $0x20] sm:$0xff] %vm412, %v410
        %418 = vst.msk [vmem:[#allocation2 + $0x28] sm:$0xff] %vm412, %v410
        %419 = vst.msk [vmem:[#allocation2 + $0x30] sm:$0xff] %vm412, %v410
        %420 = vst.msk [vmem:[#allocation2 + $0x38] sm:$0xff] %vm412, %v410
        %v421 = vld [vmem:[#allocation9] sm:$0x1]
        %s422 = scalar_lea.vmem [#allocation2], 8
        %v423 = vld [vmem:[%s422 + $0x1] sm:$0x7f]
        %v424 = vld [vmem:[%s422 + $0x9] sm:$0x7f]
        %v425 = vld [vmem:[%s422 + $0x11] sm:$0x7f]
        %v426 = vld [vmem:[%s422 + $0x19] sm:$0x7f]
        %v427 = vld [vmem:[%s422 + $0x21] sm:$0x7f]
        %v428 = vld [vmem:[%s422 + $0x29] sm:$0x7f]
        %v429 = vld [vmem:[%s422 + $0x31] sm:$0x7f]
        %v431 = vlaneseq
        %v432 = vshrl.u32 %v431, 7
        %v433 = vsub.s32 0, %v432
        %v434 = vrot.slane %v421, %v433
        %435 = vrot.lane.b32.xlu0 %v434, 127
        %v436 = vpop.permute.xlu0 %435
        %v438 = vmul.f32 %v389, %v436
        %v439 = vmul.f32 %v390, %v436
        %v440 = vmul.f32 %v391, %v436
        %v441 = vmul.f32 %v392, %v436
        %v442 = vmul.f32 %v393, %v436
        %v443 = vmul.f32 %v394, %v436
        %v444 = vmul.f32 %v395, %v436
        %452 = vrot.lane.b32.xlu0 %v438, 1
        %v453 = vpop.permute.xlu0 %452
        %454 = vrot.lane.b32.xlu0 %v439, 1
        %v455 = vpop.permute.xlu0 %454
        %456 = vrot.lane.b32.xlu0 %v440, 1
        %v457 = vpop.permute.xlu0 %456
        %458 = vrot.lane.b32.xlu0 %v441, 1
        %v459 = vpop.permute.xlu0 %458
        %460 = vrot.lane.b32.xlu0 %v442, 1
        %v461 = vpop.permute.xlu0 %460
        %462 = vrot.lane.b32.xlu0 %v443, 1
        %v463 = vpop.permute.xlu0 %462
        %464 = vrot.lane.b32.xlu0 %v444, 1
        %v465 = vpop.permute.xlu0 %464
        %v473 = vadd.f32 %v423, %v453
        %v474 = vadd.f32 %v424, %v455
        %v475 = vadd.f32 %v425, %v457
        %v476 = vadd.f32 %v426, %v459
        %v477 = vadd.f32 %v427, %v461
        %v478 = vadd.f32 %v428, %v463
        %v479 = vadd.f32 %v429, %v465
        %vm480 = vcmask 260104
        %481 = vst.msk [vmem:[%s422 + $0x1] sm:$0x7f] %vm480, %v473
        %482 = vst.msk [vmem:[%s422 + $0x9] sm:$0x7f] %vm480, %v474
        %483 = vst.msk [vmem:[%s422 + $0x11] sm:$0x7f] %vm480, %v475
        %484 = vst.msk [vmem:[%s422 + $0x19] sm:$0x7f] %vm480, %v476
        %485 = vst.msk [vmem:[%s422 + $0x21] sm:$0x7f] %vm480, %v477
        %486 = vst.msk [vmem:[%s422 + $0x29] sm:$0x7f] %vm480, %v478
        %487 = vst.msk [vmem:[%s422 + $0x31] sm:$0x7f] %vm480, %v479
        %v488 = vld [vmem:[#allocation2 + $0x1] sm:$0x7f]
        %v489 = vmul.f32 %v403, %v436
        %491 = vrot.lane.b32.xlu0 %v489, 1
        %v492 = vpop.permute.xlu0 %491
        %v494 = vadd.f32 %v488, %v492
        %495 = vst.msk [vmem:[#allocation2 + $0x1] sm:$0x7f] %vm480, %v494
        %s496 = scalar_lea.vmem [#allocation9], 1
        %v497 = vld [vmem:[%s496] sm:$0x1]
        %v498 = vld [vmem:[%s422] sm:$0xff]
        %v499 = vld [vmem:[%s422 + $0x8] sm:$0xff]
        %v500 = vld [vmem:[%s422 + $0x10] sm:$0xff]
        %v501 = vld [vmem:[%s422 + $0x18] sm:$0xff]
        %v502 = vld [vmem:[%s422 + $0x20] sm:$0xff]
        %v503 = vld [vmem:[%s422 + $0x28] sm:$0xff]
        %v504 = vld [vmem:[%s422 + $0x30] sm:$0xff]
        %v506 = vlaneseq
        %v507 = vshrl.u32 %v506, 7
        %v508 = vsub.s32 0, %v507
        %v509 = vrot.slane %v497, %v508
        %510 = vrot.lane.b32.xlu0 %v509, 127
        %v511 = vpop.permute.xlu0 %510
        %v513 = vmul.f32 %v389, %v511
        %v514 = vmul.f32 %v390, %v511
        %v515 = vmul.f32 %v391, %v511
        %v516 = vmul.f32 %v392, %v511
        %v517 = vmul.f32 %v393, %v511
        %v518 = vmul.f32 %v394, %v511
        %v519 = vmul.f32 %v395, %v511
        %527 = vrot.lane.b32.xlu0 %v513, 1
        %v528 = vpop.permute.xlu0 %527
        %529 = vrot.lane.b32.xlu0 %v514, 1
        %v530 = vpop.permute.xlu0 %529
        %531 = vrot.lane.b32.xlu0 %v515, 1
        %v532 = vpop.permute.xlu0 %531
        %533 = vrot.lane.b32.xlu0 %v516, 1
        %v534 = vpop.permute.xlu0 %533
        %535 = vrot.lane.b32.xlu0 %v517, 1
        %v536 = vpop.permute.xlu0 %535
        %537 = vrot.lane.b32.xlu0 %v518, 1
        %v538 = vpop.permute.xlu0 %537
        %539 = vrot.lane.b32.xlu0 %v519, 1
        %v540 = vpop.permute.xlu0 %539
        %v548 = vadd.f32 %v498, %v528
        %v549 = vadd.f32 %v499, %v530
        %v550 = vadd.f32 %v500, %v532
        %v551 = vadd.f32 %v501, %v534
        %v552 = vadd.f32 %v502, %v536
        %v553 = vadd.f32 %v503, %v538
        %v554 = vadd.f32 %v504, %v540
        %vm555 = vcmask 261128
        %556 = vst.msk [vmem:[%s422] sm:$0xff] %vm555, %v548
        %557 = vst.msk [vmem:[%s422 + $0x8] sm:$0xff] %vm555, %v549
        %558 = vst.msk [vmem:[%s422 + $0x10] sm:$0xff] %vm555, %v550
        %559 = vst.msk [vmem:[%s422 + $0x18] sm:$0xff] %vm555, %v551
        %560 = vst.msk [vmem:[%s422 + $0x20] sm:$0xff] %vm555, %v552
        %561 = vst.msk [vmem:[%s422 + $0x28] sm:$0xff] %vm555, %v553
        %562 = vst.msk [vmem:[%s422 + $0x30] sm:$0xff] %vm555, %v554
        %v563 = vld [vmem:[#allocation2] sm:$0xff]
        %v564 = vmul.f32 %v403, %v511
        %566 = vrot.lane.b32.xlu0 %v564, 1
        %v567 = vpop.permute.xlu0 %566
        %v569 = vadd.f32 %v563, %v567
        %570 = vst.msk [vmem:[#allocation2] sm:$0xff] %vm555, %v569
        %s571 = scalar_lea.vmem [#allocation9], 2
        %v572 = vld [vmem:[%s571] sm:$0x1]
        %v573 = vld [vmem:[%s422] sm:$0x7f]
        %v574 = vld [vmem:[%s422 + $0x8] sm:$0x7f]
        %v575 = vld [vmem:[%s422 + $0x10] sm:$0x7f]
        %v576 = vld [vmem:[%s422 + $0x18] sm:$0x7f]
        %v577 = vld [vmem:[%s422 + $0x20] sm:$0x7f]
        %v578 = vld [vmem:[%s422 + $0x28] sm:$0x7f]
        %v579 = vld [vmem:[%s422 + $0x30] sm:$0x7f]
        %v581 = vlaneseq
        %v582 = vshrl.u32 %v581, 7
        %v583 = vsub.s32 0, %v582
        %v584 = vrot.slane %v572, %v583
        %585 = vrot.lane.b32.xlu0 %v584, 127
        %v586 = vpop.permute.xlu0 %585
        %v588 = vmul.f32 %v389, %v586
        %v589 = vmul.f32 %v390, %v586
        %v590 = vmul.f32 %v391, %v586
        %v591 = vmul.f32 %v392, %v586
        %v592 = vmul.f32 %v393, %v586
        %v593 = vmul.f32 %v394, %v586
        %v594 = vmul.f32 %v395, %v586
        %v602 = vrot.slane %v588, 1
        %v603 = vrot.slane %v589, 1
        %v604 = vrot.slane %v590, 1
        %v605 = vrot.slane %v591, 1
        %v606 = vrot.slane %v592, 1
        %v607 = vrot.slane %v593, 1
        %v608 = vrot.slane %v594, 1
        %609 = vrot.lane.b32.xlu0 %v602, 1
        %v610 = vpop.permute.xlu0 %609
        %611 = vrot.lane.b32.xlu0 %v603, 1
        %v612 = vpop.permute.xlu0 %611
        %613 = vrot.lane.b32.xlu0 %v604, 1
        %v614 = vpop.permute.xlu0 %613
        %615 = vrot.lane.b32.xlu0 %v605, 1
        %v616 = vpop.permute.xlu0 %615
        %617 = vrot.lane.b32.xlu0 %v606, 1
        %v618 = vpop.permute.xlu0 %617
        %619 = vrot.lane.b32.xlu0 %v607, 1
        %v620 = vpop.permute.xlu0 %619
        %621 = vrot.lane.b32.xlu0 %v608, 1
        %v622 = vpop.permute.xlu0 %621
        %v630 = vadd.f32 %v573, %v610
        %v631 = vadd.f32 %v574, %v612
        %v632 = vadd.f32 %v575, %v614
        %v633 = vadd.f32 %v576, %v616
        %v634 = vadd.f32 %v577, %v618
        %v635 = vadd.f32 %v578, %v620
        %v636 = vadd.f32 %v579, %v622
        %637 = vst.msk [vmem:[%s422] sm:$0x7f] %vm480, %v630
        %638 = vst.msk [vmem:[%s422 + $0x8] sm:$0x7f] %vm480, %v631
        %639 = vst.msk [vmem:[%s422 + $0x10] sm:$0x7f] %vm480, %v632
        %640 = vst.msk [vmem:[%s422 + $0x18] sm:$0x7f] %vm480, %v633
        %641 = vst.msk [vmem:[%s422 + $0x20] sm:$0x7f] %vm480, %v634
        %642 = vst.msk [vmem:[%s422 + $0x28] sm:$0x7f] %vm480, %v635
        %643 = vst.msk [vmem:[%s422 + $0x30] sm:$0x7f] %vm480, %v636
        %v644 = vld [vmem:[#allocation2] sm:$0x7f]
        %v645 = vmul.f32 %v403, %v586
        %v647 = vrot.slane %v645, 1
        %648 = vrot.lane.b32.xlu0 %v647, 1
        %v649 = vpop.permute.xlu0 %648
        %v651 = vadd.f32 %v644, %v649
        %652 = vst.msk [vmem:[#allocation2] sm:$0x7f] %vm480, %v651
        %s653 = scalar_lea.vmem [#allocation9], 3
        %v654 = vld [vmem:[%s653] sm:$0x1]
        %v655 = vld [vmem:[#allocation2 + $0x1] sm:$0x7f]
        %v656 = vld [vmem:[#allocation2 + $0x9] sm:$0x7f]
        %v657 = vld [vmem:[#allocation2 + $0x11] sm:$0x7f]
        %v658 = vld [vmem:[#allocation2 + $0x19] sm:$0x7f]
        %v659 = vld [vmem:[#allocation2 + $0x21] sm:$0x7f]
        %v660 = vld [vmem:[#allocation2 + $0x29] sm:$0x7f]
        %v661 = vld [vmem:[#allocation2 + $0x31] sm:$0x7f]
        %v662 = vld [vmem:[#allocation2 + $0x39] sm:$0x7f]
        %v664 = vlaneseq
        %v665 = vshrl.u32 %v664, 7
        %v666 = vsub.s32 0, %v665
        %v667 = vrot.slane %v654, %v666
        %668 = vrot.lane.b32.xlu0 %v667, 127
        %v669 = vpop.permute.xlu0 %668
        %v671 = vmul.f32 %v389, %v669
        %v672 = vmul.f32 %v390, %v669
        %v673 = vmul.f32 %v391, %v669
        %v674 = vmul.f32 %v392, %v669
        %v675 = vmul.f32 %v393, %v669
        %v676 = vmul.f32 %v394, %v669
        %v677 = vmul.f32 %v395, %v669
        %v678 = vmul.f32 %v396, %v669
        %687 = vrot.lane.b32.xlu0 %v671, 1
        %v688 = vpop.permute.xlu0 %687
        %689 = vrot.lane.b32.xlu0 %v672, 1
        %v690 = vpop.permute.xlu0 %689
        %691 = vrot.lane.b32.xlu0 %v673, 1
        %v692 = vpop.permute.xlu0 %691
        %693 = vrot.lane.b32.xlu0 %v674, 1
        %v694 = vpop.permute.xlu0 %693
        %695 = vrot.lane.b32.xlu0 %v675, 1
        %v696 = vpop.permute.xlu0 %695
        %697 = vrot.lane.b32.xlu0 %v676, 1
        %v698 = vpop.permute.xlu0 %697
        %699 = vrot.lane.b32.xlu0 %v677, 1
        %v700 = vpop.permute.xlu0 %699
        %701 = vrot.lane.b32.xlu0 %v678, 1
        %v702 = vpop.permute.xlu0 %701
        %v711 = vadd.f32 %v655, %v688
        %v712 = vadd.f32 %v656, %v690
        %v713 = vadd.f32 %v657, %v692
        %v714 = vadd.f32 %v658, %v694
        %v715 = vadd.f32 %v659, %v696
        %v716 = vadd.f32 %v660, %v698
        %v717 = vadd.f32 %v661, %v700
        %v718 = vadd.f32 %v662, %v702
        %719 = vst.msk [vmem:[#allocation2 + $0x1] sm:$0x7f] %vm480, %v711
        %720 = vst.msk [vmem:[#allocation2 + $0x9] sm:$0x7f] %vm480, %v712
        %721 = vst.msk [vmem:[#allocation2 + $0x11] sm:$0x7f] %vm480, %v713
        %722 = vst.msk [vmem:[#allocation2 + $0x19] sm:$0x7f] %vm480, %v714
        %723 = vst.msk [vmem:[#allocation2 + $0x21] sm:$0x7f] %vm480, %v715
        %724 = vst.msk [vmem:[#allocation2 + $0x29] sm:$0x7f] %vm480, %v716
        %725 = vst.msk [vmem:[#allocation2 + $0x31] sm:$0x7f] %vm480, %v717
        %726 = vst.msk [vmem:[#allocation2 + $0x39] sm:$0x7f] %vm480, %v718
        %s727 = scalar_lea.vmem [#allocation9], 4
        %v728 = vld [vmem:[%s727] sm:$0x1]
        %v729 = vld [vmem:[#allocation2] sm:$0xff]
        %v730 = vld [vmem:[#allocation2 + $0x8] sm:$0xff]
        %v731 = vld [vmem:[#allocation2 + $0x10] sm:$0xff]
        %v732 = vld [vmem:[#allocation2 + $0x18] sm:$0xff]
        %v733 = vld [vmem:[#allocation2 + $0x20] sm:$0xff]
        %v734 = vld [vmem:[#allocation2 + $0x28] sm:$0xff]
        %v735 = vld [vmem:[#allocation2 + $0x30] sm:$0xff]
        %v736 = vld [vmem:[#allocation2 + $0x38] sm:$0xff]
        %v738 = vlaneseq
        %v739 = vshrl.u32 %v738, 7
        %v740 = vsub.s32 0, %v739
        %v741 = vrot.slane %v728, %v740
        %742 = vrot.lane.b32.xlu0 %v741, 127
        %v743 = vpop.permute.xlu0 %742
        %v745 = vmul.f32 %v389, %v743
        %v746 = vmul.f32 %v390, %v743
        %v747 = vmul.f32 %v391, %v743
        %v748 = vmul.f32 %v392, %v743
        %v749 = vmul.f32 %v393, %v743
        %v750 = vmul.f32 %v394, %v743
        %v751 = vmul.f32 %v395, %v743
        %v752 = vmul.f32 %v396, %v743
        %761 = vrot.lane.b32.xlu0 %v745, 1
        %v762 = vpop.permute.xlu0 %761
        %763 = vrot.lane.b32.xlu0 %v746, 1
        %v764 = vpop.permute.xlu0 %763
        %765 = vrot.lane.b32.xlu0 %v747, 1
        %v766 = vpop.permute.xlu0 %765
        %767 = vrot.lane.b32.xlu0 %v748, 1
        %v768 = vpop.permute.xlu0 %767
        %769 = vrot.lane.b32.xlu0 %v749, 1
        %v770 = vpop.permute.xlu0 %769
        %771 = vrot.lane.b32.xlu0 %v750, 1
        %v772 = vpop.permute.xlu0 %771
        %773 = vrot.lane.b32.xlu0 %v751, 1
        %v774 = vpop.permute.xlu0 %773
        %775 = vrot.lane.b32.xlu0 %v752, 1
        %v776 = vpop.permute.xlu0 %775
        %v785 = vadd.f32 %v729, %v762
        %v786 = vadd.f32 %v730, %v764
        %v787 = vadd.f32 %v731, %v766
        %v788 = vadd.f32 %v732, %v768
        %v789 = vadd.f32 %v733, %v770
        %v790 = vadd.f32 %v734, %v772
        %v791 = vadd.f32 %v735, %v774
        %v792 = vadd.f32 %v736, %v776
        %793 = vst.msk [vmem:[#allocation2] sm:$0xff] %vm555, %v785
        %794 = vst.msk [vmem:[#allocation2 + $0x8] sm:$0xff] %vm555, %v786
        %795 = vst.msk [vmem:[#allocation2 + $0x10] sm:$0xff] %vm555, %v787
        %796 = vst.msk [vmem:[#allocation2 + $0x18] sm:$0xff] %vm555, %v788
        %797 = vst.msk [vmem:[#allocation2 + $0x20] sm:$0xff] %vm555, %v789
        %798 = vst.msk [vmem:[#allocation2 + $0x28] sm:$0xff] %vm555, %v790
        %799 = vst.msk [vmem:[#allocation2 + $0x30] sm:$0xff] %vm555, %v791
        %800 = vst.msk [vmem:[#allocation2 + $0x38] sm:$0xff] %vm555, %v792
        %s801 = scalar_lea.vmem [#allocation9], 5
        %v802 = vld [vmem:[%s801] sm:$0x1]
        %v803 = vld [vmem:[#allocation2] sm:$0x7f]
        %v804 = vld [vmem:[#allocation2 + $0x8] sm:$0x7f]
        %v805 = vld [vmem:[#allocation2 + $0x10] sm:$0x7f]
        %v806 = vld [vmem:[#allocation2 + $0x18] sm:$0x7f]
        %v807 = vld [vmem:[#allocation2 + $0x20] sm:$0x7f]
        %v808 = vld [vmem:[#allocation2 + $0x28] sm:$0x7f]
        %v809 = vld [vmem:[#allocation2 + $0x30] sm:$0x7f]
        %v810 = vld [vmem:[#allocation2 + $0x38] sm:$0x7f]
        %v812 = vlaneseq
        %v813 = vshrl.u32 %v812, 7
        %v814 = vsub.s32 0, %v813
        %v815 = vrot.slane %v802, %v814
        %816 = vrot.lane.b32.xlu0 %v815, 127
        %v817 = vpop.permute.xlu0 %816
        %v819 = vmul.f32 %v389, %v817
        %v820 = vmul.f32 %v390, %v817
        %v821 = vmul.f32 %v391, %v817
        %v822 = vmul.f32 %v392, %v817
        %v823 = vmul.f32 %v393, %v817
        %v824 = vmul.f32 %v394, %v817
        %v825 = vmul.f32 %v395, %v817
        %v826 = vmul.f32 %v396, %v817
        %v835 = vrot.slane %v819, 1
        %v836 = vrot.slane %v820, 1
        %v837 = vrot.slane %v821, 1
        %v838 = vrot.slane %v822, 1
        %v839 = vrot.slane %v823, 1
        %v840 = vrot.slane %v824, 1
        %v841 = vrot.slane %v825, 1
        %v842 = vrot.slane %v826, 1
        %843 = vrot.lane.b32.xlu0 %v835, 1
        %v844 = vpop.permute.xlu0 %843
        %845 = vrot.lane.b32.xlu0 %v836, 1
        %v846 = vpop.permute.xlu0 %845
        %847 = vrot.lane.b32.xlu0 %v837, 1
        %v848 = vpop.permute.xlu0 %847
        %849 = vrot.lane.b32.xlu0 %v838, 1
        %v850 = vpop.permute.xlu0 %849
        %851 = vrot.lane.b32.xlu0 %v839, 1
        %v852 = vpop.permute.xlu0 %851
        %853 = vrot.lane.b32.xlu0 %v840, 1
        %v854 = vpop.permute.xlu0 %853
        %855 = vrot.lane.b32.xlu0 %v841, 1
        %v856 = vpop.permute.xlu0 %855
        %857 = vrot.lane.b32.xlu0 %v842, 1
        %v858 = vpop.permute.xlu0 %857
        %v867 = vadd.f32 %v803, %v844
        %v868 = vadd.f32 %v804, %v846
        %v869 = vadd.f32 %v805, %v848
        %v870 = vadd.f32 %v806, %v850
        %v871 = vadd.f32 %v807, %v852
        %v872 = vadd.f32 %v808, %v854
        %v873 = vadd.f32 %v809, %v856
        %v874 = vadd.f32 %v810, %v858
        %875 = vst.msk [vmem:[#allocation2] sm:$0x7f] %vm480, %v867
        %876 = vst.msk [vmem:[#allocation2 + $0x8] sm:$0x7f] %vm480, %v868
        %877 = vst.msk [vmem:[#allocation2 + $0x10] sm:$0x7f] %vm480, %v869
        %878 = vst.msk [vmem:[#allocation2 + $0x18] sm:$0x7f] %vm480, %v870
        %879 = vst.msk [vmem:[#allocation2 + $0x20] sm:$0x7f] %vm480, %v871
        %880 = vst.msk [vmem:[#allocation2 + $0x28] sm:$0x7f] %vm480, %v872
        %881 = vst.msk [vmem:[#allocation2 + $0x30] sm:$0x7f] %vm480, %v873
        %882 = vst.msk [vmem:[#allocation2 + $0x38] sm:$0x7f] %vm480, %v874
        %s883 = scalar_lea.vmem [#allocation9], 6
        %v884 = vld [vmem:[%s883] sm:$0x1]
        %v885 = vld [vmem:[#allocation2 + $0x1] sm:$0x7f]
        %v886 = vld [vmem:[#allocation2 + $0x9] sm:$0x7f]
        %v887 = vld [vmem:[#allocation2 + $0x11] sm:$0x7f]
        %v888 = vld [vmem:[#allocation2 + $0x19] sm:$0x7f]
        %v889 = vld [vmem:[#allocation2 + $0x21] sm:$0x7f]
        %v890 = vld [vmem:[#allocation2 + $0x29] sm:$0x7f]
        %v891 = vld [vmem:[#allocation2 + $0x31] sm:$0x7f]
        %v893 = vlaneseq
        %v894 = vshrl.u32 %v893, 7
        %v895 = vsub.s32 0, %v894
        %v896 = vrot.slane %v884, %v895
        %897 = vrot.lane.b32.xlu0 %v896, 127
        %v898 = vpop.permute.xlu0 %897
        %v900 = vmul.f32 %v390, %v898
        %v901 = vmul.f32 %v391, %v898
        %v902 = vmul.f32 %v392, %v898
        %v903 = vmul.f32 %v393, %v898
        %v904 = vmul.f32 %v394, %v898
        %v905 = vmul.f32 %v395, %v898
        %v906 = vmul.f32 %v396, %v898
        %914 = vrot.lane.b32.xlu0 %v900, 1
        %v915 = vpop.permute.xlu0 %914
        %916 = vrot.lane.b32.xlu0 %v901, 1
        %v917 = vpop.permute.xlu0 %916
        %918 = vrot.lane.b32.xlu0 %v902, 1
        %v919 = vpop.permute.xlu0 %918
        %920 = vrot.lane.b32.xlu0 %v903, 1
        %v921 = vpop.permute.xlu0 %920
        %922 = vrot.lane.b32.xlu0 %v904, 1
        %v923 = vpop.permute.xlu0 %922
        %924 = vrot.lane.b32.xlu0 %v905, 1
        %v925 = vpop.permute.xlu0 %924
        %926 = vrot.lane.b32.xlu0 %v906, 1
        %v927 = vpop.permute.xlu0 %926
        %v935 = vadd.f32 %v885, %v915
        %v936 = vadd.f32 %v886, %v917
        %v937 = vadd.f32 %v887, %v919
        %v938 = vadd.f32 %v888, %v921
        %v939 = vadd.f32 %v889, %v923
        %v940 = vadd.f32 %v890, %v925
        %v941 = vadd.f32 %v891, %v927
        %942 = vst.msk [vmem:[#allocation2 + $0x1] sm:$0x7f] %vm480, %v935
        %943 = vst.msk [vmem:[#allocation2 + $0x9] sm:$0x7f] %vm480, %v936
        %944 = vst.msk [vmem:[#allocation2 + $0x11] sm:$0x7f] %vm480, %v937
        %945 = vst.msk [vmem:[#allocation2 + $0x19] sm:$0x7f] %vm480, %v938
        %946 = vst.msk [vmem:[#allocation2 + $0x21] sm:$0x7f] %vm480, %v939
        %947 = vst.msk [vmem:[#allocation2 + $0x29] sm:$0x7f] %vm480, %v940
        %948 = vst.msk [vmem:[#allocation2 + $0x31] sm:$0x7f] %vm480, %v941
        %s949 = scalar_lea.vmem [#allocation2], 56
        %v950 = vld [vmem:[%s949 + $0x1] sm:$0x7f]
        %v951 = vmul.f32 %v404, %v898
        %953 = vrot.lane.b32.xlu0 %v951, 1
        %v954 = vpop.permute.xlu0 %953
        %v956 = vadd.f32 %v950, %v954
        %957 = vst.msk [vmem:[%s949 + $0x1] sm:$0x7f] %vm480, %v956
        %s958 = scalar_lea.vmem [#allocation9], 7
        %v959 = vld [vmem:[%s958] sm:$0x1]
        %v960 = vld [vmem:[#allocation2] sm:$0xff]
        %v961 = vld [vmem:[#allocation2 + $0x8] sm:$0xff]
        %v962 = vld [vmem:[#allocation2 + $0x10] sm:$0xff]
        %v963 = vld [vmem:[#allocation2 + $0x18] sm:$0xff]
        %v964 = vld [vmem:[#allocation2 + $0x20] sm:$0xff]
        %v965 = vld [vmem:[#allocation2 + $0x28] sm:$0xff]
        %v966 = vld [vmem:[#allocation2 + $0x30] sm:$0xff]
        %v968 = vlaneseq
        %v969 = vshrl.u32 %v968, 7
        %v970 = vsub.s32 0, %v969
        %v971 = vrot.slane %v959, %v970
        %972 = vrot.lane.b32.xlu0 %v971, 127
        %v973 = vpop.permute.xlu0 %972
        %v975 = vmul.f32 %v390, %v973
        %v976 = vmul.f32 %v391, %v973
        %v977 = vmul.f32 %v392, %v973
        %v978 = vmul.f32 %v393, %v973
        %v979 = vmul.f32 %v394, %v973
        %v980 = vmul.f32 %v395, %v973
        %v981 = vmul.f32 %v396, %v973
        %989 = vrot.lane.b32.xlu0 %v975, 1
        %v990 = vpop.permute.xlu0 %989
        %991 = vrot.lane.b32.xlu0 %v976, 1
        %v992 = vpop.permute.xlu0 %991
        %993 = vrot.lane.b32.xlu0 %v977, 1
        %v994 = vpop.permute.xlu0 %993
        %995 = vrot.lane.b32.xlu0 %v978, 1
        %v996 = vpop.permute.xlu0 %995
        %997 = vrot.lane.b32.xlu0 %v979, 1
        %v998 = vpop.permute.xlu0 %997
        %999 = vrot.lane.b32.xlu0 %v980, 1
        %v1000 = vpop.permute.xlu0 %999
        %1001 = vrot.lane.b32.xlu0 %v981, 1
        %v1002 = vpop.permute.xlu0 %1001
        %v1010 = vadd.f32 %v960, %v990
        %v1011 = vadd.f32 %v961, %v992
        %v1012 = vadd.f32 %v962, %v994
        %v1013 = vadd.f32 %v963, %v996
        %v1014 = vadd.f32 %v964, %v998
        %v1015 = vadd.f32 %v965, %v1000
        %v1016 = vadd.f32 %v966, %v1002
        %1017 = vst.msk [vmem:[#allocation2] sm:$0xff] %vm555, %v1010
        %1018 = vst.msk [vmem:[#allocation2 + $0x8] sm:$0xff] %vm555, %v1011
        %1019 = vst.msk [vmem:[#allocation2 + $0x10] sm:$0xff] %vm555, %v1012
        %1020 = vst.msk [vmem:[#allocation2 + $0x18] sm:$0xff] %vm555, %v1013
        %1021 = vst.msk [vmem:[#allocation2 + $0x20] sm:$0xff] %vm555, %v1014
        %1022 = vst.msk [vmem:[#allocation2 + $0x28] sm:$0xff] %vm555, %v1015
        %1023 = vst.msk [vmem:[#allocation2 + $0x30] sm:$0xff] %vm555, %v1016
        %v1024 = vld [vmem:[%s949] sm:$0xff]
        %v1025 = vmul.f32 %v404, %v973
        %1027 = vrot.lane.b32.xlu0 %v1025, 1
        %v1028 = vpop.permute.xlu0 %1027
        %v1030 = vadd.f32 %v1024, %v1028
        %1031 = vst.msk [vmem:[%s949] sm:$0xff] %vm555, %v1030
        %s1032 = scalar_lea.vmem [#allocation9], 8
        %v1033 = vld [vmem:[%s1032] sm:$0x1]
        %v1034 = vld [vmem:[#allocation2] sm:$0x7f]
        %v1035 = vld [vmem:[#allocation2 + $0x8] sm:$0x7f]
        %v1036 = vld [vmem:[#allocation2 + $0x10] sm:$0x7f]
        %v1037 = vld [vmem:[#allocation2 + $0x18] sm:$0x7f]
        %v1038 = vld [vmem:[#allocation2 + $0x20] sm:$0x7f]
        %v1039 = vld [vmem:[#allocation2 + $0x28] sm:$0x7f]
        %v1040 = vld [vmem:[#allocation2 + $0x30] sm:$0x7f]
        %v1042 = vlaneseq
        %v1043 = vshrl.u32 %v1042, 7
        %v1044 = vsub.s32 0, %v1043
        %v1045 = vrot.slane %v1033, %v1044
        %1046 = vrot.lane.b32.xlu0 %v1045, 127
        %v1047 = vpop.permute.xlu0 %1046
        %v1049 = vmul.f32 %v390, %v1047
        %v1050 = vmul.f32 %v391, %v1047
        %v1051 = vmul.f32 %v392, %v1047
        %v1052 = vmul.f32 %v393, %v1047
        %v1053 = vmul.f32 %v394, %v1047
        %v1054 = vmul.f32 %v395, %v1047
        %v1055 = vmul.f32 %v396, %v1047
        %v1063 = vrot.slane %v1049, 1
        %v1064 = vrot.slane %v1050, 1
        %v1065 = vrot.slane %v1051, 1
        %v1066 = vrot.slane %v1052, 1
        %v1067 = vrot.slane %v1053, 1
        %v1068 = vrot.slane %v1054, 1
        %v1069 = vrot.slane %v1055, 1
        %1070 = vrot.lane.b32.xlu0 %v1063, 1
        %v1071 = vpop.permute.xlu0 %1070
        %1072 = vrot.lane.b32.xlu0 %v1064, 1
        %v1073 = vpop.permute.xlu0 %1072
        %1074 = vrot.lane.b32.xlu0 %v1065, 1
        %v1075 = vpop.permute.xlu0 %1074
        %1076 = vrot.lane.b32.xlu0 %v1066, 1
        %v1077 = vpop.permute.xlu0 %1076
        %1078 = vrot.lane.b32.xlu0 %v1067, 1
        %v1079 = vpop.permute.xlu0 %1078
        %1080 = vrot.lane.b32.xlu0 %v1068, 1
        %v1081 = vpop.permute.xlu0 %1080
        %1082 = vrot.lane.b32.xlu0 %v1069, 1
        %v1083 = vpop.permute.xlu0 %1082
        %v1091 = vadd.f32 %v1034, %v1071
        %v1092 = vadd.f32 %v1035, %v1073
        %v1093 = vadd.f32 %v1036, %v1075
        %v1094 = vadd.f32 %v1037, %v1077
        %v1095 = vadd.f32 %v1038, %v1079
        %v1096 = vadd.f32 %v1039, %v1081
        %v1097 = vadd.f32 %v1040, %v1083
        %1098 = vst.msk [vmem:[#allocation2] sm:$0x7f] %vm480, %v1091
        %1099 = vst.msk [vmem:[#allocation2 + $0x8] sm:$0x7f] %vm480, %v1092
        %1100 = vst.msk [vmem:[#allocation2 + $0x10] sm:$0x7f] %vm480, %v1093
        %1101 = vst.msk [vmem:[#allocation2 + $0x18] sm:$0x7f] %vm480, %v1094
        %1102 = vst.msk [vmem:[#allocation2 + $0x20] sm:$0x7f] %vm480, %v1095
        %1103 = vst.msk [vmem:[#allocation2 + $0x28] sm:$0x7f] %vm480, %v1096
        %1104 = vst.msk [vmem:[#allocation2 + $0x30] sm:$0x7f] %vm480, %v1097
        %v1105 = vld [vmem:[%s949] sm:$0x7f]
        %v1106 = vmul.f32 %v404, %v1047
        %v1108 = vrot.slane %v1106, 1
        %1109 = vrot.lane.b32.xlu0 %v1108, 1
        %v1110 = vpop.permute.xlu0 %1109
        %v1112 = vadd.f32 %v1105, %v1110
        %1113 = vst.msk [vmem:[%s949] sm:$0x7f] %vm480, %v1112
        %s1114 = scalar_lea.vmem [#allocation9], 9
        %v1115 = vld [vmem:[%s1114] sm:$0x1]
        %v1116 = vld [vmem:[%s422 + $0x1] sm:$0x7f]
        %v1117 = vld [vmem:[%s422 + $0x9] sm:$0x7f]
        %v1118 = vld [vmem:[%s422 + $0x11] sm:$0x7f]
        %v1119 = vld [vmem:[%s422 + $0x19] sm:$0x7f]
        %v1120 = vld [vmem:[%s422 + $0x21] sm:$0x7f]
        %v1121 = vld [vmem:[%s422 + $0x29] sm:$0x7f]
        %v1122 = vld [vmem:[%s422 + $0x31] sm:$0x7f]
        %v1124 = vlaneseq
        %v1125 = vshrl.u32 %v1124, 7
        %v1126 = vsub.s32 0, %v1125
        %v1127 = vrot.slane %v1115, %v1126
        %v1129 = vmul.f32 %v389, %v1127
        %v1130 = vmul.f32 %v390, %v1127
        %v1131 = vmul.f32 %v391, %v1127
        %v1132 = vmul.f32 %v392, %v1127
        %v1133 = vmul.f32 %v393, %v1127
        %v1134 = vmul.f32 %v394, %v1127
        %v1135 = vmul.f32 %v395, %v1127
        %v1136 = vadd.f32 %v1116, %v1129
        %v1137 = vadd.f32 %v1117, %v1130
        %v1138 = vadd.f32 %v1118, %v1131
        %v1139 = vadd.f32 %v1119, %v1132
        %v1140 = vadd.f32 %v1120, %v1133
        %v1141 = vadd.f32 %v1121, %v1134
        %v1142 = vadd.f32 %v1122, %v1135
        %vm1143 = vcmask 260096
        %1144 = vst.msk [vmem:[%s422 + $0x1] sm:$0x7f] %vm1143, %v1136
        %1145 = vst.msk [vmem:[%s422 + $0x9] sm:$0x7f] %vm1143, %v1137
        %1146 = vst.msk [vmem:[%s422 + $0x11] sm:$0x7f] %vm1143, %v1138
        %1147 = vst.msk [vmem:[%s422 + $0x19] sm:$0x7f] %vm1143, %v1139
        %1148 = vst.msk [vmem:[%s422 + $0x21] sm:$0x7f] %vm1143, %v1140
        %1149 = vst.msk [vmem:[%s422 + $0x29] sm:$0x7f] %vm1143, %v1141
        %1150 = vst.msk [vmem:[%s422 + $0x31] sm:$0x7f] %vm1143, %v1142
        %v1151 = vld [vmem:[#allocation2 + $0x1] sm:$0x7f]
        %v1152 = vmul.f32 %v403, %v1127
        %v1153 = vadd.f32 %v1151, %v1152
        %1154 = vst.msk [vmem:[#allocation2 + $0x1] sm:$0x7f] %vm1143, %v1153
        %s1155 = scalar_lea.vmem [#allocation9], 10
        %v1156 = vld [vmem:[%s1155] sm:$0x1]
        %v1157 = vld [vmem:[%s422] sm:$0xff]
        %v1158 = vld [vmem:[%s422 + $0x8] sm:$0xff]
        %v1159 = vld [vmem:[%s422 + $0x10] sm:$0xff]
        %v1160 = vld [vmem:[%s422 + $0x18] sm:$0xff]
        %v1161 = vld [vmem:[%s422 + $0x20] sm:$0xff]
        %v1162 = vld [vmem:[%s422 + $0x28] sm:$0xff]
        %v1163 = vld [vmem:[%s422 + $0x30] sm:$0xff]
        %v1165 = vlaneseq
        %v1166 = vshrl.u32 %v1165, 7
        %v1167 = vsub.s32 0, %v1166
        %v1168 = vrot.slane %v1156, %v1167
        %v1170 = vmul.f32 %v389, %v1168
        %v1171 = vmul.f32 %v390, %v1168
        %v1172 = vmul.f32 %v391, %v1168
        %v1173 = vmul.f32 %v392, %v1168
        %v1174 = vmul.f32 %v393, %v1168
        %v1175 = vmul.f32 %v394, %v1168
        %v1176 = vmul.f32 %v395, %v1168
        %v1177 = vadd.f32 %v1157, %v1170
        %v1178 = vadd.f32 %v1158, %v1171
        %v1179 = vadd.f32 %v1159, %v1172
        %v1180 = vadd.f32 %v1160, %v1173
        %v1181 = vadd.f32 %v1161, %v1174
        %v1182 = vadd.f32 %v1162, %v1175
        %v1183 = vadd.f32 %v1163, %v1176
        %1184 = vst.msk [vmem:[%s422] sm:$0xff] %vm412, %v1177
        %1185 = vst.msk [vmem:[%s422 + $0x8] sm:$0xff] %vm412, %v1178
        %1186 = vst.msk [vmem:[%s422 + $0x10] sm:$0xff] %vm412, %v1179
        %1187 = vst.msk [vmem:[%s422 + $0x18] sm:$0xff] %vm412, %v1180
        %1188 = vst.msk [vmem:[%s422 + $0x20] sm:$0xff] %vm412, %v1181
        %1189 = vst.msk [vmem:[%s422 + $0x28] sm:$0xff] %vm412, %v1182
        %1190 = vst.msk [vmem:[%s422 + $0x30] sm:$0xff] %vm412, %v1183
        %v1191 = vld [vmem:[#allocation2] sm:$0xff]
        %v1192 = vmul.f32 %v403, %v1168
        %v1193 = vadd.f32 %v1191, %v1192
        %1194 = vst.msk [vmem:[#allocation2] sm:$0xff] %vm412, %v1193
        %s1195 = scalar_lea.vmem [#allocation9], 11
        %v1196 = vld [vmem:[%s1195] sm:$0x1]
        %v1197 = vld [vmem:[%s422] sm:$0x7f]
        %v1198 = vld [vmem:[%s422 + $0x8] sm:$0x7f]
        %v1199 = vld [vmem:[%s422 + $0x10] sm:$0x7f]
        %v1200 = vld [vmem:[%s422 + $0x18] sm:$0x7f]
        %v1201 = vld [vmem:[%s422 + $0x20] sm:$0x7f]
        %v1202 = vld [vmem:[%s422 + $0x28] sm:$0x7f]
        %v1203 = vld [vmem:[%s422 + $0x30] sm:$0x7f]
        %v1205 = vlaneseq
        %v1206 = vshrl.u32 %v1205, 7
        %v1207 = vsub.s32 0, %v1206
        %v1208 = vrot.slane %v1196, %v1207
        %v1210 = vmul.f32 %v389, %v1208
        %v1211 = vmul.f32 %v390, %v1208
        %v1212 = vmul.f32 %v391, %v1208
        %v1213 = vmul.f32 %v392, %v1208
        %v1214 = vmul.f32 %v393, %v1208
        %v1215 = vmul.f32 %v394, %v1208
        %v1216 = vmul.f32 %v395, %v1208
        %v1224 = vrot.slane %v1210, 1
        %v1225 = vrot.slane %v1211, 1
        %v1226 = vrot.slane %v1212, 1
        %v1227 = vrot.slane %v1213, 1
        %v1228 = vrot.slane %v1214, 1
        %v1229 = vrot.slane %v1215, 1
        %v1230 = vrot.slane %v1216, 1
        %v1238 = vadd.f32 %v1197, %v1224
        %v1239 = vadd.f32 %v1198, %v1225
        %v1240 = vadd.f32 %v1199, %v1226
        %v1241 = vadd.f32 %v1200, %v1227
        %v1242 = vadd.f32 %v1201, %v1228
        %v1243 = vadd.f32 %v1202, %v1229
        %v1244 = vadd.f32 %v1203, %v1230
        %1245 = vst.msk [vmem:[%s422] sm:$0x7f] %vm1143, %v1238
        %1246 = vst.msk [vmem:[%s422 + $0x8] sm:$0x7f] %vm1143, %v1239
        %1247 = vst.msk [vmem:[%s422 + $0x10] sm:$0x7f] %vm1143, %v1240
        %1248 = vst.msk [vmem:[%s422 + $0x18] sm:$0x7f] %vm1143, %v1241
        %1249 = vst.msk [vmem:[%s422 + $0x20] sm:$0x7f] %vm1143, %v1242
        %1250 = vst.msk [vmem:[%s422 + $0x28] sm:$0x7f] %vm1143, %v1243
        %1251 = vst.msk [vmem:[%s422 + $0x30] sm:$0x7f] %vm1143, %v1244
        %v1252 = vld [vmem:[#allocation2] sm:$0x7f]
        %v1253 = vmul.f32 %v403, %v1208
        %v1255 = vrot.slane %v1253, 1
        %v1257 = vadd.f32 %v1252, %v1255
        %1258 = vst.msk [vmem:[#allocation2] sm:$0x7f] %vm1143, %v1257
        %s1259 = scalar_lea.vmem [#allocation9], 12
        %v1260 = vld [vmem:[%s1259] sm:$0x1]
        %v1261 = vld [vmem:[#allocation2 + $0x1] sm:$0x7f]
        %v1262 = vld [vmem:[#allocation2 + $0x9] sm:$0x7f]
        %v1263 = vld [vmem:[#allocation2 + $0x11] sm:$0x7f]
        %v1264 = vld [vmem:[#allocation2 + $0x19] sm:$0x7f]
        %v1265 = vld [vmem:[#allocation2 + $0x21] sm:$0x7f]
        %v1266 = vld [vmem:[#allocation2 + $0x29] sm:$0x7f]
        %v1267 = vld [vmem:[#allocation2 + $0x31] sm:$0x7f]
        %v1268 = vld [vmem:[#allocation2 + $0x39] sm:$0x7f]
        %v1270 = vlaneseq
        %v1271 = vshrl.u32 %v1270, 7
        %v1272 = vsub.s32 0, %v1271
        %v1273 = vrot.slane %v1260, %v1272
        %v1275 = vmul.f32 %v389, %v1273
        %v1276 = vmul.f32 %v390, %v1273
        %v1277 = vmul.f32 %v391, %v1273
        %v1278 = vmul.f32 %v392, %v1273
        %v1279 = vmul.f32 %v393, %v1273
        %v1280 = vmul.f32 %v394, %v1273
        %v1281 = vmul.f32 %v395, %v1273
        %v1282 = vmul.f32 %v396, %v1273
        %v1283 = vadd.f32 %v1261, %v1275
        %v1284 = vadd.f32 %v1262, %v1276
        %v1285 = vadd.f32 %v1263, %v1277
        %v1286 = vadd.f32 %v1264, %v1278
        %v1287 = vadd.f32 %v1265, %v1279
        %v1288 = vadd.f32 %v1266, %v1280
        %v1289 = vadd.f32 %v1267, %v1281
        %v1290 = vadd.f32 %v1268, %v1282
        %1291 = vst.msk [vmem:[#allocation2 + $0x1] sm:$0x7f] %vm1143, %v1283
        %1292 = vst.msk [vmem:[#allocation2 + $0x9] sm:$0x7f] %vm1143, %v1284
        %1293 = vst.msk [vmem:[#allocation2 + $0x11] sm:$0x7f] %vm1143, %v1285
        %1294 = vst.msk [vmem:[#allocation2 + $0x19] sm:$0x7f] %vm1143, %v1286
        %1295 = vst.msk [vmem:[#allocation2 + $0x21] sm:$0x7f] %vm1143, %v1287
        %1296 = vst.msk [vmem:[#allocation2 + $0x29] sm:$0x7f] %vm1143, %v1288
        %1297 = vst.msk [vmem:[#allocation2 + $0x31] sm:$0x7f] %vm1143, %v1289
        %1298 = vst.msk [vmem:[#allocation2 + $0x39] sm:$0x7f] %vm1143, %v1290
        %s1299 = scalar_lea.vmem [#allocation9], 13
        %v1300 = vld [vmem:[%s1299] sm:$0x1]
        %v1301 = vld [vmem:[#allocation2] sm:$0xff]
        %v1302 = vld [vmem:[#allocation2 + $0x8] sm:$0xff]
        %v1303 = vld [vmem:[#allocation2 + $0x10] sm:$0xff]
        %v1304 = vld [vmem:[#allocation2 + $0x18] sm:$0xff]
        %v1305 = vld [vmem:[#allocation2 + $0x20] sm:$0xff]
        %v1306 = vld [vmem:[#allocation2 + $0x28] sm:$0xff]
        %v1307 = vld [vmem:[#allocation2 + $0x30] sm:$0xff]
        %v1308 = vld [vmem:[#allocation2 + $0x38] sm:$0xff]
        %v1310 = vlaneseq
        %v1311 = vshrl.u32 %v1310, 7
        %v1312 = vsub.s32 0, %v1311
        %v1313 = vrot.slane %v1300, %v1312
        %v1315 = vmul.f32 %v389, %v1313
        %v1316 = vmul.f32 %v390, %v1313
        %v1317 = vmul.f32 %v391, %v1313
        %v1318 = vmul.f32 %v392, %v1313
        %v1319 = vmul.f32 %v393, %v1313
        %v1320 = vmul.f32 %v394, %v1313
        %v1321 = vmul.f32 %v395, %v1313
        %v1322 = vmul.f32 %v396, %v1313
        %v1323 = vadd.f32 %v1301, %v1315
        %v1324 = vadd.f32 %v1302, %v1316
        %v1325 = vadd.f32 %v1303, %v1317
        %v1326 = vadd.f32 %v1304, %v1318
        %v1327 = vadd.f32 %v1305, %v1319
        %v1328 = vadd.f32 %v1306, %v1320
        %v1329 = vadd.f32 %v1307, %v1321
        %v1330 = vadd.f32 %v1308, %v1322
        %1331 = vst.msk [vmem:[#allocation2] sm:$0xff] %vm412, %v1323
        %1332 = vst.msk [vmem:[#allocation2 + $0x8] sm:$0xff] %vm412, %v1324
        %1333 = vst.msk [vmem:[#allocation2 + $0x10] sm:$0xff] %vm412, %v1325
        %1334 = vst.msk [vmem:[#allocation2 + $0x18] sm:$0xff] %vm412, %v1326
        %1335 = vst.msk [vmem:[#allocation2 + $0x20] sm:$0xff] %vm412, %v1327
        %1336 = vst.msk [vmem:[#allocation2 + $0x28] sm:$0xff] %vm412, %v1328
        %1337 = vst.msk [vmem:[#allocation2 + $0x30] sm:$0xff] %vm412, %v1329
        %1338 = vst.msk [vmem:[#allocation2 + $0x38] sm:$0xff] %vm412, %v1330
        %s1339 = scalar_lea.vmem [#allocation9], 14
        %v1340 = vld [vmem:[%s1339] sm:$0x1]
        %v1341 = vld [vmem:[#allocation2] sm:$0x7f]
        %v1342 = vld [vmem:[#allocation2 + $0x8] sm:$0x7f]
        %v1343 = vld [vmem:[#allocation2 + $0x10] sm:$0x7f]
        %v1344 = vld [vmem:[#allocation2 + $0x18] sm:$0x7f]
        %v1345 = vld [vmem:[#allocation2 + $0x20] sm:$0x7f]
        %v1346 = vld [vmem:[#allocation2 + $0x28] sm:$0x7f]
        %v1347 = vld [vmem:[#allocation2 + $0x30] sm:$0x7f]
        %v1348 = vld [vmem:[#allocation2 + $0x38] sm:$0x7f]
        %v1350 = vlaneseq
        %v1351 = vshrl.u32 %v1350, 7
        %v1352 = vsub.s32 0, %v1351
        %v1353 = vrot.slane %v1340, %v1352
        %v1355 = vmul.f32 %v389, %v1353
        %v1356 = vmul.f32 %v390, %v1353
        %v1357 = vmul.f32 %v391, %v1353
        %v1358 = vmul.f32 %v392, %v1353
        %v1359 = vmul.f32 %v393, %v1353
        %v1360 = vmul.f32 %v394, %v1353
        %v1361 = vmul.f32 %v395, %v1353
        %v1362 = vmul.f32 %v396, %v1353
        %v1371 = vrot.slane %v1355, 1
        %v1372 = vrot.slane %v1356, 1
        %v1373 = vrot.slane %v1357, 1
        %v1374 = vrot.slane %v1358, 1
        %v1375 = vrot.slane %v1359, 1
        %v1376 = vrot.slane %v1360, 1
        %v1377 = vrot.slane %v1361, 1
        %v1378 = vrot.slane %v1362, 1
        %v1387 = vadd.f32 %v1341, %v1371
        %v1388 = vadd.f32 %v1342, %v1372
        %v1389 = vadd.f32 %v1343, %v1373
        %v1390 = vadd.f32 %v1344, %v1374
        %v1391 = vadd.f32 %v1345, %v1375
        %v1392 = vadd.f32 %v1346, %v1376
        %v1393 = vadd.f32 %v1347, %v1377
        %v1394 = vadd.f32 %v1348, %v1378
        %1395 = vst.msk [vmem:[#allocation2] sm:$0x7f] %vm1143, %v1387
        %1396 = vst.msk [vmem:[#allocation2 + $0x8] sm:$0x7f] %vm1143, %v1388
        %1397 = vst.msk [vmem:[#allocation2 + $0x10] sm:$0x7f] %vm1143, %v1389
        %1398 = vst.msk [vmem:[#allocation2 + $0x18] sm:$0x7f] %vm1143, %v1390
        %1399 = vst.msk [vmem:[#allocation2 + $0x20] sm:$0x7f] %vm1143, %v1391
        %1400 = vst.msk [vmem:[#allocation2 + $0x28] sm:$0x7f] %vm1143, %v1392
        %1401 = vst.msk [vmem:[#allocation2 + $0x30] sm:$0x7f] %vm1143, %v1393
        %1402 = vst.msk [vmem:[#allocation2 + $0x38] sm:$0x7f] %vm1143, %v1394
        %s1403 = scalar_lea.vmem [#allocation9], 15
        %v1404 = vld [vmem:[%s1403] sm:$0x1]
        %v1405 = vld [vmem:[#allocation2 + $0x1] sm:$0x7f]
        %v1406 = vld [vmem:[#allocation2 + $0x9] sm:$0x7f]
        %v1407 = vld [vmem:[#allocation2 + $0x11] sm:$0x7f]
        %v1408 = vld [vmem:[#allocation2 + $0x19] sm:$0x7f]
        %v1409 = vld [vmem:[#allocation2 + $0x21] sm:$0x7f]
        %v1410 = vld [vmem:[#allocation2 + $0x29] sm:$0x7f]
        %v1411 = vld [vmem:[#allocation2 + $0x31] sm:$0x7f]
        %v1413 = vlaneseq
        %v1414 = vshrl.u32 %v1413, 7
        %v1415 = vsub.s32 0, %v1414
        %v1416 = vrot.slane %v1404, %v1415
        %v1418 = vmul.f32 %v390, %v1416
        %v1419 = vmul.f32 %v391, %v1416
        %v1420 = vmul.f32 %v392, %v1416
        %v1421 = vmul.f32 %v393, %v1416
        %v1422 = vmul.f32 %v394, %v1416
        %v1423 = vmul.f32 %v395, %v1416
        %v1424 = vmul.f32 %v396, %v1416
        %v1425 = vadd.f32 %v1405, %v1418
        %v1426 = vadd.f32 %v1406, %v1419
        %v1427 = vadd.f32 %v1407, %v1420
        %v1428 = vadd.f32 %v1408, %v1421
        %v1429 = vadd.f32 %v1409, %v1422
        %v1430 = vadd.f32 %v1410, %v1423
        %v1431 = vadd.f32 %v1411, %v1424
        %1432 = vst.msk [vmem:[#allocation2 + $0x1] sm:$0x7f] %vm1143, %v1425
        %1433 = vst.msk [vmem:[#allocation2 + $0x9] sm:$0x7f] %vm1143, %v1426
        %1434 = vst.msk [vmem:[#allocation2 + $0x11] sm:$0x7f] %vm1143, %v1427
        %1435 = vst.msk [vmem:[#allocation2 + $0x19] sm:$0x7f] %vm1143, %v1428
        %1436 = vst.msk [vmem:[#allocation2 + $0x21] sm:$0x7f] %vm1143, %v1429
        %1437 = vst.msk [vmem:[#allocation2 + $0x29] sm:$0x7f] %vm1143, %v1430
        %1438 = vst.msk [vmem:[#allocation2 + $0x31] sm:$0x7f] %vm1143, %v1431
        %v1439 = vld [vmem:[%s949 + $0x1] sm:$0x7f]
        %v1440 = vmul.f32 %v404, %v1416
        %v1441 = vadd.f32 %v1439, %v1440
        %1442 = vst.msk [vmem:[%s949 + $0x1] sm:$0x7f] %vm1143, %v1441
        %s1443 = scalar_lea.vmem [#allocation9], 16
        %v1444 = vld [vmem:[%s1443] sm:$0x1]
        %v1445 = vld [vmem:[#allocation2] sm:$0xff]
        %v1446 = vld [vmem:[#allocation2 + $0x8] sm:$0xff]
        %v1447 = vld [vmem:[#allocation2 + $0x10] sm:$0xff]
        %v1448 = vld [vmem:[#allocation2 + $0x18] sm:$0xff]
        %v1449 = vld [vmem:[#allocation2 + $0x20] sm:$0xff]
        %v1450 = vld [vmem:[#allocation2 + $0x28] sm:$0xff]
        %v1451 = vld [vmem:[#allocation2 + $0x30] sm:$0xff]
        %v1453 = vlaneseq
        %v1454 = vshrl.u32 %v1453, 7
        %v1455 = vsub.s32 0, %v1454
        %v1456 = vrot.slane %v1444, %v1455
        %v1458 = vmul.f32 %v390, %v1456
        %v1459 = vmul.f32 %v391, %v1456
        %v1460 = vmul.f32 %v392, %v1456
        %v1461 = vmul.f32 %v393, %v1456
        %v1462 = vmul.f32 %v394, %v1456
        %v1463 = vmul.f32 %v395, %v1456
        %v1464 = vmul.f32 %v396, %v1456
        %v1465 = vadd.f32 %v1445, %v1458
        %v1466 = vadd.f32 %v1446, %v1459
        %v1467 = vadd.f32 %v1447, %v1460
        %v1468 = vadd.f32 %v1448, %v1461
        %v1469 = vadd.f32 %v1449, %v1462
        %v1470 = vadd.f32 %v1450, %v1463
        %v1471 = vadd.f32 %v1451, %v1464
        %1472 = vst.msk [vmem:[#allocation2] sm:$0xff] %vm412, %v1465
        %1473 = vst.msk [vmem:[#allocation2 + $0x8] sm:$0xff] %vm412, %v1466
        %1474 = vst.msk [vmem:[#allocation2 + $0x10] sm:$0xff] %vm412, %v1467
        %1475 = vst.msk [vmem:[#allocation2 + $0x18] sm:$0xff] %vm412, %v1468
        %1476 = vst.msk [vmem:[#allocation2 + $0x20] sm:$0xff] %vm412, %v1469
        %1477 = vst.msk [vmem:[#allocation2 + $0x28] sm:$0xff] %vm412, %v1470
        %1478 = vst.msk [vmem:[#allocation2 + $0x30] sm:$0xff] %vm412, %v1471
        %v1479 = vld [vmem:[%s949] sm:$0xff]
        %v1480 = vmul.f32 %v404, %v1456
        %v1481 = vadd.f32 %v1479, %v1480
        %1482 = vst.msk [vmem:[%s949] sm:$0xff] %vm412, %v1481
        %s1483 = scalar_lea.vmem [#allocation9], 17
        %v1484 = vld [vmem:[%s1483] sm:$0x1]
        %v1485 = vld [vmem:[#allocation2] sm:$0x7f]
        %v1486 = vld [vmem:[#allocation2 + $0x8] sm:$0x7f]
        %v1487 = vld [vmem:[#allocation2 + $0x10] sm:$0x7f]
        %v1488 = vld [vmem:[#allocation2 + $0x18] sm:$0x7f]
        %v1489 = vld [vmem:[#allocation2 + $0x20] sm:$0x7f]
        %v1490 = vld [vmem:[#allocation2 + $0x28] sm:$0x7f]
        %v1491 = vld [vmem:[#allocation2 + $0x30] sm:$0x7f]
        %v1493 = vlaneseq
        %v1494 = vshrl.u32 %v1493, 7
        %v1495 = vsub.s32 0, %v1494
        %v1496 = vrot.slane %v1484, %v1495
        %v1498 = vmul.f32 %v390, %v1496
        %v1499 = vmul.f32 %v391, %v1496
        %v1500 = vmul.f32 %v392, %v1496
        %v1501 = vmul.f32 %v393, %v1496
        %v1502 = vmul.f32 %v394, %v1496
        %v1503 = vmul.f32 %v395, %v1496
        %v1504 = vmul.f32 %v396, %v1496
        %v1512 = vrot.slane %v1498, 1
        %v1513 = vrot.slane %v1499, 1
        %v1514 = vrot.slane %v1500, 1
        %v1515 = vrot.slane %v1501, 1
        %v1516 = vrot.slane %v1502, 1
        %v1517 = vrot.slane %v1503, 1
        %v1518 = vrot.slane %v1504, 1
        %v1526 = vadd.f32 %v1485, %v1512
        %v1527 = vadd.f32 %v1486, %v1513
        %v1528 = vadd.f32 %v1487, %v1514
        %v1529 = vadd.f32 %v1488, %v1515
        %v1530 = vadd.f32 %v1489, %v1516
        %v1531 = vadd.f32 %v1490, %v1517
        %v1532 = vadd.f32 %v1491, %v1518
        %1533 = vst.msk [vmem:[#allocation2] sm:$0x7f] %vm1143, %v1526
        %1534 = vst.msk [vmem:[#allocation2 + $0x8] sm:$0x7f] %vm1143, %v1527
        %1535 = vst.msk [vmem:[#allocation2 + $0x10] sm:$0x7f] %vm1143, %v1528
        %1536 = vst.msk [vmem:[#allocation2 + $0x18] sm:$0x7f] %vm1143, %v1529
        %1537 = vst.msk [vmem:[#allocation2 + $0x20] sm:$0x7f] %vm1143, %v1530
        %1538 = vst.msk [vmem:[#allocation2 + $0x28] sm:$0x7f] %vm1143, %v1531
        %1539 = vst.msk [vmem:[#allocation2 + $0x30] sm:$0x7f] %vm1143, %v1532
        %v1540 = vld [vmem:[%s949] sm:$0x7f]
        %v1541 = vmul.f32 %v404, %v1496
        %v1543 = vrot.slane %v1541, 1
        %v1545 = vadd.f32 %v1540, %v1543
        %1546 = vst.msk [vmem:[%s949] sm:$0x7f] %vm1143, %v1545
        %s1547 = scalar_lea.vmem [#allocation9], 18
        %v1548 = vld [vmem:[%s1547] sm:$0x1]
        %v1549 = vld [vmem:[%s422 + $0x1] sm:$0x7f]
        %v1550 = vld [vmem:[%s422 + $0x9] sm:$0x7f]
        %v1551 = vld [vmem:[%s422 + $0x11] sm:$0x7f]
        %v1552 = vld [vmem:[%s422 + $0x19] sm:$0x7f]
        %v1553 = vld [vmem:[%s422 + $0x21] sm:$0x7f]
        %v1554 = vld [vmem:[%s422 + $0x29] sm:$0x7f]
        %v1555 = vld [vmem:[%s422 + $0x31] sm:$0x7f]
        %v1557 = vlaneseq
        %v1558 = vshrl.u32 %v1557, 7
        %v1559 = vsub.s32 0, %v1558
        %v1560 = vrot.slane %v1548, %v1559
        %1561 = vrot.lane.b32.xlu0 %v1560, 1
        %v1562 = vpop.permute.xlu0 %1561
        %v1564 = vmul.f32 %v389, %v1562
        %v1565 = vmul.f32 %v390, %v1562
        %v1566 = vmul.f32 %v391, %v1562
        %v1567 = vmul.f32 %v392, %v1562
        %v1568 = vmul.f32 %v393, %v1562
        %v1569 = vmul.f32 %v394, %v1562
        %v1570 = vmul.f32 %v395, %v1562
        %1578 = vrot.lane.b32.xlu0 %v1564, 127
        %v1579 = vpop.permute.xlu0 %1578
        %1580 = vrot.lane.b32.xlu0 %v1565, 127
        %v1581 = vpop.permute.xlu0 %1580
        %1582 = vrot.lane.b32.xlu0 %v1566, 127
        %v1583 = vpop.permute.xlu0 %1582
        %1584 = vrot.lane.b32.xlu0 %v1567, 127
        %v1585 = vpop.permute.xlu0 %1584
        %1586 = vrot.lane.b32.xlu0 %v1568, 127
        %v1587 = vpop.permute.xlu0 %1586
        %1588 = vrot.lane.b32.xlu0 %v1569, 127
        %v1589 = vpop.permute.xlu0 %1588
        %1590 = vrot.lane.b32.xlu0 %v1570, 127
        %v1591 = vpop.permute.xlu0 %1590
        %v1599 = vadd.f32 %v1549, %v1579
        %v1600 = vadd.f32 %v1550, %v1581
        %v1601 = vadd.f32 %v1551, %v1583
        %v1602 = vadd.f32 %v1552, %v1585
        %v1603 = vadd.f32 %v1553, %v1587
        %v1604 = vadd.f32 %v1554, %v1589
        %v1605 = vadd.f32 %v1555, %v1591
        %vm1606 = vcmask 251904
        %1607 = vst.msk [vmem:[%s422 + $0x1] sm:$0x7f] %vm1606, %v1599
        %1608 = vst.msk [vmem:[%s422 + $0x9] sm:$0x7f] %vm1606, %v1600
        %1609 = vst.msk [vmem:[%s422 + $0x11] sm:$0x7f] %vm1606, %v1601
        %1610 = vst.msk [vmem:[%s422 + $0x19] sm:$0x7f] %vm1606, %v1602
        %1611 = vst.msk [vmem:[%s422 + $0x21] sm:$0x7f] %vm1606, %v1603
        %1612 = vst.msk [vmem:[%s422 + $0x29] sm:$0x7f] %vm1606, %v1604
        %1613 = vst.msk [vmem:[%s422 + $0x31] sm:$0x7f] %vm1606, %v1605
        %v1614 = vld [vmem:[#allocation2 + $0x1] sm:$0x7f]
        %v1615 = vmul.f32 %v403, %v1562
        %1617 = vrot.lane.b32.xlu0 %v1615, 127
        %v1618 = vpop.permute.xlu0 %1617
        %v1620 = vadd.f32 %v1614, %v1618
        %1621 = vst.msk [vmem:[#allocation2 + $0x1] sm:$0x7f] %vm1606, %v1620
        %s1622 = scalar_lea.vmem [#allocation9], 19
        %v1623 = vld [vmem:[%s1622] sm:$0x1]
        %v1624 = vld [vmem:[%s422] sm:$0xff]
        %v1625 = vld [vmem:[%s422 + $0x8] sm:$0xff]
        %v1626 = vld [vmem:[%s422 + $0x10] sm:$0xff]
        %v1627 = vld [vmem:[%s422 + $0x18] sm:$0xff]
        %v1628 = vld [vmem:[%s422 + $0x20] sm:$0xff]
        %v1629 = vld [vmem:[%s422 + $0x28] sm:$0xff]
        %v1630 = vld [vmem:[%s422 + $0x30] sm:$0xff]
        %v1632 = vlaneseq
        %v1633 = vshrl.u32 %v1632, 7
        %v1634 = vsub.s32 0, %v1633
        %v1635 = vrot.slane %v1623, %v1634
        %1636 = vrot.lane.b32.xlu0 %v1635, 1
        %v1637 = vpop.permute.xlu0 %1636
        %v1639 = vmul.f32 %v389, %v1637
        %v1640 = vmul.f32 %v390, %v1637
        %v1641 = vmul.f32 %v391, %v1637
        %v1642 = vmul.f32 %v392, %v1637
        %v1643 = vmul.f32 %v393, %v1637
        %v1644 = vmul.f32 %v394, %v1637
        %v1645 = vmul.f32 %v395, %v1637
        %1653 = vrot.lane.b32.xlu0 %v1639, 127
        %v1654 = vpop.permute.xlu0 %1653
        %1655 = vrot.lane.b32.xlu0 %v1640, 127
        %v1656 = vpop.permute.xlu0 %1655
        %1657 = vrot.lane.b32.xlu0 %v1641, 127
        %v1658 = vpop.permute.xlu0 %1657
        %1659 = vrot.lane.b32.xlu0 %v1642, 127
        %v1660 = vpop.permute.xlu0 %1659
        %1661 = vrot.lane.b32.xlu0 %v1643, 127
        %v1662 = vpop.permute.xlu0 %1661
        %1663 = vrot.lane.b32.xlu0 %v1644, 127
        %v1664 = vpop.permute.xlu0 %1663
        %1665 = vrot.lane.b32.xlu0 %v1645, 127
        %v1666 = vpop.permute.xlu0 %1665
        %v1674 = vadd.f32 %v1624, %v1654
        %v1675 = vadd.f32 %v1625, %v1656
        %v1676 = vadd.f32 %v1626, %v1658
        %v1677 = vadd.f32 %v1627, %v1660
        %v1678 = vadd.f32 %v1628, %v1662
        %v1679 = vadd.f32 %v1629, %v1664
        %v1680 = vadd.f32 %v1630, %v1666
        %vm1681 = vcmask 252928
        %1682 = vst.msk [vmem:[%s422] sm:$0xff] %vm1681, %v1674
        %1683 = vst.msk [vmem:[%s422 + $0x8] sm:$0xff] %vm1681, %v1675
        %1684 = vst.msk [vmem:[%s422 + $0x10] sm:$0xff] %vm1681, %v1676
        %1685 = vst.msk [vmem:[%s422 + $0x18] sm:$0xff] %vm1681, %v1677
        %1686 = vst.msk [vmem:[%s422 + $0x20] sm:$0xff] %vm1681, %v1678
        %1687 = vst.msk [vmem:[%s422 + $0x28] sm:$0xff] %vm1681, %v1679
        %1688 = vst.msk [vmem:[%s422 + $0x30] sm:$0xff] %vm1681, %v1680
        %v1689 = vld [vmem:[#allocation2] sm:$0xff]
        %v1690 = vmul.f32 %v403, %v1637
        %1692 = vrot.lane.b32.xlu0 %v1690, 127
        %v1693 = vpop.permute.xlu0 %1692
        %v1695 = vadd.f32 %v1689, %v1693
        %1696 = vst.msk [vmem:[#allocation2] sm:$0xff] %vm1681, %v1695
        %s1697 = scalar_lea.vmem [#allocation9], 20
        %v1698 = vld [vmem:[%s1697] sm:$0x1]
        %v1699 = vld [vmem:[%s422] sm:$0x7f]
        %v1700 = vld [vmem:[%s422 + $0x8] sm:$0x7f]
        %v1701 = vld [vmem:[%s422 + $0x10] sm:$0x7f]
        %v1702 = vld [vmem:[%s422 + $0x18] sm:$0x7f]
        %v1703 = vld [vmem:[%s422 + $0x20] sm:$0x7f]
        %v1704 = vld [vmem:[%s422 + $0x28] sm:$0x7f]
        %v1705 = vld [vmem:[%s422 + $0x30] sm:$0x7f]
        %v1707 = vlaneseq
        %v1708 = vshrl.u32 %v1707, 7
        %v1709 = vsub.s32 0, %v1708
        %v1710 = vrot.slane %v1698, %v1709
        %1711 = vrot.lane.b32.xlu0 %v1710, 1
        %v1712 = vpop.permute.xlu0 %1711
        %v1714 = vmul.f32 %v389, %v1712
        %v1715 = vmul.f32 %v390, %v1712
        %v1716 = vmul.f32 %v391, %v1712
        %v1717 = vmul.f32 %v392, %v1712
        %v1718 = vmul.f32 %v393, %v1712
        %v1719 = vmul.f32 %v394, %v1712
        %v1720 = vmul.f32 %v395, %v1712
        %v1728 = vrot.slane %v1714, 1
        %v1729 = vrot.slane %v1715, 1
        %v1730 = vrot.slane %v1716, 1
        %v1731 = vrot.slane %v1717, 1
        %v1732 = vrot.slane %v1718, 1
        %v1733 = vrot.slane %v1719, 1
        %v1734 = vrot.slane %v1720, 1
        %1735 = vrot.lane.b32.xlu0 %v1728, 127
        %v1736 = vpop.permute.xlu0 %1735
        %1737 = vrot.lane.b32.xlu0 %v1729, 127
        %v1738 = vpop.permute.xlu0 %1737
        %1739 = vrot.lane.b32.xlu0 %v1730, 127
        %v1740 = vpop.permute.xlu0 %1739
        %1741 = vrot.lane.b32.xlu0 %v1731, 127
        %v1742 = vpop.permute.xlu0 %1741
        %1743 = vrot.lane.b32.xlu0 %v1732, 127
        %v1744 = vpop.permute.xlu0 %1743
        %1745 = vrot.lane.b32.xlu0 %v1733, 127
        %v1746 = vpop.permute.xlu0 %1745
        %1747 = vrot.lane.b32.xlu0 %v1734, 127
        %v1748 = vpop.permute.xlu0 %1747
        %v1756 = vadd.f32 %v1699, %v1736
        %v1757 = vadd.f32 %v1700, %v1738
        %v1758 = vadd.f32 %v1701, %v1740
        %v1759 = vadd.f32 %v1702, %v1742
        %v1760 = vadd.f32 %v1703, %v1744
        %v1761 = vadd.f32 %v1704, %v1746
        %v1762 = vadd.f32 %v1705, %v1748
        %1763 = vst.msk [vmem:[%s422] sm:$0x7f] %vm1606, %v1756
        %1764 = vst.msk [vmem:[%s422 + $0x8] sm:$0x7f] %vm1606, %v1757
        %1765 = vst.msk [vmem:[%s422 + $0x10] sm:$0x7f] %vm1606, %v1758
        %1766 = vst.msk [vmem:[%s422 + $0x18] sm:$0x7f] %vm1606, %v1759
        %1767 = vst.msk [vmem:[%s422 + $0x20] sm:$0x7f] %vm1606, %v1760
        %1768 = vst.msk [vmem:[%s422 + $0x28] sm:$0x7f] %vm1606, %v1761
        %1769 = vst.msk [vmem:[%s422 + $0x30] sm:$0x7f] %vm1606, %v1762
        %v1770 = vld [vmem:[#allocation2] sm:$0x7f]
        %v1771 = vmul.f32 %v403, %v1712
        %v1773 = vrot.slane %v1771, 1
        %1774 = vrot.lane.b32.xlu0 %v1773, 127
        %v1775 = vpop.permute.xlu0 %1774
        %v1777 = vadd.f32 %v1770, %v1775
        %1778 = vst.msk [vmem:[#allocation2] sm:$0x7f] %vm1606, %v1777
        %s1779 = scalar_lea.vmem [#allocation9], 21
        %v1780 = vld [vmem:[%s1779] sm:$0x1]
        %v1781 = vld [vmem:[#allocation2 + $0x1] sm:$0x7f]
        %v1782 = vld [vmem:[#allocation2 + $0x9] sm:$0x7f]
        %v1783 = vld [vmem:[#allocation2 + $0x11] sm:$0x7f]
        %v1784 = vld [vmem:[#allocation2 + $0x19] sm:$0x7f]
        %v1785 = vld [vmem:[#allocation2 + $0x21] sm:$0x7f]
        %v1786 = vld [vmem:[#allocation2 + $0x29] sm:$0x7f]
        %v1787 = vld [vmem:[#allocation2 + $0x31] sm:$0x7f]
        %v1788 = vld [vmem:[#allocation2 + $0x39] sm:$0x7f]
        %v1790 = vlaneseq
        %v1791 = vshrl.u32 %v1790, 7
        %v1792 = vsub.s32 0, %v1791
        %v1793 = vrot.slane %v1780, %v1792
        %1794 = vrot.lane.b32.xlu0 %v1793, 1
        %v1795 = vpop.permute.xlu0 %1794
        %v1797 = vmul.f32 %v389, %v1795
        %v1798 = vmul.f32 %v390, %v1795
        %v1799 = vmul.f32 %v391, %v1795
        %v1800 = vmul.f32 %v392, %v1795
        %v1801 = vmul.f32 %v393, %v1795
        %v1802 = vmul.f32 %v394, %v1795
        %v1803 = vmul.f32 %v395, %v1795
        %v1804 = vmul.f32 %v396, %v1795
        %1813 = vrot.lane.b32.xlu0 %v1797, 127
        %v1814 = vpop.permute.xlu0 %1813
        %1815 = vrot.lane.b32.xlu0 %v1798, 127
        %v1816 = vpop.permute.xlu0 %1815
        %1817 = vrot.lane.b32.xlu0 %v1799, 127
        %v1818 = vpop.permute.xlu0 %1817
        %1819 = vrot.lane.b32.xlu0 %v1800, 127
        %v1820 = vpop.permute.xlu0 %1819
        %1821 = vrot.lane.b32.xlu0 %v1801, 127
        %v1822 = vpop.permute.xlu0 %1821
        %1823 = vrot.lane.b32.xlu0 %v1802, 127
        %v1824 = vpop.permute.xlu0 %1823
        %1825 = vrot.lane.b32.xlu0 %v1803, 127
        %v1826 = vpop.permute.xlu0 %1825
        %1827 = vrot.lane.b32.xlu0 %v1804, 127
        %v1828 = vpop.permute.xlu0 %1827
        %v1837 = vadd.f32 %v1781, %v1814
        %v1838 = vadd.f32 %v1782, %v1816
        %v1839 = vadd.f32 %v1783, %v1818
        %v1840 = vadd.f32 %v1784, %v1820
        %v1841 = vadd.f32 %v1785, %v1822
        %v1842 = vadd.f32 %v1786, %v1824
        %v1843 = vadd.f32 %v1787, %v1826
        %v1844 = vadd.f32 %v1788, %v1828
        %1845 = vst.msk [vmem:[#allocation2 + $0x1] sm:$0x7f] %vm1606, %v1837
        %1846 = vst.msk [vmem:[#allocation2 + $0x9] sm:$0x7f] %vm1606, %v1838
        %1847 = vst.msk [vmem:[#allocation2 + $0x11] sm:$0x7f] %vm1606, %v1839
        %1848 = vst.msk [vmem:[#allocation2 + $0x19] sm:$0x7f] %vm1606, %v1840
        %1849 = vst.msk [vmem:[#allocation2 + $0x21] sm:$0x7f] %vm1606, %v1841
        %1850 = vst.msk [vmem:[#allocation2 + $0x29] sm:$0x7f] %vm1606, %v1842
        %1851 = vst.msk [vmem:[#allocation2 + $0x31] sm:$0x7f] %vm1606, %v1843
        %1852 = vst.msk [vmem:[#allocation2 + $0x39] sm:$0x7f] %vm1606, %v1844
        %s1853 = scalar_lea.vmem [#allocation9], 22
        %v1854 = vld [vmem:[%s1853] sm:$0x1]
        %v1855 = vld [vmem:[#allocation2] sm:$0xff]
        %v1856 = vld [vmem:[#allocation2 + $0x8] sm:$0xff]
        %v1857 = vld [vmem:[#allocation2 + $0x10] sm:$0xff]
        %v1858 = vld [vmem:[#allocation2 + $0x18] sm:$0xff]
        %v1859 = vld [vmem:[#allocation2 + $0x20] sm:$0xff]
        %v1860 = vld [vmem:[#allocation2 + $0x28] sm:$0xff]
        %v1861 = vld [vmem:[#allocation2 + $0x30] sm:$0xff]
        %v1862 = vld [vmem:[#allocation2 + $0x38] sm:$0xff]
        %v1864 = vlaneseq
        %v1865 = vshrl.u32 %v1864, 7
        %v1866 = vsub.s32 0, %v1865
        %v1867 = vrot.slane %v1854, %v1866
        %1868 = vrot.lane.b32.xlu0 %v1867, 1
        %v1869 = vpop.permute.xlu0 %1868
        %v1871 = vmul.f32 %v389, %v1869
        %v1872 = vmul.f32 %v390, %v1869
        %v1873 = vmul.f32 %v391, %v1869
        %v1874 = vmul.f32 %v392, %v1869
        %v1875 = vmul.f32 %v393, %v1869
        %v1876 = vmul.f32 %v394, %v1869
        %v1877 = vmul.f32 %v395, %v1869
        %v1878 = vmul.f32 %v396, %v1869
        %1887 = vrot.lane.b32.xlu0 %v1871, 127
        %v1888 = vpop.permute.xlu0 %1887
        %1889 = vrot.lane.b32.xlu0 %v1872, 127
        %v1890 = vpop.permute.xlu0 %1889
        %1891 = vrot.lane.b32.xlu0 %v1873, 127
        %v1892 = vpop.permute.xlu0 %1891
        %1893 = vrot.lane.b32.xlu0 %v1874, 127
        %v1894 = vpop.permute.xlu0 %1893
        %1895 = vrot.lane.b32.xlu0 %v1875, 127
        %v1896 = vpop.permute.xlu0 %1895
        %1897 = vrot.lane.b32.xlu0 %v1876, 127
        %v1898 = vpop.permute.xlu0 %1897
        %1899 = vrot.lane.b32.xlu0 %v1877, 127
        %v1900 = vpop.permute.xlu0 %1899
        %1901 = vrot.lane.b32.xlu0 %v1878, 127
        %v1902 = vpop.permute.xlu0 %1901
        %v1911 = vadd.f32 %v1855, %v1888
        %v1912 = vadd.f32 %v1856, %v1890
        %v1913 = vadd.f32 %v1857, %v1892
        %v1914 = vadd.f32 %v1858, %v1894
        %v1915 = vadd.f32 %v1859, %v1896
        %v1916 = vadd.f32 %v1860, %v1898
        %v1917 = vadd.f32 %v1861, %v1900
        %v1918 = vadd.f32 %v1862, %v1902
        %1919 = vst.msk [vmem:[#allocation2] sm:$0xff] %vm1681, %v1911
        %1920 = vst.msk [vmem:[#allocation2 + $0x8] sm:$0xff] %vm1681, %v1912
        %1921 = vst.msk [vmem:[#allocation2 + $0x10] sm:$0xff] %vm1681, %v1913
        %1922 = vst.msk [vmem:[#allocation2 + $0x18] sm:$0xff] %vm1681, %v1914
        %1923 = vst.msk [vmem:[#allocation2 + $0x20] sm:$0xff] %vm1681, %v1915
        %1924 = vst.msk [vmem:[#allocation2 + $0x28] sm:$0xff] %vm1681, %v1916
        %1925 = vst.msk [vmem:[#allocation2 + $0x30] sm:$0xff] %vm1681, %v1917
        %1926 = vst.msk [vmem:[#allocation2 + $0x38] sm:$0xff] %vm1681, %v1918
        %s1927 = scalar_lea.vmem [#allocation9], 23
        %v1928 = vld [vmem:[%s1927] sm:$0x1]
        %v1929 = vld [vmem:[#allocation2] sm:$0x7f]
        %v1930 = vld [vmem:[#allocation2 + $0x8] sm:$0x7f]
        %v1931 = vld [vmem:[#allocation2 + $0x10] sm:$0x7f]
        %v1932 = vld [vmem:[#allocation2 + $0x18] sm:$0x7f]
        %v1933 = vld [vmem:[#allocation2 + $0x20] sm:$0x7f]
        %v1934 = vld [vmem:[#allocation2 + $0x28] sm:$0x7f]
        %v1935 = vld [vmem:[#allocation2 + $0x30] sm:$0x7f]
        %v1936 = vld [vmem:[#allocation2 + $0x38] sm:$0x7f]
        %v1938 = vlaneseq
        %v1939 = vshrl.u32 %v1938, 7
        %v1940 = vsub.s32 0, %v1939
        %v1941 = vrot.slane %v1928, %v1940
        %1942 = vrot.lane.b32.xlu0 %v1941, 1
        %v1943 = vpop.permute.xlu0 %1942
        %v1945 = vmul.f32 %v389, %v1943
        %v1946 = vmul.f32 %v390, %v1943
        %v1947 = vmul.f32 %v391, %v1943
        %v1948 = vmul.f32 %v392, %v1943
        %v1949 = vmul.f32 %v393, %v1943
        %v1950 = vmul.f32 %v394, %v1943
        %v1951 = vmul.f32 %v395, %v1943
        %v1952 = vmul.f32 %v396, %v1943
        %v1961 = vrot.slane %v1945, 1
        %v1962 = vrot.slane %v1946, 1
        %v1963 = vrot.slane %v1947, 1
        %v1964 = vrot.slane %v1948, 1
        %v1965 = vrot.slane %v1949, 1
        %v1966 = vrot.slane %v1950, 1
        %v1967 = vrot.slane %v1951, 1
        %v1968 = vrot.slane %v1952, 1
        %1969 = vrot.lane.b32.xlu0 %v1961, 127
        %v1970 = vpop.permute.xlu0 %1969
        %1971 = vrot.lane.b32.xlu0 %v1962, 127
        %v1972 = vpop.permute.xlu0 %1971
        %1973 = vrot.lane.b32.xlu0 %v1963, 127
        %v1974 = vpop.permute.xlu0 %1973
        %1975 = vrot.lane.b32.xlu0 %v1964, 127
        %v1976 = vpop.permute.xlu0 %1975
        %1977 = vrot.lane.b32.xlu0 %v1965, 127
        %v1978 = vpop.permute.xlu0 %1977
        %1979 = vrot.lane.b32.xlu0 %v1966, 127
        %v1980 = vpop.permute.xlu0 %1979
        %1981 = vrot.lane.b32.xlu0 %v1967, 127
        %v1982 = vpop.permute.xlu0 %1981
        %1983 = vrot.lane.b32.xlu0 %v1968, 127
        %v1984 = vpop.permute.xlu0 %1983
        %v1993 = vadd.f32 %v1929, %v1970
        %v1994 = vadd.f32 %v1930, %v1972
        %v1995 = vadd.f32 %v1931, %v1974
        %v1996 = vadd.f32 %v1932, %v1976
        %v1997 = vadd.f32 %v1933, %v1978
        %v1998 = vadd.f32 %v1934, %v1980
        %v1999 = vadd.f32 %v1935, %v1982
        %v2000 = vadd.f32 %v1936, %v1984
        %2001 = vst.msk [vmem:[#allocation2] sm:$0x7f] %vm1606, %v1993
        %2002 = vst.msk [vmem:[#allocation2 + $0x8] sm:$0x7f] %vm1606, %v1994
        %2003 = vst.msk [vmem:[#allocation2 + $0x10] sm:$0x7f] %vm1606, %v1995
        %2004 = vst.msk [vmem:[#allocation2 + $0x18] sm:$0x7f] %vm1606, %v1996
        %2005 = vst.msk [vmem:[#allocation2 + $0x20] sm:$0x7f] %vm1606, %v1997
        %2006 = vst.msk [vmem:[#allocation2 + $0x28] sm:$0x7f] %vm1606, %v1998
        %2007 = vst.msk [vmem:[#allocation2 + $0x30] sm:$0x7f] %vm1606, %v1999
        %2008 = vst.msk [vmem:[#allocation2 + $0x38] sm:$0x7f] %vm1606, %v2000
        %s2009 = scalar_lea.vmem [#allocation9], 24
        %v2010 = vld [vmem:[%s2009] sm:$0x1]
        %v2011 = vld [vmem:[#allocation2 + $0x1] sm:$0x7f]
        %v2012 = vld [vmem:[#allocation2 + $0x9] sm:$0x7f]
        %v2013 = vld [vmem:[#allocation2 + $0x11] sm:$0x7f]
        %v2014 = vld [vmem:[#allocation2 + $0x19] sm:$0x7f]
        %v2015 = vld [vmem:[#allocation2 + $0x21] sm:$0x7f]
        %v2016 = vld [vmem:[#allocation2 + $0x29] sm:$0x7f]
        %v2017 = vld [vmem:[#allocation2 + $0x31] sm:$0x7f]
        %v2019 = vlaneseq
        %v2020 = vshrl.u32 %v2019, 7
        %v2021 = vsub.s32 0, %v2020
        %v2022 = vrot.slane %v2010, %v2021
        %2023 = vrot.lane.b32.xlu0 %v2022, 1
        %v2024 = vpop.permute.xlu0 %2023
        %v2026 = vmul.f32 %v390, %v2024
        %v2027 = vmul.f32 %v391, %v2024
        %v2028 = vmul.f32 %v392, %v2024
        %v2029 = vmul.f32 %v393, %v2024
        %v2030 = vmul.f32 %v394, %v2024
        %v2031 = vmul.f32 %v395, %v2024
        %v2032 = vmul.f32 %v396, %v2024
        %2040 = vrot.lane.b32.xlu0 %v2026, 127
        %v2041 = vpop.permute.xlu0 %2040
        %2042 = vrot.lane.b32.xlu0 %v2027, 127
        %v2043 = vpop.permute.xlu0 %2042
        %2044 = vrot.lane.b32.xlu0 %v2028, 127
        %v2045 = vpop.permute.xlu0 %2044
        %2046 = vrot.lane.b32.xlu0 %v2029, 127
        %v2047 = vpop.permute.xlu0 %2046
        %2048 = vrot.lane.b32.xlu0 %v2030, 127
        %v2049 = vpop.permute.xlu0 %2048
        %2050 = vrot.lane.b32.xlu0 %v2031, 127
        %v2051 = vpop.permute.xlu0 %2050
        %2052 = vrot.lane.b32.xlu0 %v2032, 127
        %v2053 = vpop.permute.xlu0 %2052
        %v2061 = vadd.f32 %v2011, %v2041
        %v2062 = vadd.f32 %v2012, %v2043
        %v2063 = vadd.f32 %v2013, %v2045
        %v2064 = vadd.f32 %v2014, %v2047
        %v2065 = vadd.f32 %v2015, %v2049
        %v2066 = vadd.f32 %v2016, %v2051
        %v2067 = vadd.f32 %v2017, %v2053
        %2068 = vst.msk [vmem:[#allocation2 + $0x1] sm:$0x7f] %vm1606, %v2061
        %2069 = vst.msk [vmem:[#allocation2 + $0x9] sm:$0x7f] %vm1606, %v2062
        %2070 = vst.msk [vmem:[#allocation2 + $0x11] sm:$0x7f] %vm1606, %v2063
        %2071 = vst.msk [vmem:[#allocation2 + $0x19] sm:$0x7f] %vm1606, %v2064
        %2072 = vst.msk [vmem:[#allocation2 + $0x21] sm:$0x7f] %vm1606, %v2065
        %2073 = vst.msk [vmem:[#allocation2 + $0x29] sm:$0x7f] %vm1606, %v2066
        %2074 = vst.msk [vmem:[#allocation2 + $0x31] sm:$0x7f] %vm1606, %v2067
        %v2075 = vld [vmem:[%s949 + $0x1] sm:$0x7f]
        %v2076 = vmul.f32 %v404, %v2024
        %2078 = vrot.lane.b32.xlu0 %v2076, 127
        %v2079 = vpop.permute.xlu0 %2078
        %v2081 = vadd.f32 %v2075, %v2079
        %2082 = vst.msk [vmem:[%s949 + $0x1] sm:$0x7f] %vm1606, %v2081
        %s2083 = scalar_lea.vmem [#allocation9], 25
        %v2084 = vld [vmem:[%s2083] sm:$0x1]
        %v2085 = vld [vmem:[#allocation2] sm:$0xff]
        %v2086 = vld [vmem:[#allocation2 + $0x8] sm:$0xff]
        %v2087 = vld [vmem:[#allocation2 + $0x10] sm:$0xff]
        %v2088 = vld [vmem:[#allocation2 + $0x18] sm:$0xff]
        %v2089 = vld [vmem:[#allocation2 + $0x20] sm:$0xff]
        %v2090 = vld [vmem:[#allocation2 + $0x28] sm:$0xff]
        %v2091 = vld [vmem:[#allocation2 + $0x30] sm:$0xff]
        %v2093 = vlaneseq
        %v2094 = vshrl.u32 %v2093, 7
        %v2095 = vsub.s32 0, %v2094
        %v2096 = vrot.slane %v2084, %v2095
        %2097 = vrot.lane.b32.xlu0 %v2096, 1
        %v2098 = vpop.permute.xlu0 %2097
        %v2100 = vmul.f32 %v390, %v2098
        %v2101 = vmul.f32 %v391, %v2098
        %v2102 = vmul.f32 %v392, %v2098
        %v2103 = vmul.f32 %v393, %v2098
        %v2104 = vmul.f32 %v394, %v2098
        %v2105 = vmul.f32 %v395, %v2098
        %v2106 = vmul.f32 %v396, %v2098
        %2114 = vrot.lane.b32.xlu0 %v2100, 127
        %v2115 = vpop.permute.xlu0 %2114
        %2116 = vrot.lane.b32.xlu0 %v2101, 127
        %v2117 = vpop.permute.xlu0 %2116
        %2118 = vrot.lane.b32.xlu0 %v2102, 127
        %v2119 = vpop.permute.xlu0 %2118
        %2120 = vrot.lane.b32.xlu0 %v2103, 127
        %v2121 = vpop.permute.xlu0 %2120
        %2122 = vrot.lane.b32.xlu0 %v2104, 127
        %v2123 = vpop.permute.xlu0 %2122
        %2124 = vrot.lane.b32.xlu0 %v2105, 127
        %v2125 = vpop.permute.xlu0 %2124
        %2126 = vrot.lane.b32.xlu0 %v2106, 127
        %v2127 = vpop.permute.xlu0 %2126
        %v2135 = vadd.f32 %v2085, %v2115
        %v2136 = vadd.f32 %v2086, %v2117
        %v2137 = vadd.f32 %v2087, %v2119
        %v2138 = vadd.f32 %v2088, %v2121
        %v2139 = vadd.f32 %v2089, %v2123
        %v2140 = vadd.f32 %v2090, %v2125
        %v2141 = vadd.f32 %v2091, %v2127
        %2142 = vst.msk [vmem:[#allocation2] sm:$0xff] %vm1681, %v2135
        %2143 = vst.msk [vmem:[#allocation2 + $0x8] sm:$0xff] %vm1681, %v2136
        %2144 = vst.msk [vmem:[#allocation2 + $0x10] sm:$0xff] %vm1681, %v2137
        %2145 = vst.msk [vmem:[#allocation2 + $0x18] sm:$0xff] %vm1681, %v2138
        %2146 = vst.msk [vmem:[#allocation2 + $0x20] sm:$0xff] %vm1681, %v2139
        %2147 = vst.msk [vmem:[#allocation2 + $0x28] sm:$0xff] %vm1681, %v2140
        %2148 = vst.msk [vmem:[#allocation2 + $0x30] sm:$0xff] %vm1681, %v2141
        %v2149 = vld [vmem:[%s949] sm:$0xff]
        %v2150 = vmul.f32 %v404, %v2098
        %2152 = vrot.lane.b32.xlu0 %v2150, 127
        %v2153 = vpop.permute.xlu0 %2152
        %v2155 = vadd.f32 %v2149, %v2153
        %2156 = vst.msk [vmem:[%s949] sm:$0xff] %vm1681, %v2155
        %s2157 = scalar_lea.vmem [#allocation9], 26
        %v2158 = vld [vmem:[%s2157] sm:$0x1]
        %v2159 = vld [vmem:[#allocation2] sm:$0x7f]
        %v2160 = vld [vmem:[#allocation2 + $0x8] sm:$0x7f]
        %v2161 = vld [vmem:[#allocation2 + $0x10] sm:$0x7f]
        %v2162 = vld [vmem:[#allocation2 + $0x18] sm:$0x7f]
        %v2163 = vld [vmem:[#allocation2 + $0x20] sm:$0x7f]
        %v2164 = vld [vmem:[#allocation2 + $0x28] sm:$0x7f]
        %v2165 = vld [vmem:[#allocation2 + $0x30] sm:$0x7f]
        %v2167 = vlaneseq
        %v2168 = vshrl.u32 %v2167, 7
        %v2169 = vsub.s32 0, %v2168
        %v2170 = vrot.slane %v2158, %v2169
        %2171 = vrot.lane.b32.xlu0 %v2170, 1
        %v2172 = vpop.permute.xlu0 %2171
        %v2174 = vmul.f32 %v390, %v2172
        %v2175 = vmul.f32 %v391, %v2172
        %v2176 = vmul.f32 %v392, %v2172
        %v2177 = vmul.f32 %v393, %v2172
        %v2178 = vmul.f32 %v394, %v2172
        %v2179 = vmul.f32 %v395, %v2172
        %v2180 = vmul.f32 %v396, %v2172
        %v2188 = vrot.slane %v2174, 1
        %v2189 = vrot.slane %v2175, 1
        %v2190 = vrot.slane %v2176, 1
        %v2191 = vrot.slane %v2177, 1
        %v2192 = vrot.slane %v2178, 1
        %v2193 = vrot.slane %v2179, 1
        %v2194 = vrot.slane %v2180, 1
        %2195 = vrot.lane.b32.xlu0 %v2188, 127
        %v2196 = vpop.permute.xlu0 %2195
        %2197 = vrot.lane.b32.xlu0 %v2189, 127
        %v2198 = vpop.permute.xlu0 %2197
        %2199 = vrot.lane.b32.xlu0 %v2190, 127
        %v2200 = vpop.permute.xlu0 %2199
        %2201 = vrot.lane.b32.xlu0 %v2191, 127
        %v2202 = vpop.permute.xlu0 %2201
        %2203 = vrot.lane.b32.xlu0 %v2192, 127
        %v2204 = vpop.permute.xlu0 %2203
        %2205 = vrot.lane.b32.xlu0 %v2193, 127
        %v2206 = vpop.permute.xlu0 %2205
        %2207 = vrot.lane.b32.xlu0 %v2194, 127
        %v2208 = vpop.permute.xlu0 %2207
        %v2216 = vadd.f32 %v2159, %v2196
        %v2217 = vadd.f32 %v2160, %v2198
        %v2218 = vadd.f32 %v2161, %v2200
        %v2219 = vadd.f32 %v2162, %v2202
        %v2220 = vadd.f32 %v2163, %v2204
        %v2221 = vadd.f32 %v2164, %v2206
        %v2222 = vadd.f32 %v2165, %v2208
        %2223 = vst.msk [vmem:[#allocation2] sm:$0x7f] %vm1606, %v2216
        %2224 = vst.msk [vmem:[#allocation2 + $0x8] sm:$0x7f] %vm1606, %v2217
        %2225 = vst.msk [vmem:[#allocation2 + $0x10] sm:$0x7f] %vm1606, %v2218
        %2226 = vst.msk [vmem:[#allocation2 + $0x18] sm:$0x7f] %vm1606, %v2219
        %2227 = vst.msk [vmem:[#allocation2 + $0x20] sm:$0x7f] %vm1606, %v2220
        %2228 = vst.msk [vmem:[#allocation2 + $0x28] sm:$0x7f] %vm1606, %v2221
        %2229 = vst.msk [vmem:[#allocation2 + $0x30] sm:$0x7f] %vm1606, %v2222
        %v2230 = vld [vmem:[%s949] sm:$0x7f]
        %v2231 = vmul.f32 %v404, %v2172
        %v2233 = vrot.slane %v2231, 1
        %2234 = vrot.lane.b32.xlu0 %v2233, 127
        %v2235 = vpop.permute.xlu0 %2234
        %v2237 = vadd.f32 %v2230, %v2235
        %2238 = vst.msk [vmem:[%s949] sm:$0x7f] %vm1606, %v2237
        %v2239 = vld [vmem:[#allocation2] sm:$0xff]
        %v2240 = vld [vmem:[#allocation2 + $0x8] sm:$0xff]
        %v2241 = vld [vmem:[#allocation2 + $0x10] sm:$0xff]
        %v2242 = vld [vmem:[#allocation2 + $0x18] sm:$0xff]
        %v2243 = vld [vmem:[#allocation2 + $0x20] sm:$0xff]
        %v2244 = vld [vmem:[#allocation2 + $0x28] sm:$0xff]
        %v2245 = vld [vmem:[#allocation2 + $0x30] sm:$0xff]
        %v2246 = vld [vmem:[#allocation2 + $0x38] sm:$0xff]
        %2247 = vst.msk [vmem:[%s378] sm:$0xff] %vm412, %v2239
        %2248 = vst.msk [vmem:[%s378 + $0x8] sm:$0xff] %vm412, %v2240
        %2249 = vst.msk [vmem:[%s378 + $0x10] sm:$0xff] %vm412, %v2241
        %2250 = vst.msk [vmem:[%s378 + $0x18] sm:$0xff] %vm412, %v2242
        %2251 = vst.msk [vmem:[%s378 + $0x20] sm:$0xff] %vm412, %v2243
        %2252 = vst.msk [vmem:[%s378 + $0x28] sm:$0xff] %vm412, %v2244
        %2253 = vst.msk [vmem:[%s378 + $0x30] sm:$0xff] %vm412, %v2245
        %2254 = vst.msk [vmem:[%s378 + $0x38] sm:$0xff] %vm412, %v2246
        %s2255 = sand.u32 %s190, 1
        %s2256 = scalar_lea.sflag [#allocation5], %s2255
        %s2257 = sand.u32 %s190, 1
        %s2258 = smul.addr %s2257, 64
        %s2259 = scalar_lea.vmem [#allocation11], %s2258
        // Predicated region
        $region57: #{tpu_custom_call.1} parent=39 // pred_check
          %p2260 = pneg %p200
        $region58: #{tpu_custom_call.1} parent=39 // pred_check_branch
          %2262 = sbr.rel (%p2260) target = $region60
        $region59: #{tpu_custom_call.1} parent=39 // pred_region
          %s2263 = smul.u32 8, %s31
          %s2265 = ssub.s32 1024, 1024
          %2266 = vsyncadd %s2256, %s2265
          %s2267 = smul.addr %s30, 8
          %s2268 = sadd.s32 %s2263, %s2267
          %s2269 = smul.addr %s2268, 128
          %s2270 = scalar_lea.hbm %s5, %s2269
          %s2271 = sshll.u32 %s2259, 4
          %s2272 = int_to_ptr.vmem [resolvable:$true] %s2271
          %2277 = dma.vmem_to_hbm [thread:$0]  %s2272, 1024, %s2270, %s2256, 128, 128, 8
        $region60: #{tpu_custom_call.1} parent=39 // pred_fallthru
          _
      $region40: #{tpu_custom_call.1} parent=5 // pred_fallthru
        _
      %p2278 = scmp.le.s32.totalorder 2, %s21
      // Predicated region
      $region61: #{tpu_custom_call.1} parent=5 // pred_check
        %p2279 = pneg %p2278
      $region62: #{tpu_custom_call.1} parent=5 // pred_check_branch
        %2281 = sbr.rel (%p2279) target = $region64
      $region63: #{tpu_custom_call.1} parent=5 // pred_region
        %s2282 = ssub.s32 %s21, 2
        // Predicated region
        $region65: #{tpu_custom_call.1} parent=63 // pred_check
          %p2283 = pneg %p206
        $region66: #{tpu_custom_call.1} parent=63 // pred_check_branch
          %2285 = sbr.rel (%p2283) target = $region68
        $region67: #{tpu_custom_call.1} parent=63 // pred_region
          %s2286 = sand.u32 %s191, 1
          %s2287 = scalar_lea.sflag [#allocation5], %s2286
          %s2288 = sand.u32 %s191, 1
          %s2289 = smul.addr %s2288, 64
          %s2290 = scalar_lea.vmem [#allocation11], %s2289
          %2291 = dma.done %s2287, 1024
        $region68: #{tpu_custom_call.1} parent=63 // pred_fallthru
          _
      $region64: #{tpu_custom_call.1} parent=5 // pred_fallthru
        _
    $region6: #{tpu_custom_call.1} parent=1 // loop_footer
      %s25 = sadd.s32 1, %s21
    $region7: #{tpu_custom_call.1} parent=1 // loop_footer_branch
      %20 = sbr.rel target = $region3
    $region8: #{tpu_custom_call.1} parent=1 // loop_exit
      _
    %2292 = vsyncpa [#allocation4], 1
    %s2293 = scalar_lea.sflag [#allocation4], 1
    %2294 = vsyncpa %s2293, 1
    %2295 = vsyncpa [#allocation7], 1
    %s2296 = scalar_lea.sflag [#allocation7], 1
    %2297 = vsyncpa %s2296, 1
    %2298 = vsyncpa [#allocation10], 1
    %2299 = vsyncpa [#allocation5], 1
    %s2300 = scalar_lea.sflag [#allocation5], 1
    %2301 = vsyncpa %s2300, 1

</llo_original>
